<compile_context>
chip_gen: v6e
topology: v6e:2x2x1
jax: 0.10.0
libtpu: 0.0.40
codegen_flags: <defaults>
</compile_context>

<pallas_src>
import jax
import jax.numpy as jnp
from jax import lax
from jax.experimental import pallas as pl
from jax.experimental.pallas import tpu as pltpu

_EPS = 1e-5  # nn.BatchNorm2d default eps


def _shift_lanes(v, s):
    """result[:, q] = v[:, q + s], zero-filled outside the array (s is a static int)."""
    n = v.shape[1]
    if s == 0:
        return v
    if s > 0:
        return jnp.concatenate([v[:, s:], jnp.zeros((v.shape[0], s), v.dtype)], axis=1)
    return jnp.concatenate([jnp.zeros((v.shape[0], -s), v.dtype), v[:, :n + s]], axis=1)


def _test_model2_kernel(
    x_ref,     # (3, 1024)   input image, rows = channel, lane p = 32*h + w
    w1_ref,    # (10, 28)    conv1 weight (27 taps + bias col), BN1 folded
    w2_ref,    # (2, 91)     conv2 weight (90 taps + bias col), BN2 folded
    wl1_ref,   # (2048, 32)  lin1 weight, lane-expanded to pool2's sparse lane layout
    bl1_ref,   # (1, 32)
    wl2_ref,   # (32, 10)    lin2 weight, transposed
    bl2_ref,   # (1, 10)
    out_ref,   # (1, 10)
):
    x = x_ref[...]                                                   # (3, 1024)

    # Lane-position helpers (pixel p = 32*h + w).
    p = lax.broadcasted_iota(jnp.int32, (1, 1024), 1)
    h = p >> 5
    w = p & 31

    # ---- conv1 + folded BN1: build (28, 1024) im2col in-register, ONE MXU matmul ----
    pieces = []
    for dh in (-1, 0, 1):
        for dw in (-1, 0, 1):
            sh = _shift_lanes(x, dh * 32 + dw)
            m = (h + dh >= 0) & (h + dh < 32) & (w + dw >= 0) & (w + dw < 32)
            pieces.append(jnp.where(m, sh, 0.0))
    pieces.append(jnp.ones((1, 1024), jnp.float32))                  # bias rides on ones-row
    im1 = jnp.concatenate(pieces, axis=0)                            # (28, 1024)
    c1 = jnp.dot(w1_ref[...], im1, preferred_element_type=jnp.float32)   # (10, 1024)

    # ---- maxpool1 (2x2) + ReLU, value-level (valid at lanes with h, w even) ----
    t1 = jnp.maximum(c1, _shift_lanes(c1, 1))                        # max over (w, w+1)
    pool1 = jnp.maximum(t1, _shift_lanes(t1, 32))                    # max over (h, h+1)
    pool1 = jnp.maximum(pool1, 0.0)                                  # (10, 1024), sparse grid

    # ---- conv2 + folded BN2: (91, 1024) im2col on the stride-2 grid, ONE MXU matmul ----
    hp = p >> 6                                                      # pooled row  (valid lanes)
    wp = (p >> 1) & 15                                               # pooled col  (valid lanes)
    pieces2 = []
    for dh in (-1, 0, 1):
        for dw in (-1, 0, 1):
            sh = _shift_lanes(pool1, dh * 64 + dw * 2)
            m = (hp + dh >= 0) & (hp + dh < 16) & (wp + dw >= 0) & (wp + dw < 16)
            pieces2.append(jnp.where(m, sh, 0.0))
    pieces2.append(jnp.ones((1, 1024), jnp.float32))
    im2 = jnp.concatenate(pieces2, axis=0)                           # (91, 1024)
    c2 = jnp.dot(w2_ref[...], im2, preferred_element_type=jnp.float32)   # (2, 1024)

    # ---- maxpool2 (2x2 on the stride-2 grid) + ReLU, value-level ----
    t2 = jnp.maximum(c2, _shift_lanes(c2, 2))
    pool2 = jnp.maximum(t2, _shift_lanes(t2, 64))
    pool2 = jnp.maximum(pool2, 0.0)                                  # (2, 1024), valid @ 128*hq+4*wq

    # ---- linear1 + linear2: row-vector, lane-dense output.  pool2's sparse lane layout is
    #      folded into the zero-expanded wl1_ref, so no in-kernel compaction is needed. ----
    p2row = jnp.concatenate([pool2[0:1, :], pool2[1:2, :]], axis=1)  # (1, 2048), lane-tile aligned
    y1 = jnp.dot(p2row, wl1_ref[...], preferred_element_type=jnp.float32) + bl1_ref[...]  # (1, 32)
    out_ref[...] = (jnp.dot(y1, wl2_ref[...], preferred_element_type=jnp.float32)
                    + bl2_ref[...])                                  # (1, 10)


def prepare_params(params):
    """One-time packing of PyTorch-layout weights into kernel-ready arrays (NOT per call)."""
    # conv1 + BN1 fold.  Column order = kh*9 + kw*3 + ci, matching the kernel's im2col rows.
    s1 = params["bn1_gamma"] / jnp.sqrt(params["bn1_var"] + _EPS)
    t1 = params["bn1_beta"] + (params["conv1_b"] - params["bn1_mean"]) * s1
    w1 = jnp.transpose(params["conv1_w"], (0, 2, 3, 1)).reshape(10, 27) * s1[:, None]
    w1_aug = jnp.concatenate([w1, t1[:, None]], axis=1)              # (10, 28)

    # conv2 + BN2 fold.  Column order = kh*30 + kw*10 + ci.
    s2 = params["bn2_gamma"] / jnp.sqrt(params["bn2_var"] + _EPS)
    t2 = params["bn2_beta"] + (params["conv2_b"] - params["bn2_mean"]) * s2
    w2 = jnp.transpose(params["conv2_w"], (0, 2, 3, 1)).reshape(2, 90) * s2[:, None]
    w2_aug = jnp.concatenate([w2, t2[:, None]], axis=1)              # (2, 91)

    # linear1: expand (32, 128) [PyTorch (c, h, w) flatten order] onto pool2's sparse lane
    # layout (pooled (hq, wq) lives at lane 128*hq + 4*wq of its channel's 1024-lane row).
    hq = jnp.arange(8)
    wq = jnp.arange(8)
    pidx = (128 * hq[:, None] + 4 * wq[None, :]).reshape(64)
    wl1 = params["lin1_w"].astype(jnp.float32)                       # (32, 128)

    def _expand(cols):                                               # (32, 64) -> (1024, 32)
        return jnp.zeros((1024, 32), jnp.float32).at[pidx].set(cols.T)

    wl1e = jnp.concatenate([_expand(wl1[:, 0:64]), _expand(wl1[:, 64:128])], axis=0)  # (2048, 32)

    return {
        "w1_aug": w1_aug.astype(jnp.float32),
        "w2_aug": w2_aug.astype(jnp.float32),
        "wl1e": wl1e,
        "bl1": params["lin1_b"].reshape(1, 32).astype(jnp.float32),
        "wl2t": params["lin2_w"].T.astype(jnp.float32),              # (32, 10)
        "bl2": params["lin2_b"].reshape(1, 10).astype(jnp.float32),
    }


@jax.jit
def test_model2_forward(x_nchw, prep):
    # Batch is hard-wired to 1 because the PyTorch module flattens the batch dim before linear1.
    # TODO(synk): for batch>1, add a leading "parallel" grid axis (v7x 2nd-TensorCore lever).
    assert x_nchw.shape == (1, 3, 32, 32)
    x2d = x_nchw.reshape(3, 1024).astype(jnp.float32)   # free reshape -> no wrapper im2col

    vmem = pl.BlockSpec(memory_space=pltpu.MemorySpace.VMEM)
    out = pl.pallas_call(
        _test_model2_kernel,
        out_shape=jax.ShapeDtypeStruct((1, 10), jnp.float32),
        in_specs=[vmem] * 7,
        out_specs=vmem,
    )(x2d, prep["w1_aug"], prep["w2_aug"], prep["wl1e"],
      prep["bl1"], prep["wl2t"], prep["bl2"])
    return out[0]  # (10,), matching the PyTorch module's flatten() output


def _reference_forward(x_nchw, params):
    """Pure-XLA reference matching the PyTorch module (eval-mode BatchNorm)."""
    def conv(x, w, b):
        y = lax.conv_general_dilated(
            x, w, window_strides=(1, 1), padding=((1, 1), (1, 1)),
            dimension_numbers=("NCHW", "OIHW", "NCHW"))
        return y + b[None, :, None, None]

    def bn(x, g, bt, m, v):
        return (x - m[None, :, None, None]) * (
            g[None, :, None, None] / jnp.sqrt(v[None, :, None, None] + _EPS)
        ) + bt[None, :, None, None]

    def pool(x):
        return lax.reduce_window(x, -jnp.inf, lax.max,
                                 (1, 1, 2, 2), (1, 1, 2, 2), "VALID")

    h = pool(jax.nn.relu(bn(conv(x_nchw, params["conv1_w"], params["conv1_b"]),
                            params["bn1_gamma"], params["bn1_beta"],
                            params["bn1_mean"], params["bn1_var"])))
    h = pool(jax.nn.relu(bn(conv(h, params["conv2_w"], params["conv2_b"]),
                            params["bn2_gamma"], params["bn2_beta"],
                            params["bn2_mean"], params["bn2_var"])))
    h = h.reshape(-1)                                    # (c, h, w) flatten, batch=1
    h = params["lin1_w"] @ h + params["lin1_b"]
    return params["lin2_w"] @ h + params["lin2_b"]


def init_params(key):
    ks = jax.random.split(key, 16)

    def n(k, shape, scale=0.1):
        return scale * jax.random.normal(k, shape, jnp.float32)

    return {
        # PyTorch layouts: conv weight (cout, cin, kh, kw), linear weight (out, in)
        "conv1_w": n(ks[0], (10, 3, 3, 3)),
        "conv1_b": n(ks[1], (10,)),
        "bn1_gamma": 1.0 + n(ks[2], (10,)),
        "bn1_beta": n(ks[3], (10,)),
        "bn1_mean": n(ks[4], (10,)),
        "bn1_var": 1.0 + 0.1 * jax.random.uniform(ks[5], (10,), jnp.float32),
        "conv2_w": n(ks[6], (2, 10, 3, 3)),
        "conv2_b": n(ks[7], (2,)),
        "bn2_gamma": 1.0 + n(ks[8], (2,)),
        "bn2_beta": n(ks[9], (2,)),
        "bn2_mean": n(ks[10], (2,)),
        "bn2_var": 1.0 + 0.1 * jax.random.uniform(ks[11], (2,), jnp.float32),
        "lin1_w": n(ks[12], (32, 2 * 8 * 8)),
        "lin1_b": n(ks[13], (32,)),
        "lin2_w": n(ks[14], (10, 32)),
        "lin2_b": n(ks[15], (10,)),
    }


if __name__ == "__main__":
    key = jax.random.PRNGKey(0)
    pkey, xkey = jax.random.split(key)
    params = init_params(pkey)
    prep = prepare_params(params)            # one-time weight packing, NOT per call
    # Input must be (1, 3, 32, 32): two 2x2 pools -> 2*8*8 = 128 = linear1 in-features.
    x = jax.random.normal(xkey, (1, 3, 32, 32), jnp.float32)

    y = test_model2_forward(x, prep)
    jax.block_until_ready(y)
    assert y.shape == (10,) and y.dtype == jnp.float32

    y_ref = _reference_forward(x, params)
    err = float(jnp.max(jnp.abs(y - y_ref)))
    assert err < 5e-2, f"kernel vs reference mismatch: max abs err = {err}"
    print("KERNEL_OK")
</pallas_src>

<mosaic_0001>
module attributes {stable_mosaic.version = 11 : i64} {
  func.func @_test_model2_kernel(%arg0: memref<3x1024xf32, #tpu.memory_space<vmem>>, %arg1: memref<10x28xf32, #tpu.memory_space<vmem>>, %arg2: memref<2x91xf32, #tpu.memory_space<vmem>>, %arg3: memref<2048x32xf32, #tpu.memory_space<vmem>>, %arg4: memref<1x32xf32, #tpu.memory_space<vmem>>, %arg5: memref<32x10xf32, #tpu.memory_space<vmem>>, %arg6: memref<1x10xf32, #tpu.memory_space<vmem>>, %arg7: memref<1x10xf32, #tpu.memory_space<vmem>>) attributes {dimension_semantics = [], scalar_prefetch = 0 : i64, scratch_operands = 0 : i64, tpu.core_type = #tpu.core_type<tc>} {
    %c0 = arith.constant 0 : index
    %c0_0 = arith.constant 0 : index
    %0 = vector.load %arg0[%c0, %c0_0] : memref<3x1024xf32, #tpu.memory_space<vmem>>, vector<3x1024xf32>
    %1 = tpu.iota {dimensions = array<i32: 1>} : vector<1x1024xi32>
    %c5_i32 = arith.constant 5 : i32
    %2 = vector.broadcast %c5_i32 : i32 to vector<1x1024xi32>
    %3 = arith.shrsi %1, %2 : vector<1x1024xi32>
    %c31_i32 = arith.constant 31 : i32
    %4 = vector.broadcast %c31_i32 : i32 to vector<1x1024xi32>
    %5 = arith.andi %1, %4 : vector<1x1024xi32>
    %cst = arith.constant 0.000000e+00 : f32
    %6 = vector.broadcast %cst : f32 to vector<3x33xf32>
    %7 = vector.extract_strided_slice %0 {offsets = [0, 0], sizes = [3, 991], strides = [1, 1]} : vector<3x1024xf32> to vector<3x991xf32>
    %8 = tpu.concatenate %6, %7 in 1 : vector<3x33xf32>, vector<3x991xf32> -> vector<3x1024xf32>
    %c-1_i32 = arith.constant -1 : i32
    %9 = vector.broadcast %c-1_i32 : i32 to vector<1x1024xi32>
    %10 = arith.addi %3, %9 : vector<1x1024xi32>
    %c0_i32 = arith.constant 0 : i32
    %11 = vector.broadcast %c0_i32 : i32 to vector<1x1024xi32>
    %12 = arith.cmpi sge, %10, %11 : vector<1x1024xi32>
    %c-1_i32_1 = arith.constant -1 : i32
    %13 = vector.broadcast %c-1_i32_1 : i32 to vector<1x1024xi32>
    %14 = arith.addi %3, %13 : vector<1x1024xi32>
    %c32_i32 = arith.constant 32 : i32
    %15 = vector.broadcast %c32_i32 : i32 to vector<1x1024xi32>
    %16 = arith.cmpi slt, %14, %15 : vector<1x1024xi32>
    %17 = arith.andi %12, %16 : vector<1x1024xi1>
    %c-1_i32_2 = arith.constant -1 : i32
    %18 = vector.broadcast %c-1_i32_2 : i32 to vector<1x1024xi32>
    %19 = arith.addi %5, %18 : vector<1x1024xi32>
    %c0_i32_3 = arith.constant 0 : i32
    %20 = vector.broadcast %c0_i32_3 : i32 to vector<1x1024xi32>
    %21 = arith.cmpi sge, %19, %20 : vector<1x1024xi32>
    %22 = arith.andi %17, %21 : vector<1x1024xi1>
    %c-1_i32_4 = arith.constant -1 : i32
    %23 = vector.broadcast %c-1_i32_4 : i32 to vector<1x1024xi32>
    %24 = arith.addi %5, %23 : vector<1x1024xi32>
    %c32_i32_5 = arith.constant 32 : i32
    %25 = vector.broadcast %c32_i32_5 : i32 to vector<1x1024xi32>
    %26 = arith.cmpi slt, %24, %25 : vector<1x1024xi32>
    %27 = arith.andi %22, %26 : vector<1x1024xi1>
    %cst_6 = arith.constant 0.000000e+00 : f32
    %28 = vector.shape_cast %27 : vector<1x1024xi1> to vector<1x1024xi1>
    %29 = vector.broadcast %28 : vector<1x1024xi1> to vector<3x1024xi1>
    %30 = vector.broadcast %cst_6 : f32 to vector<3x1024xf32>
    %31 = arith.select %29, %8, %30 : vector<3x1024xi1>, vector<3x1024xf32>
    %cst_7 = arith.constant 0.000000e+00 : f32
    %32 = vector.broadcast %cst_7 : f32 to vector<3x32xf32>
    %33 = vector.extract_strided_slice %0 {offsets = [0, 0], sizes = [3, 992], strides = [1, 1]} : vector<3x1024xf32> to vector<3x992xf32>
    %34 = tpu.concatenate %32, %33 in 1 : vector<3x32xf32>, vector<3x992xf32> -> vector<3x1024xf32>
    %c-1_i32_8 = arith.constant -1 : i32
    %35 = vector.broadcast %c-1_i32_8 : i32 to vector<1x1024xi32>
    %36 = arith.addi %3, %35 : vector<1x1024xi32>
    %c0_i32_9 = arith.constant 0 : i32
    %37 = vector.broadcast %c0_i32_9 : i32 to vector<1x1024xi32>
    %38 = arith.cmpi sge, %36, %37 : vector<1x1024xi32>
    %c-1_i32_10 = arith.constant -1 : i32
    %39 = vector.broadcast %c-1_i32_10 : i32 to vector<1x1024xi32>
    %40 = arith.addi %3, %39 : vector<1x1024xi32>
    %c32_i32_11 = arith.constant 32 : i32
    %41 = vector.broadcast %c32_i32_11 : i32 to vector<1x1024xi32>
    %42 = arith.cmpi slt, %40, %41 : vector<1x1024xi32>
    %43 = arith.andi %38, %42 : vector<1x1024xi1>
    %c0_i32_12 = arith.constant 0 : i32
    %44 = vector.broadcast %c0_i32_12 : i32 to vector<1x1024xi32>
    %45 = arith.addi %5, %44 : vector<1x1024xi32>
    %c0_i32_13 = arith.constant 0 : i32
    %46 = vector.broadcast %c0_i32_13 : i32 to vector<1x1024xi32>
    %47 = arith.cmpi sge, %45, %46 : vector<1x1024xi32>
    %48 = arith.andi %43, %47 : vector<1x1024xi1>
    %c0_i32_14 = arith.constant 0 : i32
    %49 = vector.broadcast %c0_i32_14 : i32 to vector<1x1024xi32>
    %50 = arith.addi %5, %49 : vector<1x1024xi32>
    %c32_i32_15 = arith.constant 32 : i32
    %51 = vector.broadcast %c32_i32_15 : i32 to vector<1x1024xi32>
    %52 = arith.cmpi slt, %50, %51 : vector<1x1024xi32>
    %53 = arith.andi %48, %52 : vector<1x1024xi1>
    %cst_16 = arith.constant 0.000000e+00 : f32
    %54 = vector.shape_cast %53 : vector<1x1024xi1> to vector<1x1024xi1>
    %55 = vector.broadcast %54 : vector<1x1024xi1> to vector<3x1024xi1>
    %56 = vector.broadcast %cst_16 : f32 to vector<3x1024xf32>
    %57 = arith.select %55, %34, %56 : vector<3x1024xi1>, vector<3x1024xf32>
    %cst_17 = arith.constant 0.000000e+00 : f32
    %58 = vector.broadcast %cst_17 : f32 to vector<3x31xf32>
    %59 = vector.extract_strided_slice %0 {offsets = [0, 0], sizes = [3, 993], strides = [1, 1]} : vector<3x1024xf32> to vector<3x993xf32>
    %60 = tpu.concatenate %58, %59 in 1 : vector<3x31xf32>, vector<3x993xf32> -> vector<3x1024xf32>
    %c-1_i32_18 = arith.constant -1 : i32
    %61 = vector.broadcast %c-1_i32_18 : i32 to vector<1x1024xi32>
    %62 = arith.addi %3, %61 : vector<1x1024xi32>
    %c0_i32_19 = arith.constant 0 : i32
    %63 = vector.broadcast %c0_i32_19 : i32 to vector<1x1024xi32>
    %64 = arith.cmpi sge, %62, %63 : vector<1x1024xi32>
    %c-1_i32_20 = arith.constant -1 : i32
    %65 = vector.broadcast %c-1_i32_20 : i32 to vector<1x1024xi32>
    %66 = arith.addi %3, %65 : vector<1x1024xi32>
    %c32_i32_21 = arith.constant 32 : i32
    %67 = vector.broadcast %c32_i32_21 : i32 to vector<1x1024xi32>
    %68 = arith.cmpi slt, %66, %67 : vector<1x1024xi32>
    %69 = arith.andi %64, %68 : vector<1x1024xi1>
    %c1_i32 = arith.constant 1 : i32
    %70 = vector.broadcast %c1_i32 : i32 to vector<1x1024xi32>
    %71 = arith.addi %5, %70 : vector<1x1024xi32>
    %c0_i32_22 = arith.constant 0 : i32
    %72 = vector.broadcast %c0_i32_22 : i32 to vector<1x1024xi32>
    %73 = arith.cmpi sge, %71, %72 : vector<1x1024xi32>
    %74 = arith.andi %69, %73 : vector<1x1024xi1>
    %c1_i32_23 = arith.constant 1 : i32
    %75 = vector.broadcast %c1_i32_23 : i32 to vector<1x1024xi32>
    %76 = arith.addi %5, %75 : vector<1x1024xi32>
    %c32_i32_24 = arith.constant 32 : i32
    %77 = vector.broadcast %c32_i32_24 : i32 to vector<1x1024xi32>
    %78 = arith.cmpi slt, %76, %77 : vector<1x1024xi32>
    %79 = arith.andi %74, %78 : vector<1x1024xi1>
    %cst_25 = arith.constant 0.000000e+00 : f32
    %80 = vector.shape_cast %79 : vector<1x1024xi1> to vector<1x1024xi1>
    %81 = vector.broadcast %80 : vector<1x1024xi1> to vector<3x1024xi1>
    %82 = vector.broadcast %cst_25 : f32 to vector<3x1024xf32>
    %83 = arith.select %81, %60, %82 : vector<3x1024xi1>, vector<3x1024xf32>
    %cst_26 = arith.constant 0.000000e+00 : f32
    %84 = vector.broadcast %cst_26 : f32 to vector<3x1xf32>
    %85 = vector.extract_strided_slice %0 {offsets = [0, 0], sizes = [3, 1023], strides = [1, 1]} : vector<3x1024xf32> to vector<3x1023xf32>
    %86 = tpu.concatenate %84, %85 in 1 : vector<3x1xf32>, vector<3x1023xf32> -> vector<3x1024xf32>
    %c0_i32_27 = arith.constant 0 : i32
    %87 = vector.broadcast %c0_i32_27 : i32 to vector<1x1024xi32>
    %88 = arith.addi %3, %87 : vector<1x1024xi32>
    %c0_i32_28 = arith.constant 0 : i32
    %89 = vector.broadcast %c0_i32_28 : i32 to vector<1x1024xi32>
    %90 = arith.cmpi sge, %88, %89 : vector<1x1024xi32>
    %c0_i32_29 = arith.constant 0 : i32
    %91 = vector.broadcast %c0_i32_29 : i32 to vector<1x1024xi32>
    %92 = arith.addi %3, %91 : vector<1x1024xi32>
    %c32_i32_30 = arith.constant 32 : i32
    %93 = vector.broadcast %c32_i32_30 : i32 to vector<1x1024xi32>
    %94 = arith.cmpi slt, %92, %93 : vector<1x1024xi32>
    %95 = arith.andi %90, %94 : vector<1x1024xi1>
    %c-1_i32_31 = arith.constant -1 : i32
    %96 = vector.broadcast %c-1_i32_31 : i32 to vector<1x1024xi32>
    %97 = arith.addi %5, %96 : vector<1x1024xi32>
    %c0_i32_32 = arith.constant 0 : i32
    %98 = vector.broadcast %c0_i32_32 : i32 to vector<1x1024xi32>
    %99 = arith.cmpi sge, %97, %98 : vector<1x1024xi32>
    %100 = arith.andi %95, %99 : vector<1x1024xi1>
    %c-1_i32_33 = arith.constant -1 : i32
    %101 = vector.broadcast %c-1_i32_33 : i32 to vector<1x1024xi32>
    %102 = arith.addi %5, %101 : vector<1x1024xi32>
    %c32_i32_34 = arith.constant 32 : i32
    %103 = vector.broadcast %c32_i32_34 : i32 to vector<1x1024xi32>
    %104 = arith.cmpi slt, %102, %103 : vector<1x1024xi32>
    %105 = arith.andi %100, %104 : vector<1x1024xi1>
    %cst_35 = arith.constant 0.000000e+00 : f32
    %106 = vector.shape_cast %105 : vector<1x1024xi1> to vector<1x1024xi1>
    %107 = vector.broadcast %106 : vector<1x1024xi1> to vector<3x1024xi1>
    %108 = vector.broadcast %cst_35 : f32 to vector<3x1024xf32>
    %109 = arith.select %107, %86, %108 : vector<3x1024xi1>, vector<3x1024xf32>
    %c0_i32_36 = arith.constant 0 : i32
    %110 = vector.broadcast %c0_i32_36 : i32 to vector<1x1024xi32>
    %111 = arith.addi %3, %110 : vector<1x1024xi32>
    %c0_i32_37 = arith.constant 0 : i32
    %112 = vector.broadcast %c0_i32_37 : i32 to vector<1x1024xi32>
    %113 = arith.cmpi sge, %111, %112 : vector<1x1024xi32>
    %c0_i32_38 = arith.constant 0 : i32
    %114 = vector.broadcast %c0_i32_38 : i32 to vector<1x1024xi32>
    %115 = arith.addi %3, %114 : vector<1x1024xi32>
    %c32_i32_39 = arith.constant 32 : i32
    %116 = vector.broadcast %c32_i32_39 : i32 to vector<1x1024xi32>
    %117 = arith.cmpi slt, %115, %116 : vector<1x1024xi32>
    %118 = arith.andi %113, %117 : vector<1x1024xi1>
    %c0_i32_40 = arith.constant 0 : i32
    %119 = vector.broadcast %c0_i32_40 : i32 to vector<1x1024xi32>
    %120 = arith.addi %5, %119 : vector<1x1024xi32>
    %c0_i32_41 = arith.constant 0 : i32
    %121 = vector.broadcast %c0_i32_41 : i32 to vector<1x1024xi32>
    %122 = arith.cmpi sge, %120, %121 : vector<1x1024xi32>
    %123 = arith.andi %118, %122 : vector<1x1024xi1>
    %c0_i32_42 = arith.constant 0 : i32
    %124 = vector.broadcast %c0_i32_42 : i32 to vector<1x1024xi32>
    %125 = arith.addi %5, %124 : vector<1x1024xi32>
    %c32_i32_43 = arith.constant 32 : i32
    %126 = vector.broadcast %c32_i32_43 : i32 to vector<1x1024xi32>
    %127 = arith.cmpi slt, %125, %126 : vector<1x1024xi32>
    %128 = arith.andi %123, %127 : vector<1x1024xi1>
    %cst_44 = arith.constant 0.000000e+00 : f32
    %129 = vector.shape_cast %128 : vector<1x1024xi1> to vector<1x1024xi1>
    %130 = vector.broadcast %129 : vector<1x1024xi1> to vector<3x1024xi1>
    %131 = vector.broadcast %cst_44 : f32 to vector<3x1024xf32>
    %132 = arith.select %130, %0, %131 : vector<3x1024xi1>, vector<3x1024xf32>
    %133 = vector.extract_strided_slice %0 {offsets = [0, 1], sizes = [3, 1023], strides = [1, 1]} : vector<3x1024xf32> to vector<3x1023xf32>
    %cst_45 = arith.constant 0.000000e+00 : f32
    %134 = vector.broadcast %cst_45 : f32 to vector<3x1xf32>
    %135 = tpu.concatenate %133, %134 in 1 : vector<3x1023xf32>, vector<3x1xf32> -> vector<3x1024xf32>
    %c0_i32_46 = arith.constant 0 : i32
    %136 = vector.broadcast %c0_i32_46 : i32 to vector<1x1024xi32>
    %137 = arith.addi %3, %136 : vector<1x1024xi32>
    %c0_i32_47 = arith.constant 0 : i32
    %138 = vector.broadcast %c0_i32_47 : i32 to vector<1x1024xi32>
    %139 = arith.cmpi sge, %137, %138 : vector<1x1024xi32>
    %c0_i32_48 = arith.constant 0 : i32
    %140 = vector.broadcast %c0_i32_48 : i32 to vector<1x1024xi32>
    %141 = arith.addi %3, %140 : vector<1x1024xi32>
    %c32_i32_49 = arith.constant 32 : i32
    %142 = vector.broadcast %c32_i32_49 : i32 to vector<1x1024xi32>
    %143 = arith.cmpi slt, %141, %142 : vector<1x1024xi32>
    %144 = arith.andi %139, %143 : vector<1x1024xi1>
    %c1_i32_50 = arith.constant 1 : i32
    %145 = vector.broadcast %c1_i32_50 : i32 to vector<1x1024xi32>
    %146 = arith.addi %5, %145 : vector<1x1024xi32>
    %c0_i32_51 = arith.constant 0 : i32
    %147 = vector.broadcast %c0_i32_51 : i32 to vector<1x1024xi32>
    %148 = arith.cmpi sge, %146, %147 : vector<1x1024xi32>
    %149 = arith.andi %144, %148 : vector<1x1024xi1>
    %c1_i32_52 = arith.constant 1 : i32
    %150 = vector.broadcast %c1_i32_52 : i32 to vector<1x1024xi32>
    %151 = arith.addi %5, %150 : vector<1x1024xi32>
    %c32_i32_53 = arith.constant 32 : i32
    %152 = vector.broadcast %c32_i32_53 : i32 to vector<1x1024xi32>
    %153 = arith.cmpi slt, %151, %152 : vector<1x1024xi32>
    %154 = arith.andi %149, %153 : vector<1x1024xi1>
    %cst_54 = arith.constant 0.000000e+00 : f32
    %155 = vector.shape_cast %154 : vector<1x1024xi1> to vector<1x1024xi1>
    %156 = vector.broadcast %155 : vector<1x1024xi1> to vector<3x1024xi1>
    %157 = vector.broadcast %cst_54 : f32 to vector<3x1024xf32>
    %158 = arith.select %156, %135, %157 : vector<3x1024xi1>, vector<3x1024xf32>
    %159 = vector.extract_strided_slice %0 {offsets = [0, 31], sizes = [3, 993], strides = [1, 1]} : vector<3x1024xf32> to vector<3x993xf32>
    %cst_55 = arith.constant 0.000000e+00 : f32
    %160 = vector.broadcast %cst_55 : f32 to vector<3x31xf32>
    %161 = tpu.concatenate %159, %160 in 1 : vector<3x993xf32>, vector<3x31xf32> -> vector<3x1024xf32>
    %c1_i32_56 = arith.constant 1 : i32
    %162 = vector.broadcast %c1_i32_56 : i32 to vector<1x1024xi32>
    %163 = arith.addi %3, %162 : vector<1x1024xi32>
    %c0_i32_57 = arith.constant 0 : i32
    %164 = vector.broadcast %c0_i32_57 : i32 to vector<1x1024xi32>
    %165 = arith.cmpi sge, %163, %164 : vector<1x1024xi32>
    %c1_i32_58 = arith.constant 1 : i32
    %166 = vector.broadcast %c1_i32_58 : i32 to vector<1x1024xi32>
    %167 = arith.addi %3, %166 : vector<1x1024xi32>
    %c32_i32_59 = arith.constant 32 : i32
    %168 = vector.broadcast %c32_i32_59 : i32 to vector<1x1024xi32>
    %169 = arith.cmpi slt, %167, %168 : vector<1x1024xi32>
    %170 = arith.andi %165, %169 : vector<1x1024xi1>
    %c-1_i32_60 = arith.constant -1 : i32
    %171 = vector.broadcast %c-1_i32_60 : i32 to vector<1x1024xi32>
    %172 = arith.addi %5, %171 : vector<1x1024xi32>
    %c0_i32_61 = arith.constant 0 : i32
    %173 = vector.broadcast %c0_i32_61 : i32 to vector<1x1024xi32>
    %174 = arith.cmpi sge, %172, %173 : vector<1x1024xi32>
    %175 = arith.andi %170, %174 : vector<1x1024xi1>
    %c-1_i32_62 = arith.constant -1 : i32
    %176 = vector.broadcast %c-1_i32_62 : i32 to vector<1x1024xi32>
    %177 = arith.addi %5, %176 : vector<1x1024xi32>
    %c32_i32_63 = arith.constant 32 : i32
    %178 = vector.broadcast %c32_i32_63 : i32 to vector<1x1024xi32>
    %179 = arith.cmpi slt, %177, %178 : vector<1x1024xi32>
    %180 = arith.andi %175, %179 : vector<1x1024xi1>
    %cst_64 = arith.constant 0.000000e+00 : f32
    %181 = vector.shape_cast %180 : vector<1x1024xi1> to vector<1x1024xi1>
    %182 = vector.broadcast %181 : vector<1x1024xi1> to vector<3x1024xi1>
    %183 = vector.broadcast %cst_64 : f32 to vector<3x1024xf32>
    %184 = arith.select %182, %161, %183 : vector<3x1024xi1>, vector<3x1024xf32>
    %185 = vector.extract_strided_slice %0 {offsets = [0, 32], sizes = [3, 992], strides = [1, 1]} : vector<3x1024xf32> to vector<3x992xf32>
    %cst_65 = arith.constant 0.000000e+00 : f32
    %186 = vector.broadcast %cst_65 : f32 to vector<3x32xf32>
    %187 = tpu.concatenate %185, %186 in 1 : vector<3x992xf32>, vector<3x32xf32> -> vector<3x1024xf32>
    %c1_i32_66 = arith.constant 1 : i32
    %188 = vector.broadcast %c1_i32_66 : i32 to vector<1x1024xi32>
    %189 = arith.addi %3, %188 : vector<1x1024xi32>
    %c0_i32_67 = arith.constant 0 : i32
    %190 = vector.broadcast %c0_i32_67 : i32 to vector<1x1024xi32>
    %191 = arith.cmpi sge, %189, %190 : vector<1x1024xi32>
    %c1_i32_68 = arith.constant 1 : i32
    %192 = vector.broadcast %c1_i32_68 : i32 to vector<1x1024xi32>
    %193 = arith.addi %3, %192 : vector<1x1024xi32>
    %c32_i32_69 = arith.constant 32 : i32
    %194 = vector.broadcast %c32_i32_69 : i32 to vector<1x1024xi32>
    %195 = arith.cmpi slt, %193, %194 : vector<1x1024xi32>
    %196 = arith.andi %191, %195 : vector<1x1024xi1>
    %c0_i32_70 = arith.constant 0 : i32
    %197 = vector.broadcast %c0_i32_70 : i32 to vector<1x1024xi32>
    %198 = arith.addi %5, %197 : vector<1x1024xi32>
    %c0_i32_71 = arith.constant 0 : i32
    %199 = vector.broadcast %c0_i32_71 : i32 to vector<1x1024xi32>
    %200 = arith.cmpi sge, %198, %199 : vector<1x1024xi32>
    %201 = arith.andi %196, %200 : vector<1x1024xi1>
    %c0_i32_72 = arith.constant 0 : i32
    %202 = vector.broadcast %c0_i32_72 : i32 to vector<1x1024xi32>
    %203 = arith.addi %5, %202 : vector<1x1024xi32>
    %c32_i32_73 = arith.constant 32 : i32
    %204 = vector.broadcast %c32_i32_73 : i32 to vector<1x1024xi32>
    %205 = arith.cmpi slt, %203, %204 : vector<1x1024xi32>
    %206 = arith.andi %201, %205 : vector<1x1024xi1>
    %cst_74 = arith.constant 0.000000e+00 : f32
    %207 = vector.shape_cast %206 : vector<1x1024xi1> to vector<1x1024xi1>
    %208 = vector.broadcast %207 : vector<1x1024xi1> to vector<3x1024xi1>
    %209 = vector.broadcast %cst_74 : f32 to vector<3x1024xf32>
    %210 = arith.select %208, %187, %209 : vector<3x1024xi1>, vector<3x1024xf32>
    %211 = vector.extract_strided_slice %0 {offsets = [0, 33], sizes = [3, 991], strides = [1, 1]} : vector<3x1024xf32> to vector<3x991xf32>
    %cst_75 = arith.constant 0.000000e+00 : f32
    %212 = vector.broadcast %cst_75 : f32 to vector<3x33xf32>
    %213 = tpu.concatenate %211, %212 in 1 : vector<3x991xf32>, vector<3x33xf32> -> vector<3x1024xf32>
    %c1_i32_76 = arith.constant 1 : i32
    %214 = vector.broadcast %c1_i32_76 : i32 to vector<1x1024xi32>
    %215 = arith.addi %3, %214 : vector<1x1024xi32>
    %c0_i32_77 = arith.constant 0 : i32
    %216 = vector.broadcast %c0_i32_77 : i32 to vector<1x1024xi32>
    %217 = arith.cmpi sge, %215, %216 : vector<1x1024xi32>
    %c1_i32_78 = arith.constant 1 : i32
    %218 = vector.broadcast %c1_i32_78 : i32 to vector<1x1024xi32>
    %219 = arith.addi %3, %218 : vector<1x1024xi32>
    %c32_i32_79 = arith.constant 32 : i32
    %220 = vector.broadcast %c32_i32_79 : i32 to vector<1x1024xi32>
    %221 = arith.cmpi slt, %219, %220 : vector<1x1024xi32>
    %222 = arith.andi %217, %221 : vector<1x1024xi1>
    %c1_i32_80 = arith.constant 1 : i32
    %223 = vector.broadcast %c1_i32_80 : i32 to vector<1x1024xi32>
    %224 = arith.addi %5, %223 : vector<1x1024xi32>
    %c0_i32_81 = arith.constant 0 : i32
    %225 = vector.broadcast %c0_i32_81 : i32 to vector<1x1024xi32>
    %226 = arith.cmpi sge, %224, %225 : vector<1x1024xi32>
    %227 = arith.andi %222, %226 : vector<1x1024xi1>
    %c1_i32_82 = arith.constant 1 : i32
    %228 = vector.broadcast %c1_i32_82 : i32 to vector<1x1024xi32>
    %229 = arith.addi %5, %228 : vector<1x1024xi32>
    %c32_i32_83 = arith.constant 32 : i32
    %230 = vector.broadcast %c32_i32_83 : i32 to vector<1x1024xi32>
    %231 = arith.cmpi slt, %229, %230 : vector<1x1024xi32>
    %232 = arith.andi %227, %231 : vector<1x1024xi1>
    %cst_84 = arith.constant 0.000000e+00 : f32
    %233 = vector.shape_cast %232 : vector<1x1024xi1> to vector<1x1024xi1>
    %234 = vector.broadcast %233 : vector<1x1024xi1> to vector<3x1024xi1>
    %235 = vector.broadcast %cst_84 : f32 to vector<3x1024xf32>
    %236 = arith.select %234, %213, %235 : vector<3x1024xi1>, vector<3x1024xf32>
    %cst_85 = arith.constant 1.000000e+00 : f32
    %237 = vector.broadcast %cst_85 : f32 to vector<1x1024xf32>
    %238 = tpu.concatenate %31, %57, %83, %109, %132, %158, %184, %210, %236, %237 in 0 : vector<3x1024xf32>, vector<3x1024xf32>, vector<3x1024xf32>, vector<3x1024xf32>, vector<3x1024xf32>, vector<3x1024xf32>, vector<3x1024xf32>, vector<3x1024xf32>, vector<3x1024xf32>, vector<1x1024xf32> -> vector<28x1024xf32>
    %c0_86 = arith.constant 0 : index
    %c0_87 = arith.constant 0 : index
    %239 = vector.load %arg1[%c0_86, %c0_87] : memref<10x28xf32, #tpu.memory_space<vmem>>, vector<10x28xf32>
    %cst_88 = arith.constant dense<0.000000e+00> : vector<10x1024xf32>
    %240 = tpu.matmul %239, %238, %cst_88 {dimension_numbers = #tpu.dot_dimension_numbers<[1], [0], [0], [1], [0, 0, 1, 1], [], []>} : vector<10x28xf32>, vector<28x1024xf32>, vector<10x1024xf32> -> vector<10x1024xf32>
    %241 = vector.extract_strided_slice %240 {offsets = [0, 1], sizes = [10, 1023], strides = [1, 1]} : vector<10x1024xf32> to vector<10x1023xf32>
    %cst_89 = arith.constant 0.000000e+00 : f32
    %242 = vector.broadcast %cst_89 : f32 to vector<10x1xf32>
    %243 = tpu.concatenate %241, %242 in 1 : vector<10x1023xf32>, vector<10x1xf32> -> vector<10x1024xf32>
    %244 = arith.maximumf %240, %243 : vector<10x1024xf32>
    %245 = vector.extract_strided_slice %244 {offsets = [0, 32], sizes = [10, 992], strides = [1, 1]} : vector<10x1024xf32> to vector<10x992xf32>
    %cst_90 = arith.constant 0.000000e+00 : f32
    %246 = vector.broadcast %cst_90 : f32 to vector<10x32xf32>
    %247 = tpu.concatenate %245, %246 in 1 : vector<10x992xf32>, vector<10x32xf32> -> vector<10x1024xf32>
    %248 = arith.maximumf %244, %247 : vector<10x1024xf32>
    %cst_91 = arith.constant 0.000000e+00 : f32
    %249 = vector.broadcast %cst_91 : f32 to vector<10x1024xf32>
    %250 = arith.maximumf %248, %249 : vector<10x1024xf32>
    %c6_i32 = arith.constant 6 : i32
    %251 = vector.broadcast %c6_i32 : i32 to vector<1x1024xi32>
    %252 = arith.shrsi %1, %251 : vector<1x1024xi32>
    %c1_i32_92 = arith.constant 1 : i32
    %253 = vector.broadcast %c1_i32_92 : i32 to vector<1x1024xi32>
    %254 = arith.shrsi %1, %253 : vector<1x1024xi32>
    %c15_i32 = arith.constant 15 : i32
    %255 = vector.broadcast %c15_i32 : i32 to vector<1x1024xi32>
    %256 = arith.andi %254, %255 : vector<1x1024xi32>
    %cst_93 = arith.constant 0.000000e+00 : f32
    %257 = vector.broadcast %cst_93 : f32 to vector<10x66xf32>
    %258 = vector.extract_strided_slice %250 {offsets = [0, 0], sizes = [10, 958], strides = [1, 1]} : vector<10x1024xf32> to vector<10x958xf32>
    %259 = tpu.concatenate %257, %258 in 1 : vector<10x66xf32>, vector<10x958xf32> -> vector<10x1024xf32>
    %c-1_i32_94 = arith.constant -1 : i32
    %260 = vector.broadcast %c-1_i32_94 : i32 to vector<1x1024xi32>
    %261 = arith.addi %252, %260 : vector<1x1024xi32>
    %c0_i32_95 = arith.constant 0 : i32
    %262 = vector.broadcast %c0_i32_95 : i32 to vector<1x1024xi32>
    %263 = arith.cmpi sge, %261, %262 : vector<1x1024xi32>
    %c-1_i32_96 = arith.constant -1 : i32
    %264 = vector.broadcast %c-1_i32_96 : i32 to vector<1x1024xi32>
    %265 = arith.addi %252, %264 : vector<1x1024xi32>
    %c16_i32 = arith.constant 16 : i32
    %266 = vector.broadcast %c16_i32 : i32 to vector<1x1024xi32>
    %267 = arith.cmpi slt, %265, %266 : vector<1x1024xi32>
    %268 = arith.andi %263, %267 : vector<1x1024xi1>
    %c-1_i32_97 = arith.constant -1 : i32
    %269 = vector.broadcast %c-1_i32_97 : i32 to vector<1x1024xi32>
    %270 = arith.addi %256, %269 : vector<1x1024xi32>
    %c0_i32_98 = arith.constant 0 : i32
    %271 = vector.broadcast %c0_i32_98 : i32 to vector<1x1024xi32>
    %272 = arith.cmpi sge, %270, %271 : vector<1x1024xi32>
    %273 = arith.andi %268, %272 : vector<1x1024xi1>
    %c-1_i32_99 = arith.constant -1 : i32
    %274 = vector.broadcast %c-1_i32_99 : i32 to vector<1x1024xi32>
    %275 = arith.addi %256, %274 : vector<1x1024xi32>
    %c16_i32_100 = arith.constant 16 : i32
    %276 = vector.broadcast %c16_i32_100 : i32 to vector<1x1024xi32>
    %277 = arith.cmpi slt, %275, %276 : vector<1x1024xi32>
    %278 = arith.andi %273, %277 : vector<1x1024xi1>
    %cst_101 = arith.constant 0.000000e+00 : f32
    %279 = vector.shape_cast %278 : vector<1x1024xi1> to vector<1x1024xi1>
    %280 = vector.broadcast %279 : vector<1x1024xi1> to vector<10x1024xi1>
    %281 = vector.broadcast %cst_101 : f32 to vector<10x1024xf32>
    %282 = arith.select %280, %259, %281 : vector<10x1024xi1>, vector<10x1024xf32>
    %cst_102 = arith.constant 0.000000e+00 : f32
    %283 = vector.broadcast %cst_102 : f32 to vector<10x64xf32>
    %284 = vector.extract_strided_slice %250 {offsets = [0, 0], sizes = [10, 960], strides = [1, 1]} : vector<10x1024xf32> to vector<10x960xf32>
    %285 = tpu.concatenate %283, %284 in 1 : vector<10x64xf32>, vector<10x960xf32> -> vector<10x1024xf32>
    %c-1_i32_103 = arith.constant -1 : i32
    %286 = vector.broadcast %c-1_i32_103 : i32 to vector<1x1024xi32>
    %287 = arith.addi %252, %286 : vector<1x1024xi32>
    %c0_i32_104 = arith.constant 0 : i32
    %288 = vector.broadcast %c0_i32_104 : i32 to vector<1x1024xi32>
    %289 = arith.cmpi sge, %287, %288 : vector<1x1024xi32>
    %c-1_i32_105 = arith.constant -1 : i32
    %290 = vector.broadcast %c-1_i32_105 : i32 to vector<1x1024xi32>
    %291 = arith.addi %252, %290 : vector<1x1024xi32>
    %c16_i32_106 = arith.constant 16 : i32
    %292 = vector.broadcast %c16_i32_106 : i32 to vector<1x1024xi32>
    %293 = arith.cmpi slt, %291, %292 : vector<1x1024xi32>
    %294 = arith.andi %289, %293 : vector<1x1024xi1>
    %c0_i32_107 = arith.constant 0 : i32
    %295 = vector.broadcast %c0_i32_107 : i32 to vector<1x1024xi32>
    %296 = arith.addi %256, %295 : vector<1x1024xi32>
    %c0_i32_108 = arith.constant 0 : i32
    %297 = vector.broadcast %c0_i32_108 : i32 to vector<1x1024xi32>
    %298 = arith.cmpi sge, %296, %297 : vector<1x1024xi32>
    %299 = arith.andi %294, %298 : vector<1x1024xi1>
    %c0_i32_109 = arith.constant 0 : i32
    %300 = vector.broadcast %c0_i32_109 : i32 to vector<1x1024xi32>
    %301 = arith.addi %256, %300 : vector<1x1024xi32>
    %c16_i32_110 = arith.constant 16 : i32
    %302 = vector.broadcast %c16_i32_110 : i32 to vector<1x1024xi32>
    %303 = arith.cmpi slt, %301, %302 : vector<1x1024xi32>
    %304 = arith.andi %299, %303 : vector<1x1024xi1>
    %cst_111 = arith.constant 0.000000e+00 : f32
    %305 = vector.shape_cast %304 : vector<1x1024xi1> to vector<1x1024xi1>
    %306 = vector.broadcast %305 : vector<1x1024xi1> to vector<10x1024xi1>
    %307 = vector.broadcast %cst_111 : f32 to vector<10x1024xf32>
    %308 = arith.select %306, %285, %307 : vector<10x1024xi1>, vector<10x1024xf32>
    %cst_112 = arith.constant 0.000000e+00 : f32
    %309 = vector.broadcast %cst_112 : f32 to vector<10x62xf32>
    %310 = vector.extract_strided_slice %250 {offsets = [0, 0], sizes = [10, 962], strides = [1, 1]} : vector<10x1024xf32> to vector<10x962xf32>
    %311 = tpu.concatenate %309, %310 in 1 : vector<10x62xf32>, vector<10x962xf32> -> vector<10x1024xf32>
    %c-1_i32_113 = arith.constant -1 : i32
    %312 = vector.broadcast %c-1_i32_113 : i32 to vector<1x1024xi32>
    %313 = arith.addi %252, %312 : vector<1x1024xi32>
    %c0_i32_114 = arith.constant 0 : i32
    %314 = vector.broadcast %c0_i32_114 : i32 to vector<1x1024xi32>
    %315 = arith.cmpi sge, %313, %314 : vector<1x1024xi32>
    %c-1_i32_115 = arith.constant -1 : i32
    %316 = vector.broadcast %c-1_i32_115 : i32 to vector<1x1024xi32>
    %317 = arith.addi %252, %316 : vector<1x1024xi32>
    %c16_i32_116 = arith.constant 16 : i32
    %318 = vector.broadcast %c16_i32_116 : i32 to vector<1x1024xi32>
    %319 = arith.cmpi slt, %317, %318 : vector<1x1024xi32>
    %320 = arith.andi %315, %319 : vector<1x1024xi1>
    %c1_i32_117 = arith.constant 1 : i32
    %321 = vector.broadcast %c1_i32_117 : i32 to vector<1x1024xi32>
    %322 = arith.addi %256, %321 : vector<1x1024xi32>
    %c0_i32_118 = arith.constant 0 : i32
    %323 = vector.broadcast %c0_i32_118 : i32 to vector<1x1024xi32>
    %324 = arith.cmpi sge, %322, %323 : vector<1x1024xi32>
    %325 = arith.andi %320, %324 : vector<1x1024xi1>
    %c1_i32_119 = arith.constant 1 : i32
    %326 = vector.broadcast %c1_i32_119 : i32 to vector<1x1024xi32>
    %327 = arith.addi %256, %326 : vector<1x1024xi32>
    %c16_i32_120 = arith.constant 16 : i32
    %328 = vector.broadcast %c16_i32_120 : i32 to vector<1x1024xi32>
    %329 = arith.cmpi slt, %327, %328 : vector<1x1024xi32>
    %330 = arith.andi %325, %329 : vector<1x1024xi1>
    %cst_121 = arith.constant 0.000000e+00 : f32
    %331 = vector.shape_cast %330 : vector<1x1024xi1> to vector<1x1024xi1>
    %332 = vector.broadcast %331 : vector<1x1024xi1> to vector<10x1024xi1>
    %333 = vector.broadcast %cst_121 : f32 to vector<10x1024xf32>
    %334 = arith.select %332, %311, %333 : vector<10x1024xi1>, vector<10x1024xf32>
    %cst_122 = arith.constant 0.000000e+00 : f32
    %335 = vector.broadcast %cst_122 : f32 to vector<10x2xf32>
    %336 = vector.extract_strided_slice %250 {offsets = [0, 0], sizes = [10, 1022], strides = [1, 1]} : vector<10x1024xf32> to vector<10x1022xf32>
    %337 = tpu.concatenate %335, %336 in 1 : vector<10x2xf32>, vector<10x1022xf32> -> vector<10x1024xf32>
    %c0_i32_123 = arith.constant 0 : i32
    %338 = vector.broadcast %c0_i32_123 : i32 to vector<1x1024xi32>
    %339 = arith.addi %252, %338 : vector<1x1024xi32>
    %c0_i32_124 = arith.constant 0 : i32
    %340 = vector.broadcast %c0_i32_124 : i32 to vector<1x1024xi32>
    %341 = arith.cmpi sge, %339, %340 : vector<1x1024xi32>
    %c0_i32_125 = arith.constant 0 : i32
    %342 = vector.broadcast %c0_i32_125 : i32 to vector<1x1024xi32>
    %343 = arith.addi %252, %342 : vector<1x1024xi32>
    %c16_i32_126 = arith.constant 16 : i32
    %344 = vector.broadcast %c16_i32_126 : i32 to vector<1x1024xi32>
    %345 = arith.cmpi slt, %343, %344 : vector<1x1024xi32>
    %346 = arith.andi %341, %345 : vector<1x1024xi1>
    %c-1_i32_127 = arith.constant -1 : i32
    %347 = vector.broadcast %c-1_i32_127 : i32 to vector<1x1024xi32>
    %348 = arith.addi %256, %347 : vector<1x1024xi32>
    %c0_i32_128 = arith.constant 0 : i32
    %349 = vector.broadcast %c0_i32_128 : i32 to vector<1x1024xi32>
    %350 = arith.cmpi sge, %348, %349 : vector<1x1024xi32>
    %351 = arith.andi %346, %350 : vector<1x1024xi1>
    %c-1_i32_129 = arith.constant -1 : i32
    %352 = vector.broadcast %c-1_i32_129 : i32 to vector<1x1024xi32>
    %353 = arith.addi %256, %352 : vector<1x1024xi32>
    %c16_i32_130 = arith.constant 16 : i32
    %354 = vector.broadcast %c16_i32_130 : i32 to vector<1x1024xi32>
    %355 = arith.cmpi slt, %353, %354 : vector<1x1024xi32>
    %356 = arith.andi %351, %355 : vector<1x1024xi1>
    %cst_131 = arith.constant 0.000000e+00 : f32
    %357 = vector.shape_cast %356 : vector<1x1024xi1> to vector<1x1024xi1>
    %358 = vector.broadcast %357 : vector<1x1024xi1> to vector<10x1024xi1>
    %359 = vector.broadcast %cst_131 : f32 to vector<10x1024xf32>
    %360 = arith.select %358, %337, %359 : vector<10x1024xi1>, vector<10x1024xf32>
    %c0_i32_132 = arith.constant 0 : i32
    %361 = vector.broadcast %c0_i32_132 : i32 to vector<1x1024xi32>
    %362 = arith.addi %252, %361 : vector<1x1024xi32>
    %c0_i32_133 = arith.constant 0 : i32
    %363 = vector.broadcast %c0_i32_133 : i32 to vector<1x1024xi32>
    %364 = arith.cmpi sge, %362, %363 : vector<1x1024xi32>
    %c0_i32_134 = arith.constant 0 : i32
    %365 = vector.broadcast %c0_i32_134 : i32 to vector<1x1024xi32>
    %366 = arith.addi %252, %365 : vector<1x1024xi32>
    %c16_i32_135 = arith.constant 16 : i32
    %367 = vector.broadcast %c16_i32_135 : i32 to vector<1x1024xi32>
    %368 = arith.cmpi slt, %366, %367 : vector<1x1024xi32>
    %369 = arith.andi %364, %368 : vector<1x1024xi1>
    %c0_i32_136 = arith.constant 0 : i32
    %370 = vector.broadcast %c0_i32_136 : i32 to vector<1x1024xi32>
    %371 = arith.addi %256, %370 : vector<1x1024xi32>
    %c0_i32_137 = arith.constant 0 : i32
    %372 = vector.broadcast %c0_i32_137 : i32 to vector<1x1024xi32>
    %373 = arith.cmpi sge, %371, %372 : vector<1x1024xi32>
    %374 = arith.andi %369, %373 : vector<1x1024xi1>
    %c0_i32_138 = arith.constant 0 : i32
    %375 = vector.broadcast %c0_i32_138 : i32 to vector<1x1024xi32>
    %376 = arith.addi %256, %375 : vector<1x1024xi32>
    %c16_i32_139 = arith.constant 16 : i32
    %377 = vector.broadcast %c16_i32_139 : i32 to vector<1x1024xi32>
    %378 = arith.cmpi slt, %376, %377 : vector<1x1024xi32>
    %379 = arith.andi %374, %378 : vector<1x1024xi1>
    %cst_140 = arith.constant 0.000000e+00 : f32
    %380 = vector.shape_cast %379 : vector<1x1024xi1> to vector<1x1024xi1>
    %381 = vector.broadcast %380 : vector<1x1024xi1> to vector<10x1024xi1>
    %382 = vector.broadcast %cst_140 : f32 to vector<10x1024xf32>
    %383 = arith.select %381, %250, %382 : vector<10x1024xi1>, vector<10x1024xf32>
    %384 = vector.extract_strided_slice %250 {offsets = [0, 2], sizes = [10, 1022], strides = [1, 1]} : vector<10x1024xf32> to vector<10x1022xf32>
    %cst_141 = arith.constant 0.000000e+00 : f32
    %385 = vector.broadcast %cst_141 : f32 to vector<10x2xf32>
    %386 = tpu.concatenate %384, %385 in 1 : vector<10x1022xf32>, vector<10x2xf32> -> vector<10x1024xf32>
    %c0_i32_142 = arith.constant 0 : i32
    %387 = vector.broadcast %c0_i32_142 : i32 to vector<1x1024xi32>
    %388 = arith.addi %252, %387 : vector<1x1024xi32>
    %c0_i32_143 = arith.constant 0 : i32
    %389 = vector.broadcast %c0_i32_143 : i32 to vector<1x1024xi32>
    %390 = arith.cmpi sge, %388, %389 : vector<1x1024xi32>
    %c0_i32_144 = arith.constant 0 : i32
    %391 = vector.broadcast %c0_i32_144 : i32 to vector<1x1024xi32>
    %392 = arith.addi %252, %391 : vector<1x1024xi32>
    %c16_i32_145 = arith.constant 16 : i32
    %393 = vector.broadcast %c16_i32_145 : i32 to vector<1x1024xi32>
    %394 = arith.cmpi slt, %392, %393 : vector<1x1024xi32>
    %395 = arith.andi %390, %394 : vector<1x1024xi1>
    %c1_i32_146 = arith.constant 1 : i32
    %396 = vector.broadcast %c1_i32_146 : i32 to vector<1x1024xi32>
    %397 = arith.addi %256, %396 : vector<1x1024xi32>
    %c0_i32_147 = arith.constant 0 : i32
    %398 = vector.broadcast %c0_i32_147 : i32 to vector<1x1024xi32>
    %399 = arith.cmpi sge, %397, %398 : vector<1x1024xi32>
    %400 = arith.andi %395, %399 : vector<1x1024xi1>
    %c1_i32_148 = arith.constant 1 : i32
    %401 = vector.broadcast %c1_i32_148 : i32 to vector<1x1024xi32>
    %402 = arith.addi %256, %401 : vector<1x1024xi32>
    %c16_i32_149 = arith.constant 16 : i32
    %403 = vector.broadcast %c16_i32_149 : i32 to vector<1x1024xi32>
    %404 = arith.cmpi slt, %402, %403 : vector<1x1024xi32>
    %405 = arith.andi %400, %404 : vector<1x1024xi1>
    %cst_150 = arith.constant 0.000000e+00 : f32
    %406 = vector.shape_cast %405 : vector<1x1024xi1> to vector<1x1024xi1>
    %407 = vector.broadcast %406 : vector<1x1024xi1> to vector<10x1024xi1>
    %408 = vector.broadcast %cst_150 : f32 to vector<10x1024xf32>
    %409 = arith.select %407, %386, %408 : vector<10x1024xi1>, vector<10x1024xf32>
    %410 = vector.extract_strided_slice %250 {offsets = [0, 62], sizes = [10, 962], strides = [1, 1]} : vector<10x1024xf32> to vector<10x962xf32>
    %cst_151 = arith.constant 0.000000e+00 : f32
    %411 = vector.broadcast %cst_151 : f32 to vector<10x62xf32>
    %412 = tpu.concatenate %410, %411 in 1 : vector<10x962xf32>, vector<10x62xf32> -> vector<10x1024xf32>
    %c1_i32_152 = arith.constant 1 : i32
    %413 = vector.broadcast %c1_i32_152 : i32 to vector<1x1024xi32>
    %414 = arith.addi %252, %413 : vector<1x1024xi32>
    %c0_i32_153 = arith.constant 0 : i32
    %415 = vector.broadcast %c0_i32_153 : i32 to vector<1x1024xi32>
    %416 = arith.cmpi sge, %414, %415 : vector<1x1024xi32>
    %c1_i32_154 = arith.constant 1 : i32
    %417 = vector.broadcast %c1_i32_154 : i32 to vector<1x1024xi32>
    %418 = arith.addi %252, %417 : vector<1x1024xi32>
    %c16_i32_155 = arith.constant 16 : i32
    %419 = vector.broadcast %c16_i32_155 : i32 to vector<1x1024xi32>
    %420 = arith.cmpi slt, %418, %419 : vector<1x1024xi32>
    %421 = arith.andi %416, %420 : vector<1x1024xi1>
    %c-1_i32_156 = arith.constant -1 : i32
    %422 = vector.broadcast %c-1_i32_156 : i32 to vector<1x1024xi32>
    %423 = arith.addi %256, %422 : vector<1x1024xi32>
    %c0_i32_157 = arith.constant 0 : i32
    %424 = vector.broadcast %c0_i32_157 : i32 to vector<1x1024xi32>
    %425 = arith.cmpi sge, %423, %424 : vector<1x1024xi32>
    %426 = arith.andi %421, %425 : vector<1x1024xi1>
    %c-1_i32_158 = arith.constant -1 : i32
    %427 = vector.broadcast %c-1_i32_158 : i32 to vector<1x1024xi32>
    %428 = arith.addi %256, %427 : vector<1x1024xi32>
    %c16_i32_159 = arith.constant 16 : i32
    %429 = vector.broadcast %c16_i32_159 : i32 to vector<1x1024xi32>
    %430 = arith.cmpi slt, %428, %429 : vector<1x1024xi32>
    %431 = arith.andi %426, %430 : vector<1x1024xi1>
    %cst_160 = arith.constant 0.000000e+00 : f32
    %432 = vector.shape_cast %431 : vector<1x1024xi1> to vector<1x1024xi1>
    %433 = vector.broadcast %432 : vector<1x1024xi1> to vector<10x1024xi1>
    %434 = vector.broadcast %cst_160 : f32 to vector<10x1024xf32>
    %435 = arith.select %433, %412, %434 : vector<10x1024xi1>, vector<10x1024xf32>
    %436 = vector.extract_strided_slice %250 {offsets = [0, 64], sizes = [10, 960], strides = [1, 1]} : vector<10x1024xf32> to vector<10x960xf32>
    %cst_161 = arith.constant 0.000000e+00 : f32
    %437 = vector.broadcast %cst_161 : f32 to vector<10x64xf32>
    %438 = tpu.concatenate %436, %437 in 1 : vector<10x960xf32>, vector<10x64xf32> -> vector<10x1024xf32>
    %c1_i32_162 = arith.constant 1 : i32
    %439 = vector.broadcast %c1_i32_162 : i32 to vector<1x1024xi32>
    %440 = arith.addi %252, %439 : vector<1x1024xi32>
    %c0_i32_163 = arith.constant 0 : i32
    %441 = vector.broadcast %c0_i32_163 : i32 to vector<1x1024xi32>
    %442 = arith.cmpi sge, %440, %441 : vector<1x1024xi32>
    %c1_i32_164 = arith.constant 1 : i32
    %443 = vector.broadcast %c1_i32_164 : i32 to vector<1x1024xi32>
    %444 = arith.addi %252, %443 : vector<1x1024xi32>
    %c16_i32_165 = arith.constant 16 : i32
    %445 = vector.broadcast %c16_i32_165 : i32 to vector<1x1024xi32>
    %446 = arith.cmpi slt, %444, %445 : vector<1x1024xi32>
    %447 = arith.andi %442, %446 : vector<1x1024xi1>
    %c0_i32_166 = arith.constant 0 : i32
    %448 = vector.broadcast %c0_i32_166 : i32 to vector<1x1024xi32>
    %449 = arith.addi %256, %448 : vector<1x1024xi32>
    %c0_i32_167 = arith.constant 0 : i32
    %450 = vector.broadcast %c0_i32_167 : i32 to vector<1x1024xi32>
    %451 = arith.cmpi sge, %449, %450 : vector<1x1024xi32>
    %452 = arith.andi %447, %451 : vector<1x1024xi1>
    %c0_i32_168 = arith.constant 0 : i32
    %453 = vector.broadcast %c0_i32_168 : i32 to vector<1x1024xi32>
    %454 = arith.addi %256, %453 : vector<1x1024xi32>
    %c16_i32_169 = arith.constant 16 : i32
    %455 = vector.broadcast %c16_i32_169 : i32 to vector<1x1024xi32>
    %456 = arith.cmpi slt, %454, %455 : vector<1x1024xi32>
    %457 = arith.andi %452, %456 : vector<1x1024xi1>
    %cst_170 = arith.constant 0.000000e+00 : f32
    %458 = vector.shape_cast %457 : vector<1x1024xi1> to vector<1x1024xi1>
    %459 = vector.broadcast %458 : vector<1x1024xi1> to vector<10x1024xi1>
    %460 = vector.broadcast %cst_170 : f32 to vector<10x1024xf32>
    %461 = arith.select %459, %438, %460 : vector<10x1024xi1>, vector<10x1024xf32>
    %462 = vector.extract_strided_slice %250 {offsets = [0, 66], sizes = [10, 958], strides = [1, 1]} : vector<10x1024xf32> to vector<10x958xf32>
    %cst_171 = arith.constant 0.000000e+00 : f32
    %463 = vector.broadcast %cst_171 : f32 to vector<10x66xf32>
    %464 = tpu.concatenate %462, %463 in 1 : vector<10x958xf32>, vector<10x66xf32> -> vector<10x1024xf32>
    %c1_i32_172 = arith.constant 1 : i32
    %465 = vector.broadcast %c1_i32_172 : i32 to vector<1x1024xi32>
    %466 = arith.addi %252, %465 : vector<1x1024xi32>
    %c0_i32_173 = arith.constant 0 : i32
    %467 = vector.broadcast %c0_i32_173 : i32 to vector<1x1024xi32>
    %468 = arith.cmpi sge, %466, %467 : vector<1x1024xi32>
    %c1_i32_174 = arith.constant 1 : i32
    %469 = vector.broadcast %c1_i32_174 : i32 to vector<1x1024xi32>
    %470 = arith.addi %252, %469 : vector<1x1024xi32>
    %c16_i32_175 = arith.constant 16 : i32
    %471 = vector.broadcast %c16_i32_175 : i32 to vector<1x1024xi32>
    %472 = arith.cmpi slt, %470, %471 : vector<1x1024xi32>
    %473 = arith.andi %468, %472 : vector<1x1024xi1>
    %c1_i32_176 = arith.constant 1 : i32
    %474 = vector.broadcast %c1_i32_176 : i32 to vector<1x1024xi32>
    %475 = arith.addi %256, %474 : vector<1x1024xi32>
    %c0_i32_177 = arith.constant 0 : i32
    %476 = vector.broadcast %c0_i32_177 : i32 to vector<1x1024xi32>
    %477 = arith.cmpi sge, %475, %476 : vector<1x1024xi32>
    %478 = arith.andi %473, %477 : vector<1x1024xi1>
    %c1_i32_178 = arith.constant 1 : i32
    %479 = vector.broadcast %c1_i32_178 : i32 to vector<1x1024xi32>
    %480 = arith.addi %256, %479 : vector<1x1024xi32>
    %c16_i32_179 = arith.constant 16 : i32
    %481 = vector.broadcast %c16_i32_179 : i32 to vector<1x1024xi32>
    %482 = arith.cmpi slt, %480, %481 : vector<1x1024xi32>
    %483 = arith.andi %478, %482 : vector<1x1024xi1>
    %cst_180 = arith.constant 0.000000e+00 : f32
    %484 = vector.shape_cast %483 : vector<1x1024xi1> to vector<1x1024xi1>
    %485 = vector.broadcast %484 : vector<1x1024xi1> to vector<10x1024xi1>
    %486 = vector.broadcast %cst_180 : f32 to vector<10x1024xf32>
    %487 = arith.select %485, %464, %486 : vector<10x1024xi1>, vector<10x1024xf32>
    %cst_181 = arith.constant 1.000000e+00 : f32
    %488 = vector.broadcast %cst_181 : f32 to vector<1x1024xf32>
    %489 = tpu.concatenate %282, %308, %334, %360, %383, %409, %435, %461, %487, %488 in 0 : vector<10x1024xf32>, vector<10x1024xf32>, vector<10x1024xf32>, vector<10x1024xf32>, vector<10x1024xf32>, vector<10x1024xf32>, vector<10x1024xf32>, vector<10x1024xf32>, vector<10x1024xf32>, vector<1x1024xf32> -> vector<91x1024xf32>
    %c0_182 = arith.constant 0 : index
    %c0_183 = arith.constant 0 : index
    %490 = vector.load %arg2[%c0_182, %c0_183] : memref<2x91xf32, #tpu.memory_space<vmem>>, vector<2x91xf32>
    %cst_184 = arith.constant dense<0.000000e+00> : vector<2x1024xf32>
    %491 = tpu.matmul %490, %489, %cst_184 {dimension_numbers = #tpu.dot_dimension_numbers<[1], [0], [0], [1], [0, 0, 1, 1], [], []>} : vector<2x91xf32>, vector<91x1024xf32>, vector<2x1024xf32> -> vector<2x1024xf32>
    %492 = vector.extract_strided_slice %491 {offsets = [0, 2], sizes = [2, 1022], strides = [1, 1]} : vector<2x1024xf32> to vector<2x1022xf32>
    %cst_185 = arith.constant 0.000000e+00 : f32
    %493 = vector.broadcast %cst_185 : f32 to vector<2x2xf32>
    %494 = tpu.concatenate %492, %493 in 1 : vector<2x1022xf32>, vector<2x2xf32> -> vector<2x1024xf32>
    %495 = arith.maximumf %491, %494 : vector<2x1024xf32>
    %496 = vector.extract_strided_slice %495 {offsets = [0, 64], sizes = [2, 960], strides = [1, 1]} : vector<2x1024xf32> to vector<2x960xf32>
    %cst_186 = arith.constant 0.000000e+00 : f32
    %497 = vector.broadcast %cst_186 : f32 to vector<2x64xf32>
    %498 = tpu.concatenate %496, %497 in 1 : vector<2x960xf32>, vector<2x64xf32> -> vector<2x1024xf32>
    %499 = arith.maximumf %495, %498 : vector<2x1024xf32>
    %cst_187 = arith.constant 0.000000e+00 : f32
    %500 = vector.broadcast %cst_187 : f32 to vector<2x1024xf32>
    %501 = arith.maximumf %499, %500 : vector<2x1024xf32>
    %502 = vector.extract_strided_slice %501 {offsets = [0, 0], sizes = [1, 1024], strides = [1, 1]} : vector<2x1024xf32> to vector<1x1024xf32>
    %503 = vector.extract_strided_slice %501 {offsets = [1, 0], sizes = [1, 1024], strides = [1, 1]} : vector<2x1024xf32> to vector<1x1024xf32>
    %504 = tpu.concatenate %502, %503 in 1 : vector<1x1024xf32>, vector<1x1024xf32> -> vector<1x2048xf32>
    %c0_188 = arith.constant 0 : index
    %c0_189 = arith.constant 0 : index
    %505 = vector.load %arg3[%c0_188, %c0_189] : memref<2048x32xf32, #tpu.memory_space<vmem>>, vector<2048x32xf32>
    %cst_190 = arith.constant dense<0.000000e+00> : vector<1x32xf32>
    %506 = tpu.matmul %504, %505, %cst_190 {dimension_numbers = #tpu.dot_dimension_numbers<[1], [0], [0], [1], [0, 0, 1, 1], [], []>} : vector<1x2048xf32>, vector<2048x32xf32>, vector<1x32xf32> -> vector<1x32xf32>
    %c0_191 = arith.constant 0 : index
    %c0_192 = arith.constant 0 : index
    %507 = vector.load %arg4[%c0_191, %c0_192] : memref<1x32xf32, #tpu.memory_space<vmem>>, vector<1x32xf32>
    %508 = arith.addf %506, %507 : vector<1x32xf32>
    %c0_193 = arith.constant 0 : index
    %c0_194 = arith.constant 0 : index
    %509 = vector.load %arg5[%c0_193, %c0_194] : memref<32x10xf32, #tpu.memory_space<vmem>>, vector<32x10xf32>
    %cst_195 = arith.constant dense<0.000000e+00> : vector<1x10xf32>
    %510 = tpu.matmul %508, %509, %cst_195 {dimension_numbers = #tpu.dot_dimension_numbers<[1], [0], [0], [1], [0, 0, 1, 1], [], []>} : vector<1x32xf32>, vector<32x10xf32>, vector<1x10xf32> -> vector<1x10xf32>
    %c0_196 = arith.constant 0 : index
    %c0_197 = arith.constant 0 : index
    %511 = vector.load %arg6[%c0_196, %c0_197] : memref<1x10xf32, #tpu.memory_space<vmem>>, vector<1x10xf32>
    %512 = arith.addf %510, %511 : vector<1x10xf32>
    %c0_198 = arith.constant 0 : index
    %c0_199 = arith.constant 0 : index
    %513 = vector.load %arg7[%c0_198, %c0_199] : memref<1x10xf32, #tpu.memory_space<vmem>>, vector<1x10xf32>
    tpu.vector_store %arg7[%c0_198, %c0_199], %512 {strides = array<i32>} : memref<1x10xf32, #tpu.memory_space<vmem>>, vector<1x10xf32>,
    return
  }
}

</mosaic_0001>

<llo_original>
// kernel: test_model2_forward.1
$region0: #{test_model2_forward.1}
  #allocation0 [shape = 'u32[]', space=smem, size = 0x4, offset = 0x4, fixed_abs, tag = 'smem constant byte address 0x4 - core index']
  #allocation1 [shape = 'u32[144,128]{1,0:T(1,128)}', space=vmem, size = 0x12000, scoped, tag = 'internal scratch']
  %s0 = inlined_call_operand.vmem [shape: f32[3,1024], index: 0, kind: input, shape index: {}]
  %s1 = inlined_call_operand.vmem [shape: f32[10,28], index: 1, kind: input, shape index: {}]
  %s2 = inlined_call_operand.vmem [shape: f32[2,91], index: 2, kind: input, shape index: {}]
  %s3 = inlined_call_operand.vmem [shape: f32[2048,32], index: 3, kind: input, shape index: {}]
  %s4 = inlined_call_operand.vmem [shape: f32[1,32], index: 4, kind: input, shape index: {}]
  %s5 = inlined_call_operand.vmem [shape: f32[32,10], index: 5, kind: input, shape index: {}]
  %s6 = inlined_call_operand.vmem [shape: f32[1,10], index: 6, kind: input, shape index: {}]
  %s7 = inlined_call_operand.hbm [shape: f32[1,10], index: 7, kind: output, shape index: {}]
  %s8 = sld [smem:[#allocation0]]
  $region38: #{test_model2_forward.1} parent=0
    _
  %s10 = ssub.s32 1, %s8
  %s11 = scalar_select 0, %s10, %s8
  $region1: #{test_model2_forward.1} parent=0
    #allocation2 [shape = 'u8[512]{0}', space=vmem, size = 0x400, scoped, tag = 'output window, operand 0, single buffered']
    #allocation3 [shape = 's32[1]{0}', space=sflag, size = 0x4, scoped, tag = 'scoped memory for test_model2_forward.1']
    %12 = vsyncpa [#allocation3], 0
    // Predicated region
    $region2: #{test_model2_forward.1} parent=1 // pred_check
      _
    $region3: #{test_model2_forward.1} parent=1 // pred_check_branch
      %14 = sbr.rel (0) target = $region5
    $region4: #{test_model2_forward.1} parent=1 // pred_region
      _
    $region5: #{test_model2_forward.1} parent=1 // pred_fallthru
      _
    // Predicated region
    $region6: #{test_model2_forward.1} parent=1 // pred_check
      _
    $region7: #{test_model2_forward.1} parent=1 // pred_check_branch
      %16 = sbr.rel (0) target = $region9
    $region8: #{test_model2_forward.1} parent=1 // pred_region
      _
    $region9: #{test_model2_forward.1} parent=1 // pred_fallthru
      _
    // Predicated region
    $region10: #{test_model2_forward.1} parent=1 // pred_check
      _
    $region11: #{test_model2_forward.1} parent=1 // pred_check_branch
      %18 = sbr.rel (0) target = $region13
    $region12: #{test_model2_forward.1} parent=1 // pred_region
      _
    $region13: #{test_model2_forward.1} parent=1 // pred_fallthru
      _
    // Predicated region
    $region14: #{test_model2_forward.1} parent=1 // pred_check
      _
    $region15: #{test_model2_forward.1} parent=1 // pred_check_branch
      %20 = sbr.rel (0) target = $region17
    $region16: #{test_model2_forward.1} parent=1 // pred_region
      _
    $region17: #{test_model2_forward.1} parent=1 // pred_fallthru
      _
    // Predicated region
    $region18: #{test_model2_forward.1} parent=1 // pred_check
      _
    $region19: #{test_model2_forward.1} parent=1 // pred_check_branch
      %22 = sbr.rel (0) target = $region21
    $region20: #{test_model2_forward.1} parent=1 // pred_region
      _
    $region21: #{test_model2_forward.1} parent=1 // pred_fallthru
      _
    // Predicated region
    $region22: #{test_model2_forward.1} parent=1 // pred_check
      _
    $region23: #{test_model2_forward.1} parent=1 // pred_check_branch
      %24 = sbr.rel (0) target = $region25
    $region24: #{test_model2_forward.1} parent=1 // pred_region
      _
    $region25: #{test_model2_forward.1} parent=1 // pred_fallthru
      _
    // Predicated region
    $region26: #{test_model2_forward.1} parent=1 // pred_check
      _
    $region27: #{test_model2_forward.1} parent=1 // pred_check_branch
      %26 = sbr.rel (0) target = $region29
    $region28: #{test_model2_forward.1} parent=1 // pred_region
      _
    $region29: #{test_model2_forward.1} parent=1 // pred_fallthru
      _
    %v27 = vld [vmem:[%s0] sm:$0x77]
    %v28 = vld [vmem:[%s0 + $0x8] sm:$0x77]
    %v29 = vld [vmem:[%s0 + $0x10] sm:$0x77]
    %v30 = vld [vmem:[%s0 + $0x18] sm:$0x77]
    %v31 = vlaneseq
    %v32 = vand.u32 %v31, 127
    %v33 = vadd.s32 %v32, 128
    %v34 = vadd.s32 %v32, 256
    %v35 = vadd.s32 %v32, 384
    %v36 = vadd.s32 %v32, 512
    %v37 = vadd.s32 %v32, 640
    %v38 = vadd.s32 %v32, 768
    %v39 = vadd.s32 %v32, 896
    %v40 = vshra.s32 %v32, 5
    %v41 = vshra.s32 %v33, 5
    %v42 = vshra.s32 %v34, 5
    %v43 = vshra.s32 %v35, 5
    %v44 = vshra.s32 %v36, 5
    %v45 = vshra.s32 %v37, 5
    %v46 = vshra.s32 %v38, 5
    %v47 = vshra.s32 %v39, 5
    %v48 = vand.u32 %v32, 31
    %v49 = vand.u32 %v33, 31
    %v50 = vand.u32 %v34, 31
    %v51 = vand.u32 %v35, 31
    %v52 = vand.u32 %v36, 31
    %v53 = vand.u32 %v37, 31
    %v54 = vand.u32 %v38, 31
    %v55 = vand.u32 %v39, 31
    %v60 = vcombine.high %v27, %v27
    %v61 = vcombine.high %v28, %v28
    %v62 = vcombine.high %v29, %v29
    %v63 = vcombine.high %v30, %v30
    %64 = vrot.lane.b32.xlu0 %v27, 33
    %v65 = vpop.permute.xlu0 %64
    %66 = vrot.lane.b32.xlu0 %v60, 33
    %v67 = vpop.permute.xlu0 %66
    %68 = vrot.lane.b32.xlu0 %v28, 33
    %v69 = vpop.permute.xlu0 %68
    %70 = vrot.lane.b32.xlu0 %v61, 33
    %v71 = vpop.permute.xlu0 %70
    %72 = vrot.lane.b32.xlu0 %v29, 33
    %v73 = vpop.permute.xlu0 %72
    %74 = vrot.lane.b32.xlu0 %v62, 33
    %v75 = vpop.permute.xlu0 %74
    %76 = vrot.lane.b32.xlu0 %v30, 33
    %v77 = vpop.permute.xlu0 %76
    %78 = vrot.lane.b32.xlu0 %v63, 33
    %v79 = vpop.permute.xlu0 %78
    %vm80 = vcmask 269312
    %v81 = vsel %vm80, %v65, %v67
    %v82 = vsel %vm80, %v67, %v69
    %v83 = vsel %vm80, %v69, %v71
    %v84 = vsel %vm80, %v71, %v73
    %v85 = vsel %vm80, %v73, %v75
    %v86 = vsel %vm80, %v75, %v77
    %v87 = vsel %vm80, %v77, %v79
    %v96 = vsel %vm80, 0.0, %v65
    %v97 = vadd.s32 %v40, 4294967295
    %v98 = vadd.s32 %v41, 4294967295
    %v99 = vadd.s32 %v42, 4294967295
    %v100 = vadd.s32 %v43, 4294967295
    %v101 = vadd.s32 %v44, 4294967295
    %v102 = vadd.s32 %v45, 4294967295
    %v103 = vadd.s32 %v46, 4294967295
    %v104 = vadd.s32 %v47, 4294967295
    %vm105 = vcmp.ge.s32.totalorder %v97, 0
    %vm106 = vcmp.ge.s32.totalorder %v98, 0
    %vm107 = vcmp.ge.s32.totalorder %v99, 0
    %vm108 = vcmp.ge.s32.totalorder %v100, 0
    %vm109 = vcmp.ge.s32.totalorder %v101, 0
    %vm110 = vcmp.ge.s32.totalorder %v102, 0
    %vm111 = vcmp.ge.s32.totalorder %v103, 0
    %vm112 = vcmp.ge.s32.totalorder %v104, 0
    %vm113 = vcmp.lt.s32.totalorder %v97, 32
    %vm114 = vcmp.lt.s32.totalorder %v98, 32
    %vm115 = vcmp.lt.s32.totalorder %v99, 32
    %vm116 = vcmp.lt.s32.totalorder %v100, 32
    %vm117 = vcmp.lt.s32.totalorder %v101, 32
    %vm118 = vcmp.lt.s32.totalorder %v102, 32
    %vm119 = vcmp.lt.s32.totalorder %v103, 32
    %vm120 = vcmp.lt.s32.totalorder %v104, 32
    %vm121 = vmand %vm105, %vm113
    %vm122 = vmand %vm106, %vm114
    %vm123 = vmand %vm107, %vm115
    %vm124 = vmand %vm108, %vm116
    %vm125 = vmand %vm109, %vm117
    %vm126 = vmand %vm110, %vm118
    %vm127 = vmand %vm111, %vm119
    %vm128 = vmand %vm112, %vm120
    %v129 = vadd.s32 %v48, 4294967295
    %v130 = vadd.s32 %v49, 4294967295
    %v131 = vadd.s32 %v50, 4294967295
    %v132 = vadd.s32 %v51, 4294967295
    %v133 = vadd.s32 %v52, 4294967295
    %v134 = vadd.s32 %v53, 4294967295
    %v135 = vadd.s32 %v54, 4294967295
    %v136 = vadd.s32 %v55, 4294967295
    %vm137 = vcmp.ge.s32.totalorder %v129, 0
    %vm138 = vcmp.ge.s32.totalorder %v130, 0
    %vm139 = vcmp.ge.s32.totalorder %v131, 0
    %vm140 = vcmp.ge.s32.totalorder %v132, 0
    %vm141 = vcmp.ge.s32.totalorder %v133, 0
    %vm142 = vcmp.ge.s32.totalorder %v134, 0
    %vm143 = vcmp.ge.s32.totalorder %v135, 0
    %vm144 = vcmp.ge.s32.totalorder %v136, 0
    %vm145 = vmand %vm121, %vm137
    %vm146 = vmand %vm122, %vm138
    %vm147 = vmand %vm123, %vm139
    %vm148 = vmand %vm124, %vm140
    %vm149 = vmand %vm125, %vm141
    %vm150 = vmand %vm126, %vm142
    %vm151 = vmand %vm127, %vm143
    %vm152 = vmand %vm128, %vm144
    %vm153 = vcmp.lt.s32.totalorder %v129, 32
    %vm154 = vcmp.lt.s32.totalorder %v130, 32
    %vm155 = vcmp.lt.s32.totalorder %v131, 32
    %vm156 = vcmp.lt.s32.totalorder %v132, 32
    %vm157 = vcmp.lt.s32.totalorder %v133, 32
    %vm158 = vcmp.lt.s32.totalorder %v134, 32
    %vm159 = vcmp.lt.s32.totalorder %v135, 32
    %vm160 = vcmp.lt.s32.totalorder %v136, 32
    %vm161 = vmand %vm145, %vm153
    %vm162 = vmand %vm146, %vm154
    %vm163 = vmand %vm147, %vm155
    %vm164 = vmand %vm148, %vm156
    %vm165 = vmand %vm149, %vm157
    %vm166 = vmand %vm150, %vm158
    %vm167 = vmand %vm151, %vm159
    %vm168 = vmand %vm152, %vm160
    %v169 = vsel %vm161, 1, 0
    %v170 = vsel %vm162, 1, 0
    %v171 = vsel %vm163, 1, 0
    %v172 = vsel %vm164, 1, 0
    %v173 = vsel %vm165, 1, 0
    %v174 = vsel %vm166, 1, 0
    %v175 = vsel %vm167, 1, 0
    %v176 = vsel %vm168, 1, 0
    %vm177 = vcmp.eq.s32.totalorder %v169, 1
    %vm178 = vcmp.eq.s32.totalorder %v170, 1
    %vm179 = vcmp.eq.s32.totalorder %v171, 1
    %vm180 = vcmp.eq.s32.totalorder %v172, 1
    %vm181 = vcmp.eq.s32.totalorder %v173, 1
    %vm182 = vcmp.eq.s32.totalorder %v174, 1
    %vm183 = vcmp.eq.s32.totalorder %v175, 1
    %vm184 = vcmp.eq.s32.totalorder %v176, 1
    %v185 = vsel %vm177, %v96, 0.0
    %v186 = vsel %vm178, %v81, 0.0
    %v187 = vsel %vm179, %v82, 0.0
    %v188 = vsel %vm180, %v83, 0.0
    %v189 = vsel %vm181, %v84, 0.0
    %v190 = vsel %vm182, %v85, 0.0
    %v191 = vsel %vm183, %v86, 0.0
    %v192 = vsel %vm184, %v87, 0.0
    %193 = vrot.lane.b32.xlu0 %v27, 32
    %v194 = vpop.permute.xlu0 %193
    %195 = vrot.lane.b32.xlu0 %v60, 32
    %v196 = vpop.permute.xlu0 %195
    %197 = vrot.lane.b32.xlu0 %v28, 32
    %v198 = vpop.permute.xlu0 %197
    %199 = vrot.lane.b32.xlu0 %v61, 32
    %v200 = vpop.permute.xlu0 %199
    %201 = vrot.lane.b32.xlu0 %v29, 32
    %v202 = vpop.permute.xlu0 %201
    %203 = vrot.lane.b32.xlu0 %v62, 32
    %v204 = vpop.permute.xlu0 %203
    %205 = vrot.lane.b32.xlu0 %v30, 32
    %v206 = vpop.permute.xlu0 %205
    %207 = vrot.lane.b32.xlu0 %v63, 32
    %v208 = vpop.permute.xlu0 %207
    %vm209 = vcmask 261120
    %v210 = vsel %vm209, %v194, %v196
    %v211 = vsel %vm209, %v196, %v198
    %v212 = vsel %vm209, %v198, %v200
    %v213 = vsel %vm209, %v200, %v202
    %v214 = vsel %vm209, %v202, %v204
    %v215 = vsel %vm209, %v204, %v206
    %v216 = vsel %vm209, %v206, %v208
    %v225 = vsel %vm209, 0.0, %v194
    %vm226 = vcmp.ge.s32.totalorder %v48, 0
    %vm227 = vcmp.ge.s32.totalorder %v49, 0
    %vm228 = vcmp.ge.s32.totalorder %v50, 0
    %vm229 = vcmp.ge.s32.totalorder %v51, 0
    %vm230 = vcmp.ge.s32.totalorder %v52, 0
    %vm231 = vcmp.ge.s32.totalorder %v53, 0
    %vm232 = vcmp.ge.s32.totalorder %v54, 0
    %vm233 = vcmp.ge.s32.totalorder %v55, 0
    %vm234 = vmand %vm121, %vm226
    %vm235 = vmand %vm122, %vm227
    %vm236 = vmand %vm123, %vm228
    %vm237 = vmand %vm124, %vm229
    %vm238 = vmand %vm125, %vm230
    %vm239 = vmand %vm126, %vm231
    %vm240 = vmand %vm127, %vm232
    %vm241 = vmand %vm128, %vm233
    %vm242 = vcmp.lt.s32.totalorder %v48, 32
    %vm243 = vcmp.lt.s32.totalorder %v49, 32
    %vm244 = vcmp.lt.s32.totalorder %v50, 32
    %vm245 = vcmp.lt.s32.totalorder %v51, 32
    %vm246 = vcmp.lt.s32.totalorder %v52, 32
    %vm247 = vcmp.lt.s32.totalorder %v53, 32
    %vm248 = vcmp.lt.s32.totalorder %v54, 32
    %vm249 = vcmp.lt.s32.totalorder %v55, 32
    %vm250 = vmand %vm234, %vm242
    %vm251 = vmand %vm235, %vm243
    %vm252 = vmand %vm236, %vm244
    %vm253 = vmand %vm237, %vm245
    %vm254 = vmand %vm238, %vm246
    %vm255 = vmand %vm239, %vm247
    %vm256 = vmand %vm240, %vm248
    %vm257 = vmand %vm241, %vm249
    %v258 = vsel %vm250, 1, 0
    %v259 = vsel %vm251, 1, 0
    %v260 = vsel %vm252, 1, 0
    %v261 = vsel %vm253, 1, 0
    %v262 = vsel %vm254, 1, 0
    %v263 = vsel %vm255, 1, 0
    %v264 = vsel %vm256, 1, 0
    %v265 = vsel %vm257, 1, 0
    %vm266 = vcmp.eq.s32.totalorder %v258, 1
    %vm267 = vcmp.eq.s32.totalorder %v259, 1
    %vm268 = vcmp.eq.s32.totalorder %v260, 1
    %vm269 = vcmp.eq.s32.totalorder %v261, 1
    %vm270 = vcmp.eq.s32.totalorder %v262, 1
    %vm271 = vcmp.eq.s32.totalorder %v263, 1
    %vm272 = vcmp.eq.s32.totalorder %v264, 1
    %vm273 = vcmp.eq.s32.totalorder %v265, 1
    %v274 = vsel %vm266, %v225, 0.0
    %v275 = vsel %vm267, %v210, 0.0
    %v276 = vsel %vm268, %v211, 0.0
    %v277 = vsel %vm269, %v212, 0.0
    %v278 = vsel %vm270, %v213, 0.0
    %v279 = vsel %vm271, %v214, 0.0
    %v280 = vsel %vm272, %v215, 0.0
    %v281 = vsel %vm273, %v216, 0.0
    %282 = vrot.lane.b32.xlu0 %v27, 31
    %v283 = vpop.permute.xlu0 %282
    %284 = vrot.lane.b32.xlu0 %v60, 31
    %v285 = vpop.permute.xlu0 %284
    %286 = vrot.lane.b32.xlu0 %v28, 31
    %v287 = vpop.permute.xlu0 %286
    %288 = vrot.lane.b32.xlu0 %v61, 31
    %v289 = vpop.permute.xlu0 %288
    %290 = vrot.lane.b32.xlu0 %v29, 31
    %v291 = vpop.permute.xlu0 %290
    %292 = vrot.lane.b32.xlu0 %v62, 31
    %v293 = vpop.permute.xlu0 %292
    %294 = vrot.lane.b32.xlu0 %v30, 31
    %v295 = vpop.permute.xlu0 %294
    %296 = vrot.lane.b32.xlu0 %v63, 31
    %v297 = vpop.permute.xlu0 %296
    %vm298 = vcmask 252928
    %v299 = vsel %vm298, %v283, %v285
    %v300 = vsel %vm298, %v285, %v287
    %v301 = vsel %vm298, %v287, %v289
    %v302 = vsel %vm298, %v289, %v291
    %v303 = vsel %vm298, %v291, %v293
    %v304 = vsel %vm298, %v293, %v295
    %v305 = vsel %vm298, %v295, %v297
    %v314 = vsel %vm298, 0.0, %v283
    %v315 = vadd.s32 %v48, 1
    %v316 = vadd.s32 %v49, 1
    %v317 = vadd.s32 %v50, 1
    %v318 = vadd.s32 %v51, 1
    %v319 = vadd.s32 %v52, 1
    %v320 = vadd.s32 %v53, 1
    %v321 = vadd.s32 %v54, 1
    %v322 = vadd.s32 %v55, 1
    %vm323 = vcmp.ge.s32.totalorder %v315, 0
    %vm324 = vcmp.ge.s32.totalorder %v316, 0
    %vm325 = vcmp.ge.s32.totalorder %v317, 0
    %vm326 = vcmp.ge.s32.totalorder %v318, 0
    %vm327 = vcmp.ge.s32.totalorder %v319, 0
    %vm328 = vcmp.ge.s32.totalorder %v320, 0
    %vm329 = vcmp.ge.s32.totalorder %v321, 0
    %vm330 = vcmp.ge.s32.totalorder %v322, 0
    %vm331 = vmand %vm121, %vm323
    %vm332 = vmand %vm122, %vm324
    %vm333 = vmand %vm123, %vm325
    %vm334 = vmand %vm124, %vm326
    %vm335 = vmand %vm125, %vm327
    %vm336 = vmand %vm126, %vm328
    %vm337 = vmand %vm127, %vm329
    %vm338 = vmand %vm128, %vm330
    %vm339 = vcmp.lt.s32.totalorder %v315, 32
    %vm340 = vcmp.lt.s32.totalorder %v316, 32
    %vm341 = vcmp.lt.s32.totalorder %v317, 32
    %vm342 = vcmp.lt.s32.totalorder %v318, 32
    %vm343 = vcmp.lt.s32.totalorder %v319, 32
    %vm344 = vcmp.lt.s32.totalorder %v320, 32
    %vm345 = vcmp.lt.s32.totalorder %v321, 32
    %vm346 = vcmp.lt.s32.totalorder %v322, 32
    %vm347 = vmand %vm331, %vm339
    %vm348 = vmand %vm332, %vm340
    %vm349 = vmand %vm333, %vm341
    %vm350 = vmand %vm334, %vm342
    %vm351 = vmand %vm335, %vm343
    %vm352 = vmand %vm336, %vm344
    %vm353 = vmand %vm337, %vm345
    %vm354 = vmand %vm338, %vm346
    %v355 = vsel %vm347, 1, 0
    %v356 = vsel %vm348, 1, 0
    %v357 = vsel %vm349, 1, 0
    %v358 = vsel %vm350, 1, 0
    %v359 = vsel %vm351, 1, 0
    %v360 = vsel %vm352, 1, 0
    %v361 = vsel %vm353, 1, 0
    %v362 = vsel %vm354, 1, 0
    %vm363 = vcmp.eq.s32.totalorder %v355, 1
    %vm364 = vcmp.eq.s32.totalorder %v356, 1
    %vm365 = vcmp.eq.s32.totalorder %v357, 1
    %vm366 = vcmp.eq.s32.totalorder %v358, 1
    %vm367 = vcmp.eq.s32.totalorder %v359, 1
    %vm368 = vcmp.eq.s32.totalorder %v360, 1
    %vm369 = vcmp.eq.s32.totalorder %v361, 1
    %vm370 = vcmp.eq.s32.totalorder %v362, 1
    %v371 = vsel %vm363, %v314, 0.0
    %v372 = vsel %vm364, %v299, 0.0
    %v373 = vsel %vm365, %v300, 0.0
    %v374 = vsel %vm366, %v301, 0.0
    %v375 = vsel %vm367, %v302, 0.0
    %v376 = vsel %vm368, %v303, 0.0
    %v377 = vsel %vm369, %v304, 0.0
    %v378 = vsel %vm370, %v305, 0.0
    %379 = vrot.lane.b32.xlu0 %v27, 1
    %v380 = vpop.permute.xlu0 %379
    %381 = vrot.lane.b32.xlu0 %v60, 1
    %v382 = vpop.permute.xlu0 %381
    %383 = vrot.lane.b32.xlu0 %v28, 1
    %v384 = vpop.permute.xlu0 %383
    %385 = vrot.lane.b32.xlu0 %v61, 1
    %v386 = vpop.permute.xlu0 %385
    %387 = vrot.lane.b32.xlu0 %v29, 1
    %v388 = vpop.permute.xlu0 %387
    %389 = vrot.lane.b32.xlu0 %v62, 1
    %v390 = vpop.permute.xlu0 %389
    %391 = vrot.lane.b32.xlu0 %v30, 1
    %v392 = vpop.permute.xlu0 %391
    %393 = vrot.lane.b32.xlu0 %v63, 1
    %v394 = vpop.permute.xlu0 %393
    %vm395 = vcmask 7168
    %v396 = vsel %vm395, %v380, %v382
    %v397 = vsel %vm395, %v382, %v384
    %v398 = vsel %vm395, %v384, %v386
    %v399 = vsel %vm395, %v386, %v388
    %v400 = vsel %vm395, %v388, %v390
    %v401 = vsel %vm395, %v390, %v392
    %v402 = vsel %vm395, %v392, %v394
    %v411 = vsel %vm395, 0.0, %v380
    %vm412 = vcmp.ge.s32.totalorder %v40, 0
    %vm413 = vcmp.ge.s32.totalorder %v41, 0
    %vm414 = vcmp.ge.s32.totalorder %v42, 0
    %vm415 = vcmp.ge.s32.totalorder %v43, 0
    %vm416 = vcmp.ge.s32.totalorder %v44, 0
    %vm417 = vcmp.ge.s32.totalorder %v45, 0
    %vm418 = vcmp.ge.s32.totalorder %v46, 0
    %vm419 = vcmp.ge.s32.totalorder %v47, 0
    %vm420 = vcmp.lt.s32.totalorder %v40, 32
    %vm421 = vcmp.lt.s32.totalorder %v41, 32
    %vm422 = vcmp.lt.s32.totalorder %v42, 32
    %vm423 = vcmp.lt.s32.totalorder %v43, 32
    %vm424 = vcmp.lt.s32.totalorder %v44, 32
    %vm425 = vcmp.lt.s32.totalorder %v45, 32
    %vm426 = vcmp.lt.s32.totalorder %v46, 32
    %vm427 = vcmp.lt.s32.totalorder %v47, 32
    %vm428 = vmand %vm412, %vm420
    %vm429 = vmand %vm413, %vm421
    %vm430 = vmand %vm414, %vm422
    %vm431 = vmand %vm415, %vm423
    %vm432 = vmand %vm416, %vm424
    %vm433 = vmand %vm417, %vm425
    %vm434 = vmand %vm418, %vm426
    %vm435 = vmand %vm419, %vm427
    %vm436 = vmand %vm428, %vm137
    %vm437 = vmand %vm429, %vm138
    %vm438 = vmand %vm430, %vm139
    %vm439 = vmand %vm431, %vm140
    %vm440 = vmand %vm432, %vm141
    %vm441 = vmand %vm433, %vm142
    %vm442 = vmand %vm434, %vm143
    %vm443 = vmand %vm435, %vm144
    %vm444 = vmand %vm436, %vm153
    %vm445 = vmand %vm437, %vm154
    %vm446 = vmand %vm438, %vm155
    %vm447 = vmand %vm439, %vm156
    %vm448 = vmand %vm440, %vm157
    %vm449 = vmand %vm441, %vm158
    %vm450 = vmand %vm442, %vm159
    %vm451 = vmand %vm443, %vm160
    %v452 = vsel %vm444, 1, 0
    %v453 = vsel %vm445, 1, 0
    %v454 = vsel %vm446, 1, 0
    %v455 = vsel %vm447, 1, 0
    %v456 = vsel %vm448, 1, 0
    %v457 = vsel %vm449, 1, 0
    %v458 = vsel %vm450, 1, 0
    %v459 = vsel %vm451, 1, 0
    %vm460 = vcmp.eq.s32.totalorder %v452, 1
    %vm461 = vcmp.eq.s32.totalorder %v453, 1
    %vm462 = vcmp.eq.s32.totalorder %v454, 1
    %vm463 = vcmp.eq.s32.totalorder %v455, 1
    %vm464 = vcmp.eq.s32.totalorder %v456, 1
    %vm465 = vcmp.eq.s32.totalorder %v457, 1
    %vm466 = vcmp.eq.s32.totalorder %v458, 1
    %vm467 = vcmp.eq.s32.totalorder %v459, 1
    %v468 = vsel %vm460, %v411, 0.0
    %v469 = vsel %vm461, %v396, 0.0
    %v470 = vsel %vm462, %v397, 0.0
    %v471 = vsel %vm463, %v398, 0.0
    %v472 = vsel %vm464, %v399, 0.0
    %v473 = vsel %vm465, %v400, 0.0
    %v474 = vsel %vm466, %v401, 0.0
    %v475 = vsel %vm467, %v402, 0.0
    %vm476 = vmand %vm428, %vm226
    %vm477 = vmand %vm429, %vm227
    %vm478 = vmand %vm430, %vm228
    %vm479 = vmand %vm431, %vm229
    %vm480 = vmand %vm432, %vm230
    %vm481 = vmand %vm433, %vm231
    %vm482 = vmand %vm434, %vm232
    %vm483 = vmand %vm435, %vm233
    %vm484 = vmand %vm476, %vm242
    %vm485 = vmand %vm477, %vm243
    %vm486 = vmand %vm478, %vm244
    %vm487 = vmand %vm479, %vm245
    %vm488 = vmand %vm480, %vm246
    %vm489 = vmand %vm481, %vm247
    %vm490 = vmand %vm482, %vm248
    %vm491 = vmand %vm483, %vm249
    %v492 = vsel %vm484, 1, 0
    %v493 = vsel %vm485, 1, 0
    %v494 = vsel %vm486, 1, 0
    %v495 = vsel %vm487, 1, 0
    %v496 = vsel %vm488, 1, 0
    %v497 = vsel %vm489, 1, 0
    %v498 = vsel %vm490, 1, 0
    %v499 = vsel %vm491, 1, 0
    %vm500 = vcmp.eq.s32.totalorder %v492, 1
    %vm501 = vcmp.eq.s32.totalorder %v493, 1
    %vm502 = vcmp.eq.s32.totalorder %v494, 1
    %vm503 = vcmp.eq.s32.totalorder %v495, 1
    %vm504 = vcmp.eq.s32.totalorder %v496, 1
    %vm505 = vcmp.eq.s32.totalorder %v497, 1
    %vm506 = vcmp.eq.s32.totalorder %v498, 1
    %vm507 = vcmp.eq.s32.totalorder %v499, 1
    %v512 = vsel %vm500, %v27, 0.0
    %v513 = vsel %vm501, %v60, 0.0
    %v514 = vsel %vm502, %v28, 0.0
    %v515 = vsel %vm503, %v61, 0.0
    %v516 = vsel %vm504, %v29, 0.0
    %v517 = vsel %vm505, %v62, 0.0
    %v518 = vsel %vm506, %v30, 0.0
    %v519 = vsel %vm507, %v63, 0.0
    %520 = vrot.lane.b32.xlu0 %v27, 127
    %v521 = vpop.permute.xlu0 %520
    %522 = vrot.lane.b32.xlu0 %v60, 127
    %v523 = vpop.permute.xlu0 %522
    %524 = vrot.lane.b32.xlu0 %v28, 127
    %v525 = vpop.permute.xlu0 %524
    %526 = vrot.lane.b32.xlu0 %v61, 127
    %v527 = vpop.permute.xlu0 %526
    %528 = vrot.lane.b32.xlu0 %v29, 127
    %v529 = vpop.permute.xlu0 %528
    %530 = vrot.lane.b32.xlu0 %v62, 127
    %v531 = vpop.permute.xlu0 %530
    %532 = vrot.lane.b32.xlu0 %v30, 127
    %v533 = vpop.permute.xlu0 %532
    %534 = vrot.lane.b32.xlu0 %v63, 127
    %v535 = vpop.permute.xlu0 %534
    %vm536 = vcmask 1039360
    %v537 = vsel %vm536, %v521, %v523
    %v538 = vsel %vm536, %v523, %v525
    %v539 = vsel %vm536, %v525, %v527
    %v540 = vsel %vm536, %v527, %v529
    %v541 = vsel %vm536, %v529, %v531
    %v542 = vsel %vm536, %v531, %v533
    %v543 = vsel %vm536, %v533, %v535
    %v552 = vsel %vm536, %v535, 0.0
    %vm553 = vmand %vm428, %vm323
    %vm554 = vmand %vm429, %vm324
    %vm555 = vmand %vm430, %vm325
    %vm556 = vmand %vm431, %vm326
    %vm557 = vmand %vm432, %vm327
    %vm558 = vmand %vm433, %vm328
    %vm559 = vmand %vm434, %vm329
    %vm560 = vmand %vm435, %vm330
    %vm561 = vmand %vm553, %vm339
    %vm562 = vmand %vm554, %vm340
    %vm563 = vmand %vm555, %vm341
    %vm564 = vmand %vm556, %vm342
    %vm565 = vmand %vm557, %vm343
    %vm566 = vmand %vm558, %vm344
    %vm567 = vmand %vm559, %vm345
    %vm568 = vmand %vm560, %vm346
    %v569 = vsel %vm561, 1, 0
    %v570 = vsel %vm562, 1, 0
    %v571 = vsel %vm563, 1, 0
    %v572 = vsel %vm564, 1, 0
    %v573 = vsel %vm565, 1, 0
    %v574 = vsel %vm566, 1, 0
    %v575 = vsel %vm567, 1, 0
    %v576 = vsel %vm568, 1, 0
    %vm577 = vcmp.eq.s32.totalorder %v569, 1
    %vm578 = vcmp.eq.s32.totalorder %v570, 1
    %vm579 = vcmp.eq.s32.totalorder %v571, 1
    %vm580 = vcmp.eq.s32.totalorder %v572, 1
    %vm581 = vcmp.eq.s32.totalorder %v573, 1
    %vm582 = vcmp.eq.s32.totalorder %v574, 1
    %vm583 = vcmp.eq.s32.totalorder %v575, 1
    %vm584 = vcmp.eq.s32.totalorder %v576, 1
    %v585 = vsel %vm577, %v537, 0.0
    %v586 = vsel %vm578, %v538, 0.0
    %v587 = vsel %vm579, %v539, 0.0
    %v588 = vsel %vm580, %v540, 0.0
    %v589 = vsel %vm581, %v541, 0.0
    %v590 = vsel %vm582, %v542, 0.0
    %v591 = vsel %vm583, %v543, 0.0
    %v592 = vsel %vm584, %v552, 0.0
    %593 = vrot.lane.b32.xlu0 %v27, 97
    %v594 = vpop.permute.xlu0 %593
    %595 = vrot.lane.b32.xlu0 %v60, 97
    %v596 = vpop.permute.xlu0 %595
    %597 = vrot.lane.b32.xlu0 %v28, 97
    %v598 = vpop.permute.xlu0 %597
    %599 = vrot.lane.b32.xlu0 %v61, 97
    %v600 = vpop.permute.xlu0 %599
    %601 = vrot.lane.b32.xlu0 %v29, 97
    %v602 = vpop.permute.xlu0 %601
    %603 = vrot.lane.b32.xlu0 %v62, 97
    %v604 = vpop.permute.xlu0 %603
    %605 = vrot.lane.b32.xlu0 %v30, 97
    %v606 = vpop.permute.xlu0 %605
    %607 = vrot.lane.b32.xlu0 %v63, 97
    %v608 = vpop.permute.xlu0 %607
    %vm609 = vcmask 793600
    %v610 = vsel %vm609, %v594, %v596
    %v611 = vsel %vm609, %v596, %v598
    %v612 = vsel %vm609, %v598, %v600
    %v613 = vsel %vm609, %v600, %v602
    %v614 = vsel %vm609, %v602, %v604
    %v615 = vsel %vm609, %v604, %v606
    %v616 = vsel %vm609, %v606, %v608
    %v625 = vsel %vm609, %v608, 0.0
    %v626 = vadd.s32 %v40, 1
    %v627 = vadd.s32 %v41, 1
    %v628 = vadd.s32 %v42, 1
    %v629 = vadd.s32 %v43, 1
    %v630 = vadd.s32 %v44, 1
    %v631 = vadd.s32 %v45, 1
    %v632 = vadd.s32 %v46, 1
    %v633 = vadd.s32 %v47, 1
    %vm634 = vcmp.ge.s32.totalorder %v626, 0
    %vm635 = vcmp.ge.s32.totalorder %v627, 0
    %vm636 = vcmp.ge.s32.totalorder %v628, 0
    %vm637 = vcmp.ge.s32.totalorder %v629, 0
    %vm638 = vcmp.ge.s32.totalorder %v630, 0
    %vm639 = vcmp.ge.s32.totalorder %v631, 0
    %vm640 = vcmp.ge.s32.totalorder %v632, 0
    %vm641 = vcmp.ge.s32.totalorder %v633, 0
    %vm642 = vcmp.lt.s32.totalorder %v626, 32
    %vm643 = vcmp.lt.s32.totalorder %v627, 32
    %vm644 = vcmp.lt.s32.totalorder %v628, 32
    %vm645 = vcmp.lt.s32.totalorder %v629, 32
    %vm646 = vcmp.lt.s32.totalorder %v630, 32
    %vm647 = vcmp.lt.s32.totalorder %v631, 32
    %vm648 = vcmp.lt.s32.totalorder %v632, 32
    %vm649 = vcmp.lt.s32.totalorder %v633, 32
    %vm650 = vmand %vm634, %vm642
    %vm651 = vmand %vm635, %vm643
    %vm652 = vmand %vm636, %vm644
    %vm653 = vmand %vm637, %vm645
    %vm654 = vmand %vm638, %vm646
    %vm655 = vmand %vm639, %vm647
    %vm656 = vmand %vm640, %vm648
    %vm657 = vmand %vm641, %vm649
    %vm658 = vmand %vm650, %vm137
    %vm659 = vmand %vm651, %vm138
    %vm660 = vmand %vm652, %vm139
    %vm661 = vmand %vm653, %vm140
    %vm662 = vmand %vm654, %vm141
    %vm663 = vmand %vm655, %vm142
    %vm664 = vmand %vm656, %vm143
    %vm665 = vmand %vm657, %vm144
    %vm666 = vmand %vm658, %vm153
    %vm667 = vmand %vm659, %vm154
    %vm668 = vmand %vm660, %vm155
    %vm669 = vmand %vm661, %vm156
    %vm670 = vmand %vm662, %vm157
    %vm671 = vmand %vm663, %vm158
    %vm672 = vmand %vm664, %vm159
    %vm673 = vmand %vm665, %vm160
    %v674 = vsel %vm666, 1, 0
    %v675 = vsel %vm667, 1, 0
    %v676 = vsel %vm668, 1, 0
    %v677 = vsel %vm669, 1, 0
    %v678 = vsel %vm670, 1, 0
    %v679 = vsel %vm671, 1, 0
    %v680 = vsel %vm672, 1, 0
    %v681 = vsel %vm673, 1, 0
    %vm682 = vcmp.eq.s32.totalorder %v674, 1
    %vm683 = vcmp.eq.s32.totalorder %v675, 1
    %vm684 = vcmp.eq.s32.totalorder %v676, 1
    %vm685 = vcmp.eq.s32.totalorder %v677, 1
    %vm686 = vcmp.eq.s32.totalorder %v678, 1
    %vm687 = vcmp.eq.s32.totalorder %v679, 1
    %vm688 = vcmp.eq.s32.totalorder %v680, 1
    %vm689 = vcmp.eq.s32.totalorder %v681, 1
    %v690 = vsel %vm682, %v610, 0.0
    %v691 = vsel %vm683, %v611, 0.0
    %v692 = vsel %vm684, %v612, 0.0
    %v693 = vsel %vm685, %v613, 0.0
    %v694 = vsel %vm686, %v614, 0.0
    %v695 = vsel %vm687, %v615, 0.0
    %v696 = vsel %vm688, %v616, 0.0
    %v697 = vsel %vm689, %v625, 0.0
    %698 = vrot.lane.b32.xlu0 %v27, 96
    %v699 = vpop.permute.xlu0 %698
    %700 = vrot.lane.b32.xlu0 %v60, 96
    %v701 = vpop.permute.xlu0 %700
    %702 = vrot.lane.b32.xlu0 %v28, 96
    %v703 = vpop.permute.xlu0 %702
    %704 = vrot.lane.b32.xlu0 %v61, 96
    %v705 = vpop.permute.xlu0 %704
    %706 = vrot.lane.b32.xlu0 %v29, 96
    %v707 = vpop.permute.xlu0 %706
    %708 = vrot.lane.b32.xlu0 %v62, 96
    %v709 = vpop.permute.xlu0 %708
    %710 = vrot.lane.b32.xlu0 %v30, 96
    %v711 = vpop.permute.xlu0 %710
    %712 = vrot.lane.b32.xlu0 %v63, 96
    %v713 = vpop.permute.xlu0 %712
    %vm714 = vcmask 785408
    %v715 = vsel %vm714, %v699, %v701
    %v716 = vsel %vm714, %v701, %v703
    %v717 = vsel %vm714, %v703, %v705
    %v718 = vsel %vm714, %v705, %v707
    %v719 = vsel %vm714, %v707, %v709
    %v720 = vsel %vm714, %v709, %v711
    %v721 = vsel %vm714, %v711, %v713
    %v730 = vsel %vm714, %v713, 0.0
    %vm731 = vmand %vm650, %vm226
    %vm732 = vmand %vm651, %vm227
    %vm733 = vmand %vm652, %vm228
    %vm734 = vmand %vm653, %vm229
    %vm735 = vmand %vm654, %vm230
    %vm736 = vmand %vm655, %vm231
    %vm737 = vmand %vm656, %vm232
    %vm738 = vmand %vm657, %vm233
    %vm739 = vmand %vm731, %vm242
    %vm740 = vmand %vm732, %vm243
    %vm741 = vmand %vm733, %vm244
    %vm742 = vmand %vm734, %vm245
    %vm743 = vmand %vm735, %vm246
    %vm744 = vmand %vm736, %vm247
    %vm745 = vmand %vm737, %vm248
    %vm746 = vmand %vm738, %vm249
    %v747 = vsel %vm739, 1, 0
    %v748 = vsel %vm740, 1, 0
    %v749 = vsel %vm741, 1, 0
    %v750 = vsel %vm742, 1, 0
    %v751 = vsel %vm743, 1, 0
    %v752 = vsel %vm744, 1, 0
    %v753 = vsel %vm745, 1, 0
    %v754 = vsel %vm746, 1, 0
    %vm755 = vcmp.eq.s32.totalorder %v747, 1
    %vm756 = vcmp.eq.s32.totalorder %v748, 1
    %vm757 = vcmp.eq.s32.totalorder %v749, 1
    %vm758 = vcmp.eq.s32.totalorder %v750, 1
    %vm759 = vcmp.eq.s32.totalorder %v751, 1
    %vm760 = vcmp.eq.s32.totalorder %v752, 1
    %vm761 = vcmp.eq.s32.totalorder %v753, 1
    %vm762 = vcmp.eq.s32.totalorder %v754, 1
    %v763 = vsel %vm755, %v715, 0.0
    %v764 = vsel %vm756, %v716, 0.0
    %v765 = vsel %vm757, %v717, 0.0
    %v766 = vsel %vm758, %v718, 0.0
    %v767 = vsel %vm759, %v719, 0.0
    %v768 = vsel %vm760, %v720, 0.0
    %v769 = vsel %vm761, %v721, 0.0
    %v770 = vsel %vm762, %v730, 0.0
    %771 = vrot.lane.b32.xlu0 %v27, 95
    %v772 = vpop.permute.xlu0 %771
    %773 = vrot.lane.b32.xlu0 %v60, 95
    %v774 = vpop.permute.xlu0 %773
    %775 = vrot.lane.b32.xlu0 %v28, 95
    %v776 = vpop.permute.xlu0 %775
    %777 = vrot.lane.b32.xlu0 %v61, 95
    %v778 = vpop.permute.xlu0 %777
    %779 = vrot.lane.b32.xlu0 %v29, 95
    %v780 = vpop.permute.xlu0 %779
    %781 = vrot.lane.b32.xlu0 %v62, 95
    %v782 = vpop.permute.xlu0 %781
    %783 = vrot.lane.b32.xlu0 %v30, 95
    %v784 = vpop.permute.xlu0 %783
    %785 = vrot.lane.b32.xlu0 %v63, 95
    %v786 = vpop.permute.xlu0 %785
    %vm787 = vcmask 777216
    %v788 = vsel %vm787, %v772, %v774
    %v789 = vsel %vm787, %v774, %v776
    %v790 = vsel %vm787, %v776, %v778
    %v791 = vsel %vm787, %v778, %v780
    %v792 = vsel %vm787, %v780, %v782
    %v793 = vsel %vm787, %v782, %v784
    %v794 = vsel %vm787, %v784, %v786
    %v803 = vsel %vm787, %v786, 0.0
    %vm804 = vmand %vm650, %vm323
    %vm805 = vmand %vm651, %vm324
    %vm806 = vmand %vm652, %vm325
    %vm807 = vmand %vm653, %vm326
    %vm808 = vmand %vm654, %vm327
    %vm809 = vmand %vm655, %vm328
    %vm810 = vmand %vm656, %vm329
    %vm811 = vmand %vm657, %vm330
    %vm812 = vmand %vm804, %vm339
    %vm813 = vmand %vm805, %vm340
    %vm814 = vmand %vm806, %vm341
    %vm815 = vmand %vm807, %vm342
    %vm816 = vmand %vm808, %vm343
    %vm817 = vmand %vm809, %vm344
    %vm818 = vmand %vm810, %vm345
    %vm819 = vmand %vm811, %vm346
    %v820 = vsel %vm812, 1, 0
    %v821 = vsel %vm813, 1, 0
    %v822 = vsel %vm814, 1, 0
    %v823 = vsel %vm815, 1, 0
    %v824 = vsel %vm816, 1, 0
    %v825 = vsel %vm817, 1, 0
    %v826 = vsel %vm818, 1, 0
    %v827 = vsel %vm819, 1, 0
    %vm828 = vcmp.eq.s32.totalorder %v820, 1
    %vm829 = vcmp.eq.s32.totalorder %v821, 1
    %vm830 = vcmp.eq.s32.totalorder %v822, 1
    %vm831 = vcmp.eq.s32.totalorder %v823, 1
    %vm832 = vcmp.eq.s32.totalorder %v824, 1
    %vm833 = vcmp.eq.s32.totalorder %v825, 1
    %vm834 = vcmp.eq.s32.totalorder %v826, 1
    %vm835 = vcmp.eq.s32.totalorder %v827, 1
    %v836 = vsel %vm828, %v788, 0.0
    %v837 = vsel %vm829, %v789, 0.0
    %v838 = vsel %vm830, %v790, 0.0
    %v839 = vsel %vm831, %v791, 0.0
    %v840 = vsel %vm832, %v792, 0.0
    %v841 = vsel %vm833, %v793, 0.0
    %v842 = vsel %vm834, %v794, 0.0
    %v843 = vsel %vm835, %v803, 0.0
    %v852 = vrot.slane %v274, 5
    %v853 = vrot.slane %v275, 5
    %v854 = vrot.slane %v276, 5
    %v855 = vrot.slane %v277, 5
    %v856 = vrot.slane %v278, 5
    %v857 = vrot.slane %v279, 5
    %v858 = vrot.slane %v280, 5
    %v859 = vrot.slane %v281, 5
    %v876 = vrot.slane %v371, 2
    %v877 = vrot.slane %v372, 2
    %v878 = vrot.slane %v373, 2
    %v879 = vrot.slane %v374, 2
    %v880 = vrot.slane %v375, 2
    %v881 = vrot.slane %v376, 2
    %v882 = vrot.slane %v377, 2
    %v883 = vrot.slane %v378, 2
    %v900 = vrot.slane %v468, 7
    %v901 = vrot.slane %v469, 7
    %v902 = vrot.slane %v470, 7
    %v903 = vrot.slane %v471, 7
    %v904 = vrot.slane %v472, 7
    %v905 = vrot.slane %v473, 7
    %v906 = vrot.slane %v474, 7
    %v907 = vrot.slane %v475, 7
    %v924 = vrot.slane %v512, 4
    %v925 = vrot.slane %v513, 4
    %v926 = vrot.slane %v514, 4
    %v927 = vrot.slane %v515, 4
    %v928 = vrot.slane %v516, 4
    %v929 = vrot.slane %v517, 4
    %v930 = vrot.slane %v518, 4
    %v931 = vrot.slane %v519, 4
    %v948 = vrot.slane %v585, 1
    %v949 = vrot.slane %v586, 1
    %v950 = vrot.slane %v587, 1
    %v951 = vrot.slane %v588, 1
    %v952 = vrot.slane %v589, 1
    %v953 = vrot.slane %v590, 1
    %v954 = vrot.slane %v591, 1
    %v955 = vrot.slane %v592, 1
    %v972 = vrot.slane %v690, 6
    %v973 = vrot.slane %v691, 6
    %v974 = vrot.slane %v692, 6
    %v975 = vrot.slane %v693, 6
    %v976 = vrot.slane %v694, 6
    %v977 = vrot.slane %v695, 6
    %v978 = vrot.slane %v696, 6
    %v979 = vrot.slane %v697, 6
    %v996 = vrot.slane %v763, 3
    %v997 = vrot.slane %v764, 3
    %v998 = vrot.slane %v765, 3
    %v999 = vrot.slane %v766, 3
    %v1000 = vrot.slane %v767, 3
    %v1001 = vrot.slane %v768, 3
    %v1002 = vrot.slane %v769, 3
    %v1003 = vrot.slane %v770, 3
    %vm1012 = vcmask 1042432
    %v1013 = vsel %vm1012, %v185, %v852
    %v1014 = vsel %vm1012, %v186, %v853
    %v1015 = vsel %vm1012, %v187, %v854
    %v1016 = vsel %vm1012, %v188, %v855
    %v1017 = vsel %vm1012, %v189, %v856
    %v1018 = vsel %vm1012, %v190, %v857
    %v1019 = vsel %vm1012, %v191, %v858
    %v1020 = vsel %vm1012, %v192, %v859
    %vm1021 = vcmask 1045504
    %v1022 = vsel %vm1021, %v1013, %v876
    %v1023 = vsel %vm1021, %v1014, %v877
    %v1024 = vsel %vm1021, %v1015, %v878
    %v1025 = vsel %vm1021, %v1016, %v879
    %v1026 = vsel %vm1021, %v1017, %v880
    %v1027 = vsel %vm1021, %v1018, %v881
    %v1028 = vsel %vm1021, %v1019, %v882
    %v1029 = vsel %vm1021, %v1020, %v883
    %vm1030 = vcmask 1040384
    %v1031 = vsel %vm1030, %v876, %v900
    %v1032 = vsel %vm1030, %v877, %v901
    %v1033 = vsel %vm1030, %v878, %v902
    %v1034 = vsel %vm1030, %v879, %v903
    %v1035 = vsel %vm1030, %v880, %v904
    %v1036 = vsel %vm1030, %v881, %v905
    %v1037 = vsel %vm1030, %v882, %v906
    %v1038 = vsel %vm1030, %v883, %v907
    %vm1039 = vcmask 1043456
    %v1040 = vsel %vm1039, %v1031, %v924
    %v1041 = vsel %vm1039, %v1032, %v925
    %v1042 = vsel %vm1039, %v1033, %v926
    %v1043 = vsel %vm1039, %v1034, %v927
    %v1044 = vsel %vm1039, %v1035, %v928
    %v1045 = vsel %vm1039, %v1036, %v929
    %v1046 = vsel %vm1039, %v1037, %v930
    %v1047 = vsel %vm1039, %v1038, %v931
    %vm1048 = vcmask 1046528
    %v1049 = vsel %vm1048, %v1040, %v948
    %v1050 = vsel %vm1048, %v1041, %v949
    %v1051 = vsel %vm1048, %v1042, %v950
    %v1052 = vsel %vm1048, %v1043, %v951
    %v1053 = vsel %vm1048, %v1044, %v952
    %v1054 = vsel %vm1048, %v1045, %v953
    %v1055 = vsel %vm1048, %v1046, %v954
    %v1056 = vsel %vm1048, %v1047, %v955
    %vm1057 = vcmask 1041408
    %v1058 = vsel %vm1057, %v948, %v972
    %v1059 = vsel %vm1057, %v949, %v973
    %v1060 = vsel %vm1057, %v950, %v974
    %v1061 = vsel %vm1057, %v951, %v975
    %v1062 = vsel %vm1057, %v952, %v976
    %v1063 = vsel %vm1057, %v953, %v977
    %v1064 = vsel %vm1057, %v954, %v978
    %v1065 = vsel %vm1057, %v955, %v979
    %vm1066 = vcmask 1044480
    %v1067 = vsel %vm1066, %v1058, %v996
    %v1068 = vsel %vm1066, %v1059, %v997
    %v1069 = vsel %vm1066, %v1060, %v998
    %v1070 = vsel %vm1066, %v1061, %v999
    %v1071 = vsel %vm1066, %v1062, %v1000
    %v1072 = vsel %vm1066, %v1063, %v1001
    %v1073 = vsel %vm1066, %v1064, %v1002
    %v1074 = vsel %vm1066, %v1065, %v1003
    %v1075 = vsel %vm1012, %v836, 1.0
    %v1076 = vsel %vm1012, %v837, 1.0
    %v1077 = vsel %vm1012, %v838, 1.0
    %v1078 = vsel %vm1012, %v839, 1.0
    %v1079 = vsel %vm1012, %v840, 1.0
    %v1080 = vsel %vm1012, %v841, 1.0
    %v1081 = vsel %vm1012, %v842, 1.0
    %v1082 = vsel %vm1012, %v843, 1.0
    %v1083 = vld [vmem:[%s1] sm:$0xff]
    %v1084 = vld [vmem:[%s1 + $0x8] sm:$0x3]
    %vm1085 = vcmask 228352
    %v1087 = vsel %vm1085, %v1083, 0
    %v1090 = vsel %vm1085, %v1084, 0
    %v1093 = vsel %vm1039, %v1075, 0
    %v1096 = vsel %vm1039, %v1076, 0
    %v1099 = vsel %vm1039, %v1077, 0
    %v1102 = vsel %vm1039, %v1078, 0
    %v1105 = vsel %vm1039, %v1079, 0
    %v1108 = vsel %vm1039, %v1080, 0
    %v1111 = vsel %vm1039, %v1081, 0
    %v1114 = vsel %vm1039, %v1082, 0
    %1116 = vmatprep.subr.mxu0 0.0
    %1117 = vmatpush1.msra.mxu0 0.0
    %1118 = vmatprep.subr.mxu0 0.0
    %1119 = vmatpush1.msra.mxu0 0.0
    %1120 = vmatprep.subr.mxu0 0.0
    %1121 = vmatpush1.msra.mxu0 0.0
    %1122 = vmatprep.subr.mxu0 0.0
    %1123 = vmatpush1.msra.mxu0 0.0
    %1124 = vmatprep.subr.mxu0 0.0
    %1125 = vmatpush1.msra.mxu0 0.0
    %1126 = vmatprep.subr.mxu0 0.0
    %1127 = vmatpush1.msra.mxu0 0.0
    %1128 = vmatprep.subr.mxu0 0.0
    %1129 = vmatpush1.msra.mxu0 0.0
    %1130 = vmatprep.subr.mxu0 0.0
    %1131 = vmatpush1.msra.mxu0 0.0
    %1132 = vmatprep.subr.mxu0 0.0
    %1133 = vmatpush1.msra.mxu0 0.0
    %1134 = vmatprep.subr.mxu0 0.0
    %1135 = vmatpush1.msra.mxu0 0.0
    %1136 = vmatprep.subr.mxu0 0.0
    %1137 = vmatpush1.msra.mxu0 0.0
    %1138 = vmatprep.subr.mxu0 0.0
    %1139 = vmatpush1.msra.mxu0 0.0
    %1140 = vmatprep.subr.mxu0 %v1096
    %1141 = vmatpush1.msra.mxu0 %v1093
    %1142 = vmatprep.subr.mxu0 %v1068
    %1143 = vmatpush1.msra.mxu0 %v1067
    %1144 = vmatprep.subr.mxu0 %v1050
    %1145 = vmatpush1.msra.mxu0 %v1049
    %1146 = vmatprep.subr.mxu0 %v1023
    %1147 = vmatpush1.msra.mxu0 %v1022
    %1148 = vmatprep.subr.mxu0 0.0
    %1149 = vmatpush2.msra.mxu0 0.0
    %1150 = vmatprep.subr.mxu0 0.0
    %1151 = vmatpush2.msra.mxu0 0.0
    %1152 = vmatprep.subr.mxu0 0.0
    %1153 = vmatpush2.msra.mxu0 0.0
    %1154 = vmatprep.subr.mxu0 0.0
    %1155 = vmatpush2.msra.mxu0 0.0
    %1156 = vmatprep.subr.mxu0 0.0
    %1157 = vmatpush2.msra.mxu0 0.0
    %1158 = vmatprep.subr.mxu0 0.0
    %1159 = vmatpush2.msra.mxu0 0.0
    %1160 = vmatprep.subr.mxu0 0.0
    %1161 = vmatpush2.msra.mxu0 0.0
    %1162 = vmatprep.subr.mxu0 0.0
    %1163 = vmatpush2.msra.mxu0 0.0
    %1164 = vmatprep.subr.mxu0 0.0
    %1165 = vmatpush2.msra.mxu0 0.0
    %1166 = vmatprep.subr.mxu0 0.0
    %1167 = vmatpush2.msra.mxu0 0.0
    %1168 = vmatprep.subr.mxu0 0.0
    %1169 = vmatpush2.msra.mxu0 0.0
    %1170 = vmatprep.subr.mxu0 0.0
    %1171 = vmatpush2.msra.mxu0 0.0
    %1172 = vmatprep.subr.mxu0 0.0
    %1173 = vmatpush2.msra.mxu0 0.0
    %1174 = vmatprep.subr.mxu0 0.0
    %1175 = vmatpush2.msra.mxu0 0.0
    %1176 = vmatprep.subr.mxu0 0.0
    %1177 = vmatpush2.msra.mxu0 0.0
    %1178 = vmatprep.subr.mxu0 0.0
    %1179 = vmatpush2.msra.mxu0 0.0
    %1180 = vmatprep.mubr.f32.mxu0 0.0
    %1181 = vmatmul.mubr.f32.gmra.mxu0 %v1087
    %v1182 = vpop.f32.mrf.mxu0
    %v1183 = vadd.f32 0.0, %v1182
    %v1184 = vpop.f32.mrf.mxu0
    %v1185 = vadd.f32 0.0, %v1184
    %1186 = vmatprep.mubr.f32.mxu0 0.0
    %1187 = vmatmul.mubr.f32.gmra.mxu0 %v1090
    %v1188 = vpop.f32.mrf.mxu0
    %v1189 = vadd.f32 0.0, %v1188
    %v1190 = vpop.f32.mrf.mxu0
    %v1191 = vadd.f32 0.0, %v1190
    %1192 = vdwg.mxu0
    %1193 = vmatprep.subr.mxu0 0.0
    %1194 = vmatpush1.msra.mxu0 0.0
    %1195 = vmatprep.subr.mxu0 0.0
    %1196 = vmatpush1.msra.mxu0 0.0
    %1197 = vmatprep.subr.mxu0 0.0
    %1198 = vmatpush1.msra.mxu0 0.0
    %1199 = vmatprep.subr.mxu0 0.0
    %1200 = vmatpush1.msra.mxu0 0.0
    %1201 = vmatprep.subr.mxu0 0.0
    %1202 = vmatpush1.msra.mxu0 0.0
    %1203 = vmatprep.subr.mxu0 0.0
    %1204 = vmatpush1.msra.mxu0 0.0
    %1205 = vmatprep.subr.mxu0 0.0
    %1206 = vmatpush1.msra.mxu0 0.0
    %1207 = vmatprep.subr.mxu0 0.0
    %1208 = vmatpush1.msra.mxu0 0.0
    %1209 = vmatprep.subr.mxu0 0.0
    %1210 = vmatpush1.msra.mxu0 0.0
    %1211 = vmatprep.subr.mxu0 0.0
    %1212 = vmatpush1.msra.mxu0 0.0
    %1213 = vmatprep.subr.mxu0 0.0
    %1214 = vmatpush1.msra.mxu0 0.0
    %1215 = vmatprep.subr.mxu0 0.0
    %1216 = vmatpush1.msra.mxu0 0.0
    %1217 = vmatprep.subr.mxu0 %v1102
    %1218 = vmatpush1.msra.mxu0 %v1099
    %1219 = vmatprep.subr.mxu0 %v1070
    %1220 = vmatpush1.msra.mxu0 %v1069
    %1221 = vmatprep.subr.mxu0 %v1052
    %1222 = vmatpush1.msra.mxu0 %v1051
    %1223 = vmatprep.subr.mxu0 %v1025
    %1224 = vmatpush1.msra.mxu0 %v1024
    %1225 = vmatprep.subr.mxu0 0.0
    %1226 = vmatpush2.msra.mxu0 0.0
    %1227 = vmatprep.subr.mxu0 0.0
    %1228 = vmatpush2.msra.mxu0 0.0
    %1229 = vmatprep.subr.mxu0 0.0
    %1230 = vmatpush2.msra.mxu0 0.0
    %1231 = vmatprep.subr.mxu0 0.0
    %1232 = vmatpush2.msra.mxu0 0.0
    %1233 = vmatprep.subr.mxu0 0.0
    %1234 = vmatpush2.msra.mxu0 0.0
    %1235 = vmatprep.subr.mxu0 0.0
    %1236 = vmatpush2.msra.mxu0 0.0
    %1237 = vmatprep.subr.mxu0 0.0
    %1238 = vmatpush2.msra.mxu0 0.0
    %1239 = vmatprep.subr.mxu0 0.0
    %1240 = vmatpush2.msra.mxu0 0.0
    %1241 = vmatprep.subr.mxu0 0.0
    %1242 = vmatpush2.msra.mxu0 0.0
    %1243 = vmatprep.subr.mxu0 0.0
    %1244 = vmatpush2.msra.mxu0 0.0
    %1245 = vmatprep.subr.mxu0 0.0
    %1246 = vmatpush2.msra.mxu0 0.0
    %1247 = vmatprep.subr.mxu0 0.0
    %1248 = vmatpush2.msra.mxu0 0.0
    %1249 = vmatprep.subr.mxu0 0.0
    %1250 = vmatpush2.msra.mxu0 0.0
    %1251 = vmatprep.subr.mxu0 0.0
    %1252 = vmatpush2.msra.mxu0 0.0
    %1253 = vmatprep.subr.mxu0 0.0
    %1254 = vmatpush2.msra.mxu0 0.0
    %1255 = vmatprep.subr.mxu0 0.0
    %1256 = vmatpush2.msra.mxu0 0.0
    %1257 = vmatprep.mubr.f32.mxu0 0.0
    %1258 = vmatmul.mubr.f32.gmra.mxu0 %v1087
    %v1259 = vpop.f32.mrf.mxu0
    %v1260 = vadd.f32 0.0, %v1259
    %v1261 = vpop.f32.mrf.mxu0
    %v1262 = vadd.f32 0.0, %v1261
    %1263 = vmatprep.mubr.f32.mxu0 0.0
    %1264 = vmatmul.mubr.f32.gmra.mxu0 %v1090
    %v1265 = vpop.f32.mrf.mxu0
    %v1266 = vadd.f32 0.0, %v1265
    %v1267 = vpop.f32.mrf.mxu0
    %v1268 = vadd.f32 0.0, %v1267
    %1269 = vdwg.mxu0
    %1270 = vmatprep.subr.mxu0 0.0
    %1271 = vmatpush1.msra.mxu0 0.0
    %1272 = vmatprep.subr.mxu0 0.0
    %1273 = vmatpush1.msra.mxu0 0.0
    %1274 = vmatprep.subr.mxu0 0.0
    %1275 = vmatpush1.msra.mxu0 0.0
    %1276 = vmatprep.subr.mxu0 0.0
    %1277 = vmatpush1.msra.mxu0 0.0
    %1278 = vmatprep.subr.mxu0 0.0
    %1279 = vmatpush1.msra.mxu0 0.0
    %1280 = vmatprep.subr.mxu0 0.0
    %1281 = vmatpush1.msra.mxu0 0.0
    %1282 = vmatprep.subr.mxu0 0.0
    %1283 = vmatpush1.msra.mxu0 0.0
    %1284 = vmatprep.subr.mxu0 0.0
    %1285 = vmatpush1.msra.mxu0 0.0
    %1286 = vmatprep.subr.mxu0 0.0
    %1287 = vmatpush1.msra.mxu0 0.0
    %1288 = vmatprep.subr.mxu0 0.0
    %1289 = vmatpush1.msra.mxu0 0.0
    %1290 = vmatprep.subr.mxu0 0.0
    %1291 = vmatpush1.msra.mxu0 0.0
    %1292 = vmatprep.subr.mxu0 0.0
    %1293 = vmatpush1.msra.mxu0 0.0
    %1294 = vmatprep.subr.mxu0 %v1108
    %1295 = vmatpush1.msra.mxu0 %v1105
    %1296 = vmatprep.subr.mxu0 %v1072
    %1297 = vmatpush1.msra.mxu0 %v1071
    %1298 = vmatprep.subr.mxu0 %v1054
    %1299 = vmatpush1.msra.mxu0 %v1053
    %1300 = vmatprep.subr.mxu0 %v1027
    %1301 = vmatpush1.msra.mxu0 %v1026
    %1302 = vmatprep.subr.mxu0 0.0
    %1303 = vmatpush2.msra.mxu0 0.0
    %1304 = vmatprep.subr.mxu0 0.0
    %1305 = vmatpush2.msra.mxu0 0.0
    %1306 = vmatprep.subr.mxu0 0.0
    %1307 = vmatpush2.msra.mxu0 0.0
    %1308 = vmatprep.subr.mxu0 0.0
    %1309 = vmatpush2.msra.mxu0 0.0
    %1310 = vmatprep.subr.mxu0 0.0
    %1311 = vmatpush2.msra.mxu0 0.0
    %1312 = vmatprep.subr.mxu0 0.0
    %1313 = vmatpush2.msra.mxu0 0.0
    %1314 = vmatprep.subr.mxu0 0.0
    %1315 = vmatpush2.msra.mxu0 0.0
    %1316 = vmatprep.subr.mxu0 0.0
    %1317 = vmatpush2.msra.mxu0 0.0
    %1318 = vmatprep.subr.mxu0 0.0
    %1319 = vmatpush2.msra.mxu0 0.0
    %1320 = vmatprep.subr.mxu0 0.0
    %1321 = vmatpush2.msra.mxu0 0.0
    %1322 = vmatprep.subr.mxu0 0.0
    %1323 = vmatpush2.msra.mxu0 0.0
    %1324 = vmatprep.subr.mxu0 0.0
    %1325 = vmatpush2.msra.mxu0 0.0
    %1326 = vmatprep.subr.mxu0 0.0
    %1327 = vmatpush2.msra.mxu0 0.0
    %1328 = vmatprep.subr.mxu0 0.0
    %1329 = vmatpush2.msra.mxu0 0.0
    %1330 = vmatprep.subr.mxu0 0.0
    %1331 = vmatpush2.msra.mxu0 0.0
    %1332 = vmatprep.subr.mxu0 0.0
    %1333 = vmatpush2.msra.mxu0 0.0
    %1334 = vmatprep.mubr.f32.mxu0 0.0
    %1335 = vmatmul.mubr.f32.gmra.mxu0 %v1087
    %v1336 = vpop.f32.mrf.mxu0
    %v1337 = vadd.f32 0.0, %v1336
    %v1338 = vpop.f32.mrf.mxu0
    %v1339 = vadd.f32 0.0, %v1338
    %1340 = vmatprep.mubr.f32.mxu0 0.0
    %1341 = vmatmul.mubr.f32.gmra.mxu0 %v1090
    %v1342 = vpop.f32.mrf.mxu0
    %v1343 = vadd.f32 0.0, %v1342
    %v1344 = vpop.f32.mrf.mxu0
    %v1345 = vadd.f32 0.0, %v1344
    %1346 = vdwg.mxu0
    %1347 = vmatprep.subr.mxu0 0.0
    %1348 = vmatpush1.msra.mxu0 0.0
    %1349 = vmatprep.subr.mxu0 0.0
    %1350 = vmatpush1.msra.mxu0 0.0
    %1351 = vmatprep.subr.mxu0 0.0
    %1352 = vmatpush1.msra.mxu0 0.0
    %1353 = vmatprep.subr.mxu0 0.0
    %1354 = vmatpush1.msra.mxu0 0.0
    %1355 = vmatprep.subr.mxu0 0.0
    %1356 = vmatpush1.msra.mxu0 0.0
    %1357 = vmatprep.subr.mxu0 0.0
    %1358 = vmatpush1.msra.mxu0 0.0
    %1359 = vmatprep.subr.mxu0 0.0
    %1360 = vmatpush1.msra.mxu0 0.0
    %1361 = vmatprep.subr.mxu0 0.0
    %1362 = vmatpush1.msra.mxu0 0.0
    %1363 = vmatprep.subr.mxu0 0.0
    %1364 = vmatpush1.msra.mxu0 0.0
    %1365 = vmatprep.subr.mxu0 0.0
    %1366 = vmatpush1.msra.mxu0 0.0
    %1367 = vmatprep.subr.mxu0 0.0
    %1368 = vmatpush1.msra.mxu0 0.0
    %1369 = vmatprep.subr.mxu0 0.0
    %1370 = vmatpush1.msra.mxu0 0.0
    %1371 = vmatprep.subr.mxu0 %v1114
    %1372 = vmatpush1.msra.mxu0 %v1111
    %1373 = vmatprep.subr.mxu0 %v1074
    %1374 = vmatpush1.msra.mxu0 %v1073
    %1375 = vmatprep.subr.mxu0 %v1056
    %1376 = vmatpush1.msra.mxu0 %v1055
    %1377 = vmatprep.subr.mxu0 %v1029
    %1378 = vmatpush1.msra.mxu0 %v1028
    %1379 = vmatprep.subr.mxu0 0.0
    %1380 = vmatpush2.msra.mxu0 0.0
    %1381 = vmatprep.subr.mxu0 0.0
    %1382 = vmatpush2.msra.mxu0 0.0
    %1383 = vmatprep.subr.mxu0 0.0
    %1384 = vmatpush2.msra.mxu0 0.0
    %1385 = vmatprep.subr.mxu0 0.0
    %1386 = vmatpush2.msra.mxu0 0.0
    %1387 = vmatprep.subr.mxu0 0.0
    %1388 = vmatpush2.msra.mxu0 0.0
    %1389 = vmatprep.subr.mxu0 0.0
    %1390 = vmatpush2.msra.mxu0 0.0
    %1391 = vmatprep.subr.mxu0 0.0
    %1392 = vmatpush2.msra.mxu0 0.0
    %1393 = vmatprep.subr.mxu0 0.0
    %1394 = vmatpush2.msra.mxu0 0.0
    %1395 = vmatprep.subr.mxu0 0.0
    %1396 = vmatpush2.msra.mxu0 0.0
    %1397 = vmatprep.subr.mxu0 0.0
    %1398 = vmatpush2.msra.mxu0 0.0
    %1399 = vmatprep.subr.mxu0 0.0
    %1400 = vmatpush2.msra.mxu0 0.0
    %1401 = vmatprep.subr.mxu0 0.0
    %1402 = vmatpush2.msra.mxu0 0.0
    %1403 = vmatprep.subr.mxu0 0.0
    %1404 = vmatpush2.msra.mxu0 0.0
    %1405 = vmatprep.subr.mxu0 0.0
    %1406 = vmatpush2.msra.mxu0 0.0
    %1407 = vmatprep.subr.mxu0 0.0
    %1408 = vmatpush2.msra.mxu0 0.0
    %1409 = vmatprep.subr.mxu0 0.0
    %1410 = vmatpush2.msra.mxu0 0.0
    %1411 = vmatprep.mubr.f32.mxu0 0.0
    %1412 = vmatmul.mubr.f32.gmra.mxu0 %v1087
    %v1413 = vpop.f32.mrf.mxu0
    %v1414 = vadd.f32 0.0, %v1413
    %v1415 = vpop.f32.mrf.mxu0
    %v1416 = vadd.f32 0.0, %v1415
    %1417 = vmatprep.mubr.f32.mxu0 0.0
    %1418 = vmatmul.mubr.f32.gmra.mxu0 %v1090
    %v1419 = vpop.f32.mrf.mxu0
    %v1420 = vadd.f32 0.0, %v1419
    %v1421 = vpop.f32.mrf.mxu0
    %v1422 = vadd.f32 0.0, %v1421
    %1423 = vdwg.mxu0
    %1440 = vrot.lane.b32.xlu0 %v1183, 127
    %v1441 = vpop.permute.xlu0 %1440
    %1442 = vrot.lane.b32.xlu0 %v1185, 127
    %v1443 = vpop.permute.xlu0 %1442
    %1444 = vrot.lane.b32.xlu0 %v1260, 127
    %v1445 = vpop.permute.xlu0 %1444
    %1446 = vrot.lane.b32.xlu0 %v1262, 127
    %v1447 = vpop.permute.xlu0 %1446
    %1448 = vrot.lane.b32.xlu0 %v1337, 127
    %v1449 = vpop.permute.xlu0 %1448
    %1450 = vrot.lane.b32.xlu0 %v1339, 127
    %v1451 = vpop.permute.xlu0 %1450
    %1452 = vrot.lane.b32.xlu0 %v1414, 127
    %v1453 = vpop.permute.xlu0 %1452
    %1454 = vrot.lane.b32.xlu0 %v1416, 127
    %v1455 = vpop.permute.xlu0 %1454
    %1456 = vrot.lane.b32.xlu0 %v1189, 127
    %v1457 = vpop.permute.xlu0 %1456
    %1458 = vrot.lane.b32.xlu0 %v1191, 127
    %v1459 = vpop.permute.xlu0 %1458
    %1460 = vrot.lane.b32.xlu0 %v1266, 127
    %v1461 = vpop.permute.xlu0 %1460
    %1462 = vrot.lane.b32.xlu0 %v1268, 127
    %v1463 = vpop.permute.xlu0 %1462
    %1464 = vrot.lane.b32.xlu0 %v1343, 127
    %v1465 = vpop.permute.xlu0 %1464
    %1466 = vrot.lane.b32.xlu0 %v1345, 127
    %v1467 = vpop.permute.xlu0 %1466
    %1468 = vrot.lane.b32.xlu0 %v1420, 127
    %v1469 = vpop.permute.xlu0 %1468
    %1470 = vrot.lane.b32.xlu0 %v1422, 127
    %v1471 = vpop.permute.xlu0 %1470
    %v1472 = vsel %vm536, %v1441, %v1443
    %v1473 = vsel %vm536, %v1443, %v1445
    %v1474 = vsel %vm536, %v1445, %v1447
    %v1475 = vsel %vm536, %v1447, %v1449
    %v1476 = vsel %vm536, %v1449, %v1451
    %v1477 = vsel %vm536, %v1451, %v1453
    %v1478 = vsel %vm536, %v1453, %v1455
    %v1479 = vsel %vm536, %v1457, %v1459
    %v1480 = vsel %vm536, %v1459, %v1461
    %v1481 = vsel %vm536, %v1461, %v1463
    %v1482 = vsel %vm536, %v1463, %v1465
    %v1483 = vsel %vm536, %v1465, %v1467
    %v1484 = vsel %vm536, %v1467, %v1469
    %v1485 = vsel %vm536, %v1469, %v1471
    %v1502 = vsel %vm536, %v1455, 0.0
    %v1503 = vsel %vm536, %v1471, 0.0
    %v1504 = vmax.f32 %v1183, %v1472
    %v1505 = vmax.f32 %v1185, %v1473
    %v1506 = vmax.f32 %v1260, %v1474
    %v1507 = vmax.f32 %v1262, %v1475
    %v1508 = vmax.f32 %v1337, %v1476
    %v1509 = vmax.f32 %v1339, %v1477
    %v1510 = vmax.f32 %v1414, %v1478
    %v1511 = vmax.f32 %v1416, %v1502
    %v1512 = vmax.f32 %v1189, %v1479
    %v1513 = vmax.f32 %v1191, %v1480
    %v1514 = vmax.f32 %v1266, %v1481
    %v1515 = vmax.f32 %v1268, %v1482
    %v1516 = vmax.f32 %v1343, %v1483
    %v1517 = vmax.f32 %v1345, %v1484
    %v1518 = vmax.f32 %v1420, %v1485
    %v1519 = vmax.f32 %v1422, %v1503
    %1536 = vrot.lane.b32.xlu0 %v1504, 96
    %v1537 = vpop.permute.xlu0 %1536
    %1538 = vrot.lane.b32.xlu0 %v1505, 96
    %v1539 = vpop.permute.xlu0 %1538
    %1540 = vrot.lane.b32.xlu0 %v1506, 96
    %v1541 = vpop.permute.xlu0 %1540
    %1542 = vrot.lane.b32.xlu0 %v1507, 96
    %v1543 = vpop.permute.xlu0 %1542
    %1544 = vrot.lane.b32.xlu0 %v1508, 96
    %v1545 = vpop.permute.xlu0 %1544
    %1546 = vrot.lane.b32.xlu0 %v1509, 96
    %v1547 = vpop.permute.xlu0 %1546
    %1548 = vrot.lane.b32.xlu0 %v1510, 96
    %v1549 = vpop.permute.xlu0 %1548
    %1550 = vrot.lane.b32.xlu0 %v1511, 96
    %v1551 = vpop.permute.xlu0 %1550
    %1552 = vrot.lane.b32.xlu0 %v1512, 96
    %v1553 = vpop.permute.xlu0 %1552
    %1554 = vrot.lane.b32.xlu0 %v1513, 96
    %v1555 = vpop.permute.xlu0 %1554
    %1556 = vrot.lane.b32.xlu0 %v1514, 96
    %v1557 = vpop.permute.xlu0 %1556
    %1558 = vrot.lane.b32.xlu0 %v1515, 96
    %v1559 = vpop.permute.xlu0 %1558
    %1560 = vrot.lane.b32.xlu0 %v1516, 96
    %v1561 = vpop.permute.xlu0 %1560
    %1562 = vrot.lane.b32.xlu0 %v1517, 96
    %v1563 = vpop.permute.xlu0 %1562
    %1564 = vrot.lane.b32.xlu0 %v1518, 96
    %v1565 = vpop.permute.xlu0 %1564
    %1566 = vrot.lane.b32.xlu0 %v1519, 96
    %v1567 = vpop.permute.xlu0 %1566
    %v1568 = vsel %vm714, %v1537, %v1539
    %v1569 = vsel %vm714, %v1539, %v1541
    %v1570 = vsel %vm714, %v1541, %v1543
    %v1571 = vsel %vm714, %v1543, %v1545
    %v1572 = vsel %vm714, %v1545, %v1547
    %v1573 = vsel %vm714, %v1547, %v1549
    %v1574 = vsel %vm714, %v1549, %v1551
    %v1575 = vsel %vm714, %v1553, %v1555
    %v1576 = vsel %vm714, %v1555, %v1557
    %v1577 = vsel %vm714, %v1557, %v1559
    %v1578 = vsel %vm714, %v1559, %v1561
    %v1579 = vsel %vm714, %v1561, %v1563
    %v1580 = vsel %vm714, %v1563, %v1565
    %v1581 = vsel %vm714, %v1565, %v1567
    %v1598 = vsel %vm714, %v1551, 0.0
    %v1599 = vsel %vm714, %v1567, 0.0
    %v1600 = vmax.f32 %v1504, %v1568
    %v1601 = vmax.f32 %v1505, %v1569
    %v1602 = vmax.f32 %v1506, %v1570
    %v1603 = vmax.f32 %v1507, %v1571
    %v1604 = vmax.f32 %v1508, %v1572
    %v1605 = vmax.f32 %v1509, %v1573
    %v1606 = vmax.f32 %v1510, %v1574
    %v1607 = vmax.f32 %v1511, %v1598
    %v1608 = vmax.f32 %v1512, %v1575
    %v1609 = vmax.f32 %v1513, %v1576
    %v1610 = vmax.f32 %v1514, %v1577
    %v1611 = vmax.f32 %v1515, %v1578
    %v1612 = vmax.f32 %v1516, %v1579
    %v1613 = vmax.f32 %v1517, %v1580
    %v1614 = vmax.f32 %v1518, %v1581
    %v1615 = vmax.f32 %v1519, %v1599
    %v1616 = vmax.f32 %v1600, 0.0
    %v1617 = vmax.f32 %v1601, 0.0
    %v1618 = vmax.f32 %v1602, 0.0
    %v1619 = vmax.f32 %v1603, 0.0
    %v1620 = vmax.f32 %v1604, 0.0
    %v1621 = vmax.f32 %v1605, 0.0
    %v1622 = vmax.f32 %v1606, 0.0
    %v1623 = vmax.f32 %v1607, 0.0
    %v1624 = vmax.f32 %v1608, 0.0
    %v1625 = vmax.f32 %v1609, 0.0
    %v1626 = vmax.f32 %v1610, 0.0
    %v1627 = vmax.f32 %v1611, 0.0
    %v1628 = vmax.f32 %v1612, 0.0
    %v1629 = vmax.f32 %v1613, 0.0
    %v1630 = vmax.f32 %v1614, 0.0
    %v1631 = vmax.f32 %v1615, 0.0
    %v1632 = vshra.s32 %v32, 6
    %v1633 = vshra.s32 %v33, 6
    %v1634 = vshra.s32 %v34, 6
    %v1635 = vshra.s32 %v35, 6
    %v1636 = vshra.s32 %v36, 6
    %v1637 = vshra.s32 %v37, 6
    %v1638 = vshra.s32 %v38, 6
    %v1639 = vshra.s32 %v39, 6
    %v1640 = vshra.s32 %v32, 1
    %v1641 = vshra.s32 %v33, 1
    %v1642 = vshra.s32 %v34, 1
    %v1643 = vshra.s32 %v35, 1
    %v1644 = vshra.s32 %v36, 1
    %v1645 = vshra.s32 %v37, 1
    %v1646 = vshra.s32 %v38, 1
    %v1647 = vshra.s32 %v39, 1
    %v1648 = vand.u32 %v1640, 15
    %v1649 = vand.u32 %v1641, 15
    %v1650 = vand.u32 %v1642, 15
    %v1651 = vand.u32 %v1643, 15
    %v1652 = vand.u32 %v1644, 15
    %v1653 = vand.u32 %v1645, 15
    %v1654 = vand.u32 %v1646, 15
    %v1655 = vand.u32 %v1647, 15
    %1672 = vrot.lane.b32.xlu0 %v1616, 66
    %v1673 = vpop.permute.xlu0 %1672
    %1674 = vrot.lane.b32.xlu0 %v1617, 66
    %v1675 = vpop.permute.xlu0 %1674
    %1676 = vrot.lane.b32.xlu0 %v1618, 66
    %v1677 = vpop.permute.xlu0 %1676
    %1678 = vrot.lane.b32.xlu0 %v1619, 66
    %v1679 = vpop.permute.xlu0 %1678
    %1680 = vrot.lane.b32.xlu0 %v1620, 66
    %v1681 = vpop.permute.xlu0 %1680
    %1682 = vrot.lane.b32.xlu0 %v1621, 66
    %v1683 = vpop.permute.xlu0 %1682
    %1684 = vrot.lane.b32.xlu0 %v1622, 66
    %v1685 = vpop.permute.xlu0 %1684
    %1686 = vrot.lane.b32.xlu0 %v1623, 66
    %v1687 = vpop.permute.xlu0 %1686
    %1688 = vrot.lane.b32.xlu0 %v1624, 66
    %v1689 = vpop.permute.xlu0 %1688
    %1690 = vrot.lane.b32.xlu0 %v1625, 66
    %v1691 = vpop.permute.xlu0 %1690
    %1692 = vrot.lane.b32.xlu0 %v1626, 66
    %v1693 = vpop.permute.xlu0 %1692
    %1694 = vrot.lane.b32.xlu0 %v1627, 66
    %v1695 = vpop.permute.xlu0 %1694
    %1696 = vrot.lane.b32.xlu0 %v1628, 66
    %v1697 = vpop.permute.xlu0 %1696
    %1698 = vrot.lane.b32.xlu0 %v1629, 66
    %v1699 = vpop.permute.xlu0 %1698
    %1700 = vrot.lane.b32.xlu0 %v1630, 66
    %v1701 = vpop.permute.xlu0 %1700
    %1702 = vrot.lane.b32.xlu0 %v1631, 66
    %v1703 = vpop.permute.xlu0 %1702
    %vm1704 = vcmask 539648
    %v1705 = vsel %vm1704, %v1673, %v1675
    %v1706 = vsel %vm1704, %v1675, %v1677
    %v1707 = vsel %vm1704, %v1677, %v1679
    %v1708 = vsel %vm1704, %v1679, %v1681
    %v1709 = vsel %vm1704, %v1681, %v1683
    %v1710 = vsel %vm1704, %v1683, %v1685
    %v1711 = vsel %vm1704, %v1685, %v1687
    %v1712 = vsel %vm1704, %v1689, %v1691
    %v1713 = vsel %vm1704, %v1691, %v1693
    %v1714 = vsel %vm1704, %v1693, %v1695
    %v1715 = vsel %vm1704, %v1695, %v1697
    %v1716 = vsel %vm1704, %v1697, %v1699
    %v1717 = vsel %vm1704, %v1699, %v1701
    %v1718 = vsel %vm1704, %v1701, %v1703
    %v1735 = vsel %vm1704, 0.0, %v1673
    %v1736 = vsel %vm1704, 0.0, %v1689
    %v1737 = vadd.s32 %v1632, 4294967295
    %v1738 = vadd.s32 %v1633, 4294967295
    %v1739 = vadd.s32 %v1634, 4294967295
    %v1740 = vadd.s32 %v1635, 4294967295
    %v1741 = vadd.s32 %v1636, 4294967295
    %v1742 = vadd.s32 %v1637, 4294967295
    %v1743 = vadd.s32 %v1638, 4294967295
    %v1744 = vadd.s32 %v1639, 4294967295
    %vm1745 = vcmp.ge.s32.totalorder %v1737, 0
    %vm1746 = vcmp.ge.s32.totalorder %v1738, 0
    %vm1747 = vcmp.ge.s32.totalorder %v1739, 0
    %vm1748 = vcmp.ge.s32.totalorder %v1740, 0
    %vm1749 = vcmp.ge.s32.totalorder %v1741, 0
    %vm1750 = vcmp.ge.s32.totalorder %v1742, 0
    %vm1751 = vcmp.ge.s32.totalorder %v1743, 0
    %vm1752 = vcmp.ge.s32.totalorder %v1744, 0
    %vm1753 = vcmp.lt.s32.totalorder %v1737, 16
    %vm1754 = vcmp.lt.s32.totalorder %v1738, 16
    %vm1755 = vcmp.lt.s32.totalorder %v1739, 16
    %vm1756 = vcmp.lt.s32.totalorder %v1740, 16
    %vm1757 = vcmp.lt.s32.totalorder %v1741, 16
    %vm1758 = vcmp.lt.s32.totalorder %v1742, 16
    %vm1759 = vcmp.lt.s32.totalorder %v1743, 16
    %vm1760 = vcmp.lt.s32.totalorder %v1744, 16
    %vm1761 = vmand %vm1745, %vm1753
    %vm1762 = vmand %vm1746, %vm1754
    %vm1763 = vmand %vm1747, %vm1755
    %vm1764 = vmand %vm1748, %vm1756
    %vm1765 = vmand %vm1749, %vm1757
    %vm1766 = vmand %vm1750, %vm1758
    %vm1767 = vmand %vm1751, %vm1759
    %vm1768 = vmand %vm1752, %vm1760
    %v1769 = vadd.s32 %v1648, 4294967295
    %v1770 = vadd.s32 %v1649, 4294967295
    %v1771 = vadd.s32 %v1650, 4294967295
    %v1772 = vadd.s32 %v1651, 4294967295
    %v1773 = vadd.s32 %v1652, 4294967295
    %v1774 = vadd.s32 %v1653, 4294967295
    %v1775 = vadd.s32 %v1654, 4294967295
    %v1776 = vadd.s32 %v1655, 4294967295
    %vm1777 = vcmp.ge.s32.totalorder %v1769, 0
    %vm1778 = vcmp.ge.s32.totalorder %v1770, 0
    %vm1779 = vcmp.ge.s32.totalorder %v1771, 0
    %vm1780 = vcmp.ge.s32.totalorder %v1772, 0
    %vm1781 = vcmp.ge.s32.totalorder %v1773, 0
    %vm1782 = vcmp.ge.s32.totalorder %v1774, 0
    %vm1783 = vcmp.ge.s32.totalorder %v1775, 0
    %vm1784 = vcmp.ge.s32.totalorder %v1776, 0
    %vm1785 = vmand %vm1761, %vm1777
    %vm1786 = vmand %vm1762, %vm1778
    %vm1787 = vmand %vm1763, %vm1779
    %vm1788 = vmand %vm1764, %vm1780
    %vm1789 = vmand %vm1765, %vm1781
    %vm1790 = vmand %vm1766, %vm1782
    %vm1791 = vmand %vm1767, %vm1783
    %vm1792 = vmand %vm1768, %vm1784
    %vm1793 = vcmp.lt.s32.totalorder %v1769, 16
    %vm1794 = vcmp.lt.s32.totalorder %v1770, 16
    %vm1795 = vcmp.lt.s32.totalorder %v1771, 16
    %vm1796 = vcmp.lt.s32.totalorder %v1772, 16
    %vm1797 = vcmp.lt.s32.totalorder %v1773, 16
    %vm1798 = vcmp.lt.s32.totalorder %v1774, 16
    %vm1799 = vcmp.lt.s32.totalorder %v1775, 16
    %vm1800 = vcmp.lt.s32.totalorder %v1776, 16
    %vm1801 = vmand %vm1785, %vm1793
    %vm1802 = vmand %vm1786, %vm1794
    %vm1803 = vmand %vm1787, %vm1795
    %vm1804 = vmand %vm1788, %vm1796
    %vm1805 = vmand %vm1789, %vm1797
    %vm1806 = vmand %vm1790, %vm1798
    %vm1807 = vmand %vm1791, %vm1799
    %vm1808 = vmand %vm1792, %vm1800
    %v1809 = vsel %vm1801, 1, 0
    %v1810 = vsel %vm1802, 1, 0
    %v1811 = vsel %vm1803, 1, 0
    %v1812 = vsel %vm1804, 1, 0
    %v1813 = vsel %vm1805, 1, 0
    %v1814 = vsel %vm1806, 1, 0
    %v1815 = vsel %vm1807, 1, 0
    %v1816 = vsel %vm1808, 1, 0
    %vm1817 = vcmp.eq.s32.totalorder %v1809, 1
    %vm1818 = vcmp.eq.s32.totalorder %v1810, 1
    %vm1819 = vcmp.eq.s32.totalorder %v1811, 1
    %vm1820 = vcmp.eq.s32.totalorder %v1812, 1
    %vm1821 = vcmp.eq.s32.totalorder %v1813, 1
    %vm1822 = vcmp.eq.s32.totalorder %v1814, 1
    %vm1823 = vcmp.eq.s32.totalorder %v1815, 1
    %vm1824 = vcmp.eq.s32.totalorder %v1816, 1
    %v1825 = vsel %vm1817, %v1735, 0.0
    %v1826 = vsel %vm1818, %v1705, 0.0
    %v1827 = vsel %vm1819, %v1706, 0.0
    %v1828 = vsel %vm1820, %v1707, 0.0
    %v1829 = vsel %vm1821, %v1708, 0.0
    %v1830 = vsel %vm1822, %v1709, 0.0
    %v1831 = vsel %vm1823, %v1710, 0.0
    %v1832 = vsel %vm1824, %v1711, 0.0
    %v1833 = vsel %vm1817, %v1736, 0.0
    %v1834 = vsel %vm1818, %v1712, 0.0
    %v1835 = vsel %vm1819, %v1713, 0.0
    %v1836 = vsel %vm1820, %v1714, 0.0
    %v1837 = vsel %vm1821, %v1715, 0.0
    %v1838 = vsel %vm1822, %v1716, 0.0
    %v1839 = vsel %vm1823, %v1717, 0.0
    %v1840 = vsel %vm1824, %v1718, 0.0
    %1841 = vrot.lane.b32.xlu0 %v1616, 64
    %v1842 = vpop.permute.xlu0 %1841
    %1843 = vrot.lane.b32.xlu0 %v1617, 64
    %v1844 = vpop.permute.xlu0 %1843
    %1845 = vrot.lane.b32.xlu0 %v1618, 64
    %v1846 = vpop.permute.xlu0 %1845
    %1847 = vrot.lane.b32.xlu0 %v1619, 64
    %v1848 = vpop.permute.xlu0 %1847
    %1849 = vrot.lane.b32.xlu0 %v1620, 64
    %v1850 = vpop.permute.xlu0 %1849
    %1851 = vrot.lane.b32.xlu0 %v1621, 64
    %v1852 = vpop.permute.xlu0 %1851
    %1853 = vrot.lane.b32.xlu0 %v1622, 64
    %v1854 = vpop.permute.xlu0 %1853
    %1855 = vrot.lane.b32.xlu0 %v1623, 64
    %v1856 = vpop.permute.xlu0 %1855
    %1857 = vrot.lane.b32.xlu0 %v1624, 64
    %v1858 = vpop.permute.xlu0 %1857
    %1859 = vrot.lane.b32.xlu0 %v1625, 64
    %v1860 = vpop.permute.xlu0 %1859
    %1861 = vrot.lane.b32.xlu0 %v1626, 64
    %v1862 = vpop.permute.xlu0 %1861
    %1863 = vrot.lane.b32.xlu0 %v1627, 64
    %v1864 = vpop.permute.xlu0 %1863
    %1865 = vrot.lane.b32.xlu0 %v1628, 64
    %v1866 = vpop.permute.xlu0 %1865
    %1867 = vrot.lane.b32.xlu0 %v1629, 64
    %v1868 = vpop.permute.xlu0 %1867
    %1869 = vrot.lane.b32.xlu0 %v1630, 64
    %v1870 = vpop.permute.xlu0 %1869
    %1871 = vrot.lane.b32.xlu0 %v1631, 64
    %v1872 = vpop.permute.xlu0 %1871
    %vm1873 = vcmask 523264
    %v1874 = vsel %vm1873, %v1842, %v1844
    %v1875 = vsel %vm1873, %v1844, %v1846
    %v1876 = vsel %vm1873, %v1846, %v1848
    %v1877 = vsel %vm1873, %v1848, %v1850
    %v1878 = vsel %vm1873, %v1850, %v1852
    %v1879 = vsel %vm1873, %v1852, %v1854
    %v1880 = vsel %vm1873, %v1854, %v1856
    %v1881 = vsel %vm1873, %v1858, %v1860
    %v1882 = vsel %vm1873, %v1860, %v1862
    %v1883 = vsel %vm1873, %v1862, %v1864
    %v1884 = vsel %vm1873, %v1864, %v1866
    %v1885 = vsel %vm1873, %v1866, %v1868
    %v1886 = vsel %vm1873, %v1868, %v1870
    %v1887 = vsel %vm1873, %v1870, %v1872
    %v1904 = vsel %vm1873, 0.0, %v1842
    %v1905 = vsel %vm1873, 0.0, %v1858
    %vm1906 = vcmp.ge.s32.totalorder %v1648, 0
    %vm1907 = vcmp.ge.s32.totalorder %v1649, 0
    %vm1908 = vcmp.ge.s32.totalorder %v1650, 0
    %vm1909 = vcmp.ge.s32.totalorder %v1651, 0
    %vm1910 = vcmp.ge.s32.totalorder %v1652, 0
    %vm1911 = vcmp.ge.s32.totalorder %v1653, 0
    %vm1912 = vcmp.ge.s32.totalorder %v1654, 0
    %vm1913 = vcmp.ge.s32.totalorder %v1655, 0
    %vm1914 = vmand %vm1761, %vm1906
    %vm1915 = vmand %vm1762, %vm1907
    %vm1916 = vmand %vm1763, %vm1908
    %vm1917 = vmand %vm1764, %vm1909
    %vm1918 = vmand %vm1765, %vm1910
    %vm1919 = vmand %vm1766, %vm1911
    %vm1920 = vmand %vm1767, %vm1912
    %vm1921 = vmand %vm1768, %vm1913
    %vm1922 = vcmp.lt.s32.totalorder %v1648, 16
    %vm1923 = vcmp.lt.s32.totalorder %v1649, 16
    %vm1924 = vcmp.lt.s32.totalorder %v1650, 16
    %vm1925 = vcmp.lt.s32.totalorder %v1651, 16
    %vm1926 = vcmp.lt.s32.totalorder %v1652, 16
    %vm1927 = vcmp.lt.s32.totalorder %v1653, 16
    %vm1928 = vcmp.lt.s32.totalorder %v1654, 16
    %vm1929 = vcmp.lt.s32.totalorder %v1655, 16
    %vm1930 = vmand %vm1914, %vm1922
    %vm1931 = vmand %vm1915, %vm1923
    %vm1932 = vmand %vm1916, %vm1924
    %vm1933 = vmand %vm1917, %vm1925
    %vm1934 = vmand %vm1918, %vm1926
    %vm1935 = vmand %vm1919, %vm1927
    %vm1936 = vmand %vm1920, %vm1928
    %vm1937 = vmand %vm1921, %vm1929
    %v1938 = vsel %vm1930, 1, 0
    %v1939 = vsel %vm1931, 1, 0
    %v1940 = vsel %vm1932, 1, 0
    %v1941 = vsel %vm1933, 1, 0
    %v1942 = vsel %vm1934, 1, 0
    %v1943 = vsel %vm1935, 1, 0
    %v1944 = vsel %vm1936, 1, 0
    %v1945 = vsel %vm1937, 1, 0
    %vm1946 = vcmp.eq.s32.totalorder %v1938, 1
    %vm1947 = vcmp.eq.s32.totalorder %v1939, 1
    %vm1948 = vcmp.eq.s32.totalorder %v1940, 1
    %vm1949 = vcmp.eq.s32.totalorder %v1941, 1
    %vm1950 = vcmp.eq.s32.totalorder %v1942, 1
    %vm1951 = vcmp.eq.s32.totalorder %v1943, 1
    %vm1952 = vcmp.eq.s32.totalorder %v1944, 1
    %vm1953 = vcmp.eq.s32.totalorder %v1945, 1
    %v1954 = vsel %vm1946, %v1904, 0.0
    %v1955 = vsel %vm1947, %v1874, 0.0
    %v1956 = vsel %vm1948, %v1875, 0.0
    %v1957 = vsel %vm1949, %v1876, 0.0
    %v1958 = vsel %vm1950, %v1877, 0.0
    %v1959 = vsel %vm1951, %v1878, 0.0
    %v1960 = vsel %vm1952, %v1879, 0.0
    %v1961 = vsel %vm1953, %v1880, 0.0
    %v1962 = vsel %vm1946, %v1905, 0.0
    %v1963 = vsel %vm1947, %v1881, 0.0
    %v1964 = vsel %vm1948, %v1882, 0.0
    %v1965 = vsel %vm1949, %v1883, 0.0
    %v1966 = vsel %vm1950, %v1884, 0.0
    %v1967 = vsel %vm1951, %v1885, 0.0
    %v1968 = vsel %vm1952, %v1886, 0.0
    %v1969 = vsel %vm1953, %v1887, 0.0
    %1970 = vrot.lane.b32.xlu0 %v1616, 62
    %v1971 = vpop.permute.xlu0 %1970
    %1972 = vrot.lane.b32.xlu0 %v1617, 62
    %v1973 = vpop.permute.xlu0 %1972
    %1974 = vrot.lane.b32.xlu0 %v1618, 62
    %v1975 = vpop.permute.xlu0 %1974
    %1976 = vrot.lane.b32.xlu0 %v1619, 62
    %v1977 = vpop.permute.xlu0 %1976
    %1978 = vrot.lane.b32.xlu0 %v1620, 62
    %v1979 = vpop.permute.xlu0 %1978
    %1980 = vrot.lane.b32.xlu0 %v1621, 62
    %v1981 = vpop.permute.xlu0 %1980
    %1982 = vrot.lane.b32.xlu0 %v1622, 62
    %v1983 = vpop.permute.xlu0 %1982
    %1984 = vrot.lane.b32.xlu0 %v1623, 62
    %v1985 = vpop.permute.xlu0 %1984
    %1986 = vrot.lane.b32.xlu0 %v1624, 62
    %v1987 = vpop.permute.xlu0 %1986
    %1988 = vrot.lane.b32.xlu0 %v1625, 62
    %v1989 = vpop.permute.xlu0 %1988
    %1990 = vrot.lane.b32.xlu0 %v1626, 62
    %v1991 = vpop.permute.xlu0 %1990
    %1992 = vrot.lane.b32.xlu0 %v1627, 62
    %v1993 = vpop.permute.xlu0 %1992
    %1994 = vrot.lane.b32.xlu0 %v1628, 62
    %v1995 = vpop.permute.xlu0 %1994
    %1996 = vrot.lane.b32.xlu0 %v1629, 62
    %v1997 = vpop.permute.xlu0 %1996
    %1998 = vrot.lane.b32.xlu0 %v1630, 62
    %v1999 = vpop.permute.xlu0 %1998
    %2000 = vrot.lane.b32.xlu0 %v1631, 62
    %v2001 = vpop.permute.xlu0 %2000
    %vm2002 = vcmask 506880
    %v2003 = vsel %vm2002, %v1971, %v1973
    %v2004 = vsel %vm2002, %v1973, %v1975
    %v2005 = vsel %vm2002, %v1975, %v1977
    %v2006 = vsel %vm2002, %v1977, %v1979
    %v2007 = vsel %vm2002, %v1979, %v1981
    %v2008 = vsel %vm2002, %v1981, %v1983
    %v2009 = vsel %vm2002, %v1983, %v1985
    %v2010 = vsel %vm2002, %v1987, %v1989
    %v2011 = vsel %vm2002, %v1989, %v1991
    %v2012 = vsel %vm2002, %v1991, %v1993
    %v2013 = vsel %vm2002, %v1993, %v1995
    %v2014 = vsel %vm2002, %v1995, %v1997
    %v2015 = vsel %vm2002, %v1997, %v1999
    %v2016 = vsel %vm2002, %v1999, %v2001
    %v2033 = vsel %vm2002, 0.0, %v1971
    %v2034 = vsel %vm2002, 0.0, %v1987
    %v2035 = vadd.s32 %v1648, 1
    %v2036 = vadd.s32 %v1649, 1
    %v2037 = vadd.s32 %v1650, 1
    %v2038 = vadd.s32 %v1651, 1
    %v2039 = vadd.s32 %v1652, 1
    %v2040 = vadd.s32 %v1653, 1
    %v2041 = vadd.s32 %v1654, 1
    %v2042 = vadd.s32 %v1655, 1
    %vm2043 = vcmp.ge.s32.totalorder %v2035, 0
    %vm2044 = vcmp.ge.s32.totalorder %v2036, 0
    %vm2045 = vcmp.ge.s32.totalorder %v2037, 0
    %vm2046 = vcmp.ge.s32.totalorder %v2038, 0
    %vm2047 = vcmp.ge.s32.totalorder %v2039, 0
    %vm2048 = vcmp.ge.s32.totalorder %v2040, 0
    %vm2049 = vcmp.ge.s32.totalorder %v2041, 0
    %vm2050 = vcmp.ge.s32.totalorder %v2042, 0
    %vm2051 = vmand %vm1761, %vm2043
    %vm2052 = vmand %vm1762, %vm2044
    %vm2053 = vmand %vm1763, %vm2045
    %vm2054 = vmand %vm1764, %vm2046
    %vm2055 = vmand %vm1765, %vm2047
    %vm2056 = vmand %vm1766, %vm2048
    %vm2057 = vmand %vm1767, %vm2049
    %vm2058 = vmand %vm1768, %vm2050
    %vm2059 = vcmp.lt.s32.totalorder %v2035, 16
    %vm2060 = vcmp.lt.s32.totalorder %v2036, 16
    %vm2061 = vcmp.lt.s32.totalorder %v2037, 16
    %vm2062 = vcmp.lt.s32.totalorder %v2038, 16
    %vm2063 = vcmp.lt.s32.totalorder %v2039, 16
    %vm2064 = vcmp.lt.s32.totalorder %v2040, 16
    %vm2065 = vcmp.lt.s32.totalorder %v2041, 16
    %vm2066 = vcmp.lt.s32.totalorder %v2042, 16
    %vm2067 = vmand %vm2051, %vm2059
    %vm2068 = vmand %vm2052, %vm2060
    %vm2069 = vmand %vm2053, %vm2061
    %vm2070 = vmand %vm2054, %vm2062
    %vm2071 = vmand %vm2055, %vm2063
    %vm2072 = vmand %vm2056, %vm2064
    %vm2073 = vmand %vm2057, %vm2065
    %vm2074 = vmand %vm2058, %vm2066
    %v2075 = vsel %vm2067, 1, 0
    %v2076 = vsel %vm2068, 1, 0
    %v2077 = vsel %vm2069, 1, 0
    %v2078 = vsel %vm2070, 1, 0
    %v2079 = vsel %vm2071, 1, 0
    %v2080 = vsel %vm2072, 1, 0
    %v2081 = vsel %vm2073, 1, 0
    %v2082 = vsel %vm2074, 1, 0
    %vm2083 = vcmp.eq.s32.totalorder %v2075, 1
    %vm2084 = vcmp.eq.s32.totalorder %v2076, 1
    %vm2085 = vcmp.eq.s32.totalorder %v2077, 1
    %vm2086 = vcmp.eq.s32.totalorder %v2078, 1
    %vm2087 = vcmp.eq.s32.totalorder %v2079, 1
    %vm2088 = vcmp.eq.s32.totalorder %v2080, 1
    %vm2089 = vcmp.eq.s32.totalorder %v2081, 1
    %vm2090 = vcmp.eq.s32.totalorder %v2082, 1
    %v2091 = vsel %vm2083, %v2033, 0.0
    %v2092 = vsel %vm2084, %v2003, 0.0
    %v2093 = vsel %vm2085, %v2004, 0.0
    %v2094 = vsel %vm2086, %v2005, 0.0
    %v2095 = vsel %vm2087, %v2006, 0.0
    %v2096 = vsel %vm2088, %v2007, 0.0
    %v2097 = vsel %vm2089, %v2008, 0.0
    %v2098 = vsel %vm2090, %v2009, 0.0
    %v2099 = vsel %vm2083, %v2034, 0.0
    %v2100 = vsel %vm2084, %v2010, 0.0
    %v2101 = vsel %vm2085, %v2011, 0.0
    %v2102 = vsel %vm2086, %v2012, 0.0
    %v2103 = vsel %vm2087, %v2013, 0.0
    %v2104 = vsel %vm2088, %v2014, 0.0
    %v2105 = vsel %vm2089, %v2015, 0.0
    %v2106 = vsel %vm2090, %v2016, 0.0
    %2107 = vrot.lane.b32.xlu0 %v1616, 2
    %v2108 = vpop.permute.xlu0 %2107
    %2109 = vrot.lane.b32.xlu0 %v1617, 2
    %v2110 = vpop.permute.xlu0 %2109
    %2111 = vrot.lane.b32.xlu0 %v1618, 2
    %v2112 = vpop.permute.xlu0 %2111
    %2113 = vrot.lane.b32.xlu0 %v1619, 2
    %v2114 = vpop.permute.xlu0 %2113
    %2115 = vrot.lane.b32.xlu0 %v1620, 2
    %v2116 = vpop.permute.xlu0 %2115
    %2117 = vrot.lane.b32.xlu0 %v1621, 2
    %v2118 = vpop.permute.xlu0 %2117
    %2119 = vrot.lane.b32.xlu0 %v1622, 2
    %v2120 = vpop.permute.xlu0 %2119
    %2121 = vrot.lane.b32.xlu0 %v1623, 2
    %v2122 = vpop.permute.xlu0 %2121
    %2123 = vrot.lane.b32.xlu0 %v1624, 2
    %v2124 = vpop.permute.xlu0 %2123
    %2125 = vrot.lane.b32.xlu0 %v1625, 2
    %v2126 = vpop.permute.xlu0 %2125
    %2127 = vrot.lane.b32.xlu0 %v1626, 2
    %v2128 = vpop.permute.xlu0 %2127
    %2129 = vrot.lane.b32.xlu0 %v1627, 2
    %v2130 = vpop.permute.xlu0 %2129
    %2131 = vrot.lane.b32.xlu0 %v1628, 2
    %v2132 = vpop.permute.xlu0 %2131
    %2133 = vrot.lane.b32.xlu0 %v1629, 2
    %v2134 = vpop.permute.xlu0 %2133
    %2135 = vrot.lane.b32.xlu0 %v1630, 2
    %v2136 = vpop.permute.xlu0 %2135
    %2137 = vrot.lane.b32.xlu0 %v1631, 2
    %v2138 = vpop.permute.xlu0 %2137
    %vm2139 = vcmask 15360
    %v2140 = vsel %vm2139, %v2108, %v2110
    %v2141 = vsel %vm2139, %v2110, %v2112
    %v2142 = vsel %vm2139, %v2112, %v2114
    %v2143 = vsel %vm2139, %v2114, %v2116
    %v2144 = vsel %vm2139, %v2116, %v2118
    %v2145 = vsel %vm2139, %v2118, %v2120
    %v2146 = vsel %vm2139, %v2120, %v2122
    %v2147 = vsel %vm2139, %v2124, %v2126
    %v2148 = vsel %vm2139, %v2126, %v2128
    %v2149 = vsel %vm2139, %v2128, %v2130
    %v2150 = vsel %vm2139, %v2130, %v2132
    %v2151 = vsel %vm2139, %v2132, %v2134
    %v2152 = vsel %vm2139, %v2134, %v2136
    %v2153 = vsel %vm2139, %v2136, %v2138
    %v2170 = vsel %vm2139, 0.0, %v2108
    %v2171 = vsel %vm2139, 0.0, %v2124
    %vm2172 = vcmp.ge.s32.totalorder %v1632, 0
    %vm2173 = vcmp.ge.s32.totalorder %v1633, 0
    %vm2174 = vcmp.ge.s32.totalorder %v1634, 0
    %vm2175 = vcmp.ge.s32.totalorder %v1635, 0
    %vm2176 = vcmp.ge.s32.totalorder %v1636, 0
    %vm2177 = vcmp.ge.s32.totalorder %v1637, 0
    %vm2178 = vcmp.ge.s32.totalorder %v1638, 0
    %vm2179 = vcmp.ge.s32.totalorder %v1639, 0
    %vm2180 = vcmp.lt.s32.totalorder %v1632, 16
    %vm2181 = vcmp.lt.s32.totalorder %v1633, 16
    %vm2182 = vcmp.lt.s32.totalorder %v1634, 16
    %vm2183 = vcmp.lt.s32.totalorder %v1635, 16
    %vm2184 = vcmp.lt.s32.totalorder %v1636, 16
    %vm2185 = vcmp.lt.s32.totalorder %v1637, 16
    %vm2186 = vcmp.lt.s32.totalorder %v1638, 16
    %vm2187 = vcmp.lt.s32.totalorder %v1639, 16
    %vm2188 = vmand %vm2172, %vm2180
    %vm2189 = vmand %vm2173, %vm2181
    %vm2190 = vmand %vm2174, %vm2182
    %vm2191 = vmand %vm2175, %vm2183
    %vm2192 = vmand %vm2176, %vm2184
    %vm2193 = vmand %vm2177, %vm2185
    %vm2194 = vmand %vm2178, %vm2186
    %vm2195 = vmand %vm2179, %vm2187
    %vm2196 = vmand %vm2188, %vm1777
    %vm2197 = vmand %vm2189, %vm1778
    %vm2198 = vmand %vm2190, %vm1779
    %vm2199 = vmand %vm2191, %vm1780
    %vm2200 = vmand %vm2192, %vm1781
    %vm2201 = vmand %vm2193, %vm1782
    %vm2202 = vmand %vm2194, %vm1783
    %vm2203 = vmand %vm2195, %vm1784
    %vm2204 = vmand %vm2196, %vm1793
    %vm2205 = vmand %vm2197, %vm1794
    %vm2206 = vmand %vm2198, %vm1795
    %vm2207 = vmand %vm2199, %vm1796
    %vm2208 = vmand %vm2200, %vm1797
    %vm2209 = vmand %vm2201, %vm1798
    %vm2210 = vmand %vm2202, %vm1799
    %vm2211 = vmand %vm2203, %vm1800
    %v2212 = vsel %vm2204, 1, 0
    %v2213 = vsel %vm2205, 1, 0
    %v2214 = vsel %vm2206, 1, 0
    %v2215 = vsel %vm2207, 1, 0
    %v2216 = vsel %vm2208, 1, 0
    %v2217 = vsel %vm2209, 1, 0
    %v2218 = vsel %vm2210, 1, 0
    %v2219 = vsel %vm2211, 1, 0
    %vm2220 = vcmp.eq.s32.totalorder %v2212, 1
    %vm2221 = vcmp.eq.s32.totalorder %v2213, 1
    %vm2222 = vcmp.eq.s32.totalorder %v2214, 1
    %vm2223 = vcmp.eq.s32.totalorder %v2215, 1
    %vm2224 = vcmp.eq.s32.totalorder %v2216, 1
    %vm2225 = vcmp.eq.s32.totalorder %v2217, 1
    %vm2226 = vcmp.eq.s32.totalorder %v2218, 1
    %vm2227 = vcmp.eq.s32.totalorder %v2219, 1
    %v2228 = vsel %vm2220, %v2170, 0.0
    %v2229 = vsel %vm2221, %v2140, 0.0
    %v2230 = vsel %vm2222, %v2141, 0.0
    %v2231 = vsel %vm2223, %v2142, 0.0
    %v2232 = vsel %vm2224, %v2143, 0.0
    %v2233 = vsel %vm2225, %v2144, 0.0
    %v2234 = vsel %vm2226, %v2145, 0.0
    %v2235 = vsel %vm2227, %v2146, 0.0
    %v2236 = vsel %vm2220, %v2171, 0.0
    %v2237 = vsel %vm2221, %v2147, 0.0
    %v2238 = vsel %vm2222, %v2148, 0.0
    %v2239 = vsel %vm2223, %v2149, 0.0
    %v2240 = vsel %vm2224, %v2150, 0.0
    %v2241 = vsel %vm2225, %v2151, 0.0
    %v2242 = vsel %vm2226, %v2152, 0.0
    %v2243 = vsel %vm2227, %v2153, 0.0
    %vm2244 = vmand %vm2188, %vm1906
    %vm2245 = vmand %vm2189, %vm1907
    %vm2246 = vmand %vm2190, %vm1908
    %vm2247 = vmand %vm2191, %vm1909
    %vm2248 = vmand %vm2192, %vm1910
    %vm2249 = vmand %vm2193, %vm1911
    %vm2250 = vmand %vm2194, %vm1912
    %vm2251 = vmand %vm2195, %vm1913
    %vm2252 = vmand %vm2244, %vm1922
    %vm2253 = vmand %vm2245, %vm1923
    %vm2254 = vmand %vm2246, %vm1924
    %vm2255 = vmand %vm2247, %vm1925
    %vm2256 = vmand %vm2248, %vm1926
    %vm2257 = vmand %vm2249, %vm1927
    %vm2258 = vmand %vm2250, %vm1928
    %vm2259 = vmand %vm2251, %vm1929
    %v2260 = vsel %vm2252, 1, 0
    %v2261 = vsel %vm2253, 1, 0
    %v2262 = vsel %vm2254, 1, 0
    %v2263 = vsel %vm2255, 1, 0
    %v2264 = vsel %vm2256, 1, 0
    %v2265 = vsel %vm2257, 1, 0
    %v2266 = vsel %vm2258, 1, 0
    %v2267 = vsel %vm2259, 1, 0
    %vm2268 = vcmp.eq.s32.totalorder %v2260, 1
    %vm2269 = vcmp.eq.s32.totalorder %v2261, 1
    %vm2270 = vcmp.eq.s32.totalorder %v2262, 1
    %vm2271 = vcmp.eq.s32.totalorder %v2263, 1
    %vm2272 = vcmp.eq.s32.totalorder %v2264, 1
    %vm2273 = vcmp.eq.s32.totalorder %v2265, 1
    %vm2274 = vcmp.eq.s32.totalorder %v2266, 1
    %vm2275 = vcmp.eq.s32.totalorder %v2267, 1
    %v2276 = vsel %vm2268, %v1616, 0.0
    %v2277 = vsel %vm2269, %v1617, 0.0
    %v2278 = vsel %vm2270, %v1618, 0.0
    %v2279 = vsel %vm2271, %v1619, 0.0
    %v2280 = vsel %vm2272, %v1620, 0.0
    %v2281 = vsel %vm2273, %v1621, 0.0
    %v2282 = vsel %vm2274, %v1622, 0.0
    %v2283 = vsel %vm2275, %v1623, 0.0
    %v2284 = vsel %vm2268, %v1624, 0.0
    %v2285 = vsel %vm2269, %v1625, 0.0
    %v2286 = vsel %vm2270, %v1626, 0.0
    %v2287 = vsel %vm2271, %v1627, 0.0
    %v2288 = vsel %vm2272, %v1628, 0.0
    %v2289 = vsel %vm2273, %v1629, 0.0
    %v2290 = vsel %vm2274, %v1630, 0.0
    %v2291 = vsel %vm2275, %v1631, 0.0
    %2292 = vrot.lane.b32.xlu0 %v1616, 126
    %v2293 = vpop.permute.xlu0 %2292
    %2294 = vrot.lane.b32.xlu0 %v1617, 126
    %v2295 = vpop.permute.xlu0 %2294
    %2296 = vrot.lane.b32.xlu0 %v1618, 126
    %v2297 = vpop.permute.xlu0 %2296
    %2298 = vrot.lane.b32.xlu0 %v1619, 126
    %v2299 = vpop.permute.xlu0 %2298
    %2300 = vrot.lane.b32.xlu0 %v1620, 126
    %v2301 = vpop.permute.xlu0 %2300
    %2302 = vrot.lane.b32.xlu0 %v1621, 126
    %v2303 = vpop.permute.xlu0 %2302
    %2304 = vrot.lane.b32.xlu0 %v1622, 126
    %v2305 = vpop.permute.xlu0 %2304
    %2306 = vrot.lane.b32.xlu0 %v1623, 126
    %v2307 = vpop.permute.xlu0 %2306
    %2308 = vrot.lane.b32.xlu0 %v1624, 126
    %v2309 = vpop.permute.xlu0 %2308
    %2310 = vrot.lane.b32.xlu0 %v1625, 126
    %v2311 = vpop.permute.xlu0 %2310
    %2312 = vrot.lane.b32.xlu0 %v1626, 126
    %v2313 = vpop.permute.xlu0 %2312
    %2314 = vrot.lane.b32.xlu0 %v1627, 126
    %v2315 = vpop.permute.xlu0 %2314
    %2316 = vrot.lane.b32.xlu0 %v1628, 126
    %v2317 = vpop.permute.xlu0 %2316
    %2318 = vrot.lane.b32.xlu0 %v1629, 126
    %v2319 = vpop.permute.xlu0 %2318
    %2320 = vrot.lane.b32.xlu0 %v1630, 126
    %v2321 = vpop.permute.xlu0 %2320
    %2322 = vrot.lane.b32.xlu0 %v1631, 126
    %v2323 = vpop.permute.xlu0 %2322
    %vm2324 = vcmask 1031168
    %v2325 = vsel %vm2324, %v2293, %v2295
    %v2326 = vsel %vm2324, %v2295, %v2297
    %v2327 = vsel %vm2324, %v2297, %v2299
    %v2328 = vsel %vm2324, %v2299, %v2301
    %v2329 = vsel %vm2324, %v2301, %v2303
    %v2330 = vsel %vm2324, %v2303, %v2305
    %v2331 = vsel %vm2324, %v2305, %v2307
    %v2332 = vsel %vm2324, %v2309, %v2311
    %v2333 = vsel %vm2324, %v2311, %v2313
    %v2334 = vsel %vm2324, %v2313, %v2315
    %v2335 = vsel %vm2324, %v2315, %v2317
    %v2336 = vsel %vm2324, %v2317, %v2319
    %v2337 = vsel %vm2324, %v2319, %v2321
    %v2338 = vsel %vm2324, %v2321, %v2323
    %v2355 = vsel %vm2324, %v2307, 0.0
    %v2356 = vsel %vm2324, %v2323, 0.0
    %vm2357 = vmand %vm2188, %vm2043
    %vm2358 = vmand %vm2189, %vm2044
    %vm2359 = vmand %vm2190, %vm2045
    %vm2360 = vmand %vm2191, %vm2046
    %vm2361 = vmand %vm2192, %vm2047
    %vm2362 = vmand %vm2193, %vm2048
    %vm2363 = vmand %vm2194, %vm2049
    %vm2364 = vmand %vm2195, %vm2050
    %vm2365 = vmand %vm2357, %vm2059
    %vm2366 = vmand %vm2358, %vm2060
    %vm2367 = vmand %vm2359, %vm2061
    %vm2368 = vmand %vm2360, %vm2062
    %vm2369 = vmand %vm2361, %vm2063
    %vm2370 = vmand %vm2362, %vm2064
    %vm2371 = vmand %vm2363, %vm2065
    %vm2372 = vmand %vm2364, %vm2066
    %v2373 = vsel %vm2365, 1, 0
    %v2374 = vsel %vm2366, 1, 0
    %v2375 = vsel %vm2367, 1, 0
    %v2376 = vsel %vm2368, 1, 0
    %v2377 = vsel %vm2369, 1, 0
    %v2378 = vsel %vm2370, 1, 0
    %v2379 = vsel %vm2371, 1, 0
    %v2380 = vsel %vm2372, 1, 0
    %vm2381 = vcmp.eq.s32.totalorder %v2373, 1
    %vm2382 = vcmp.eq.s32.totalorder %v2374, 1
    %vm2383 = vcmp.eq.s32.totalorder %v2375, 1
    %vm2384 = vcmp.eq.s32.totalorder %v2376, 1
    %vm2385 = vcmp.eq.s32.totalorder %v2377, 1
    %vm2386 = vcmp.eq.s32.totalorder %v2378, 1
    %vm2387 = vcmp.eq.s32.totalorder %v2379, 1
    %vm2388 = vcmp.eq.s32.totalorder %v2380, 1
    %v2389 = vsel %vm2381, %v2325, 0.0
    %v2390 = vsel %vm2382, %v2326, 0.0
    %v2391 = vsel %vm2383, %v2327, 0.0
    %v2392 = vsel %vm2384, %v2328, 0.0
    %v2393 = vsel %vm2385, %v2329, 0.0
    %v2394 = vsel %vm2386, %v2330, 0.0
    %v2395 = vsel %vm2387, %v2331, 0.0
    %v2396 = vsel %vm2388, %v2355, 0.0
    %v2397 = vsel %vm2381, %v2332, 0.0
    %v2398 = vsel %vm2382, %v2333, 0.0
    %v2399 = vsel %vm2383, %v2334, 0.0
    %v2400 = vsel %vm2384, %v2335, 0.0
    %v2401 = vsel %vm2385, %v2336, 0.0
    %v2402 = vsel %vm2386, %v2337, 0.0
    %v2403 = vsel %vm2387, %v2338, 0.0
    %v2404 = vsel %vm2388, %v2356, 0.0
    %v2407 = vsel %vm1704, %v1687, 0.0
    %v2408 = vsel %vm1704, %v1703, 0.0
    %v2409 = vadd.s32 %v1632, 1
    %v2410 = vadd.s32 %v1633, 1
    %v2411 = vadd.s32 %v1634, 1
    %v2412 = vadd.s32 %v1635, 1
    %v2413 = vadd.s32 %v1636, 1
    %v2414 = vadd.s32 %v1637, 1
    %v2415 = vadd.s32 %v1638, 1
    %v2416 = vadd.s32 %v1639, 1
    %vm2417 = vcmp.ge.s32.totalorder %v2409, 0
    %vm2418 = vcmp.ge.s32.totalorder %v2410, 0
    %vm2419 = vcmp.ge.s32.totalorder %v2411, 0
    %vm2420 = vcmp.ge.s32.totalorder %v2412, 0
    %vm2421 = vcmp.ge.s32.totalorder %v2413, 0
    %vm2422 = vcmp.ge.s32.totalorder %v2414, 0
    %vm2423 = vcmp.ge.s32.totalorder %v2415, 0
    %vm2424 = vcmp.ge.s32.totalorder %v2416, 0
    %vm2425 = vcmp.lt.s32.totalorder %v2409, 16
    %vm2426 = vcmp.lt.s32.totalorder %v2410, 16
    %vm2427 = vcmp.lt.s32.totalorder %v2411, 16
    %vm2428 = vcmp.lt.s32.totalorder %v2412, 16
    %vm2429 = vcmp.lt.s32.totalorder %v2413, 16
    %vm2430 = vcmp.lt.s32.totalorder %v2414, 16
    %vm2431 = vcmp.lt.s32.totalorder %v2415, 16
    %vm2432 = vcmp.lt.s32.totalorder %v2416, 16
    %vm2433 = vmand %vm2417, %vm2425
    %vm2434 = vmand %vm2418, %vm2426
    %vm2435 = vmand %vm2419, %vm2427
    %vm2436 = vmand %vm2420, %vm2428
    %vm2437 = vmand %vm2421, %vm2429
    %vm2438 = vmand %vm2422, %vm2430
    %vm2439 = vmand %vm2423, %vm2431
    %vm2440 = vmand %vm2424, %vm2432
    %vm2441 = vmand %vm2433, %vm1777
    %vm2442 = vmand %vm2434, %vm1778
    %vm2443 = vmand %vm2435, %vm1779
    %vm2444 = vmand %vm2436, %vm1780
    %vm2445 = vmand %vm2437, %vm1781
    %vm2446 = vmand %vm2438, %vm1782
    %vm2447 = vmand %vm2439, %vm1783
    %vm2448 = vmand %vm2440, %vm1784
    %vm2449 = vmand %vm2441, %vm1793
    %vm2450 = vmand %vm2442, %vm1794
    %vm2451 = vmand %vm2443, %vm1795
    %vm2452 = vmand %vm2444, %vm1796
    %vm2453 = vmand %vm2445, %vm1797
    %vm2454 = vmand %vm2446, %vm1798
    %vm2455 = vmand %vm2447, %vm1799
    %vm2456 = vmand %vm2448, %vm1800
    %v2457 = vsel %vm2449, 1, 0
    %v2458 = vsel %vm2450, 1, 0
    %v2459 = vsel %vm2451, 1, 0
    %v2460 = vsel %vm2452, 1, 0
    %v2461 = vsel %vm2453, 1, 0
    %v2462 = vsel %vm2454, 1, 0
    %v2463 = vsel %vm2455, 1, 0
    %v2464 = vsel %vm2456, 1, 0
    %vm2465 = vcmp.eq.s32.totalorder %v2457, 1
    %vm2466 = vcmp.eq.s32.totalorder %v2458, 1
    %vm2467 = vcmp.eq.s32.totalorder %v2459, 1
    %vm2468 = vcmp.eq.s32.totalorder %v2460, 1
    %vm2469 = vcmp.eq.s32.totalorder %v2461, 1
    %vm2470 = vcmp.eq.s32.totalorder %v2462, 1
    %vm2471 = vcmp.eq.s32.totalorder %v2463, 1
    %vm2472 = vcmp.eq.s32.totalorder %v2464, 1
    %v2473 = vsel %vm2465, %v1705, 0.0
    %v2474 = vsel %vm2466, %v1706, 0.0
    %v2475 = vsel %vm2467, %v1707, 0.0
    %v2476 = vsel %vm2468, %v1708, 0.0
    %v2477 = vsel %vm2469, %v1709, 0.0
    %v2478 = vsel %vm2470, %v1710, 0.0
    %v2479 = vsel %vm2471, %v1711, 0.0
    %v2480 = vsel %vm2472, %v2407, 0.0
    %v2481 = vsel %vm2465, %v1712, 0.0
    %v2482 = vsel %vm2466, %v1713, 0.0
    %v2483 = vsel %vm2467, %v1714, 0.0
    %v2484 = vsel %vm2468, %v1715, 0.0
    %v2485 = vsel %vm2469, %v1716, 0.0
    %v2486 = vsel %vm2470, %v1717, 0.0
    %v2487 = vsel %vm2471, %v1718, 0.0
    %v2488 = vsel %vm2472, %v2408, 0.0
    %v2491 = vsel %vm1873, %v1856, 0.0
    %v2492 = vsel %vm1873, %v1872, 0.0
    %vm2493 = vmand %vm2433, %vm1906
    %vm2494 = vmand %vm2434, %vm1907
    %vm2495 = vmand %vm2435, %vm1908
    %vm2496 = vmand %vm2436, %vm1909
    %vm2497 = vmand %vm2437, %vm1910
    %vm2498 = vmand %vm2438, %vm1911
    %vm2499 = vmand %vm2439, %vm1912
    %vm2500 = vmand %vm2440, %vm1913
    %vm2501 = vmand %vm2493, %vm1922
    %vm2502 = vmand %vm2494, %vm1923
    %vm2503 = vmand %vm2495, %vm1924
    %vm2504 = vmand %vm2496, %vm1925
    %vm2505 = vmand %vm2497, %vm1926
    %vm2506 = vmand %vm2498, %vm1927
    %vm2507 = vmand %vm2499, %vm1928
    %vm2508 = vmand %vm2500, %vm1929
    %v2509 = vsel %vm2501, 1, 0
    %v2510 = vsel %vm2502, 1, 0
    %v2511 = vsel %vm2503, 1, 0
    %v2512 = vsel %vm2504, 1, 0
    %v2513 = vsel %vm2505, 1, 0
    %v2514 = vsel %vm2506, 1, 0
    %v2515 = vsel %vm2507, 1, 0
    %v2516 = vsel %vm2508, 1, 0
    %vm2517 = vcmp.eq.s32.totalorder %v2509, 1
    %vm2518 = vcmp.eq.s32.totalorder %v2510, 1
    %vm2519 = vcmp.eq.s32.totalorder %v2511, 1
    %vm2520 = vcmp.eq.s32.totalorder %v2512, 1
    %vm2521 = vcmp.eq.s32.totalorder %v2513, 1
    %vm2522 = vcmp.eq.s32.totalorder %v2514, 1
    %vm2523 = vcmp.eq.s32.totalorder %v2515, 1
    %vm2524 = vcmp.eq.s32.totalorder %v2516, 1
    %v2525 = vsel %vm2517, %v1874, 0.0
    %v2526 = vsel %vm2518, %v1875, 0.0
    %v2527 = vsel %vm2519, %v1876, 0.0
    %v2528 = vsel %vm2520, %v1877, 0.0
    %v2529 = vsel %vm2521, %v1878, 0.0
    %v2530 = vsel %vm2522, %v1879, 0.0
    %v2531 = vsel %vm2523, %v1880, 0.0
    %v2532 = vsel %vm2524, %v2491, 0.0
    %v2533 = vsel %vm2517, %v1881, 0.0
    %v2534 = vsel %vm2518, %v1882, 0.0
    %v2535 = vsel %vm2519, %v1883, 0.0
    %v2536 = vsel %vm2520, %v1884, 0.0
    %v2537 = vsel %vm2521, %v1885, 0.0
    %v2538 = vsel %vm2522, %v1886, 0.0
    %v2539 = vsel %vm2523, %v1887, 0.0
    %v2540 = vsel %vm2524, %v2492, 0.0
    %v2543 = vsel %vm2002, %v1985, 0.0
    %v2544 = vsel %vm2002, %v2001, 0.0
    %vm2545 = vmand %vm2433, %vm2043
    %vm2546 = vmand %vm2434, %vm2044
    %vm2547 = vmand %vm2435, %vm2045
    %vm2548 = vmand %vm2436, %vm2046
    %vm2549 = vmand %vm2437, %vm2047
    %vm2550 = vmand %vm2438, %vm2048
    %vm2551 = vmand %vm2439, %vm2049
    %vm2552 = vmand %vm2440, %vm2050
    %vm2553 = vmand %vm2545, %vm2059
    %vm2554 = vmand %vm2546, %vm2060
    %vm2555 = vmand %vm2547, %vm2061
    %vm2556 = vmand %vm2548, %vm2062
    %vm2557 = vmand %vm2549, %vm2063
    %vm2558 = vmand %vm2550, %vm2064
    %vm2559 = vmand %vm2551, %vm2065
    %vm2560 = vmand %vm2552, %vm2066
    %v2561 = vsel %vm2553, 1, 0
    %v2562 = vsel %vm2554, 1, 0
    %v2563 = vsel %vm2555, 1, 0
    %v2564 = vsel %vm2556, 1, 0
    %v2565 = vsel %vm2557, 1, 0
    %v2566 = vsel %vm2558, 1, 0
    %v2567 = vsel %vm2559, 1, 0
    %v2568 = vsel %vm2560, 1, 0
    %vm2569 = vcmp.eq.s32.totalorder %v2561, 1
    %vm2570 = vcmp.eq.s32.totalorder %v2562, 1
    %vm2571 = vcmp.eq.s32.totalorder %v2563, 1
    %vm2572 = vcmp.eq.s32.totalorder %v2564, 1
    %vm2573 = vcmp.eq.s32.totalorder %v2565, 1
    %vm2574 = vcmp.eq.s32.totalorder %v2566, 1
    %vm2575 = vcmp.eq.s32.totalorder %v2567, 1
    %vm2576 = vcmp.eq.s32.totalorder %v2568, 1
    %v2577 = vsel %vm2569, %v2003, 0.0
    %v2578 = vsel %vm2570, %v2004, 0.0
    %v2579 = vsel %vm2571, %v2005, 0.0
    %v2580 = vsel %vm2572, %v2006, 0.0
    %v2581 = vsel %vm2573, %v2007, 0.0
    %v2582 = vsel %vm2574, %v2008, 0.0
    %v2583 = vsel %vm2575, %v2009, 0.0
    %v2584 = vsel %vm2576, %v2543, 0.0
    %v2585 = vsel %vm2569, %v2010, 0.0
    %v2586 = vsel %vm2570, %v2011, 0.0
    %v2587 = vsel %vm2571, %v2012, 0.0
    %v2588 = vsel %vm2572, %v2013, 0.0
    %v2589 = vsel %vm2573, %v2014, 0.0
    %v2590 = vsel %vm2574, %v2015, 0.0
    %v2591 = vsel %vm2575, %v2016, 0.0
    %v2592 = vsel %vm2576, %v2544, 0.0
    %v2609 = vrot.slane %v1954, 6
    %v2610 = vrot.slane %v1955, 6
    %v2611 = vrot.slane %v1956, 6
    %v2612 = vrot.slane %v1957, 6
    %v2613 = vrot.slane %v1958, 6
    %v2614 = vrot.slane %v1959, 6
    %v2615 = vrot.slane %v1960, 6
    %v2616 = vrot.slane %v1961, 6
    %v2617 = vrot.slane %v1962, 6
    %v2618 = vsel %vm1057, %v2609, %v2617
    %v2619 = vrot.slane %v1963, 6
    %v2620 = vsel %vm1057, %v2610, %v2619
    %v2621 = vrot.slane %v1964, 6
    %v2622 = vsel %vm1057, %v2611, %v2621
    %v2623 = vrot.slane %v1965, 6
    %v2624 = vsel %vm1057, %v2612, %v2623
    %v2625 = vrot.slane %v1966, 6
    %v2626 = vsel %vm1057, %v2613, %v2625
    %v2627 = vrot.slane %v1967, 6
    %v2628 = vsel %vm1057, %v2614, %v2627
    %v2629 = vrot.slane %v1968, 6
    %v2630 = vsel %vm1057, %v2615, %v2629
    %v2631 = vrot.slane %v1969, 6
    %v2632 = vsel %vm1057, %v2616, %v2631
    %v2665 = vrot.slane %v2091, 4
    %v2666 = vrot.slane %v2092, 4
    %v2667 = vrot.slane %v2093, 4
    %v2668 = vrot.slane %v2094, 4
    %v2669 = vrot.slane %v2095, 4
    %v2670 = vrot.slane %v2096, 4
    %v2671 = vrot.slane %v2097, 4
    %v2672 = vrot.slane %v2098, 4
    %v2673 = vrot.slane %v2099, 4
    %v2674 = vsel %vm1039, %v2665, %v2673
    %v2675 = vrot.slane %v2100, 4
    %v2676 = vsel %vm1039, %v2666, %v2675
    %v2677 = vrot.slane %v2101, 4
    %v2678 = vsel %vm1039, %v2667, %v2677
    %v2679 = vrot.slane %v2102, 4
    %v2680 = vsel %vm1039, %v2668, %v2679
    %v2681 = vrot.slane %v2103, 4
    %v2682 = vsel %vm1039, %v2669, %v2681
    %v2683 = vrot.slane %v2104, 4
    %v2684 = vsel %vm1039, %v2670, %v2683
    %v2685 = vrot.slane %v2105, 4
    %v2686 = vsel %vm1039, %v2671, %v2685
    %v2687 = vrot.slane %v2106, 4
    %v2688 = vsel %vm1039, %v2672, %v2687
    %v2721 = vrot.slane %v2228, 2
    %v2722 = vrot.slane %v2229, 2
    %v2723 = vrot.slane %v2230, 2
    %v2724 = vrot.slane %v2231, 2
    %v2725 = vrot.slane %v2232, 2
    %v2726 = vrot.slane %v2233, 2
    %v2727 = vrot.slane %v2234, 2
    %v2728 = vrot.slane %v2235, 2
    %v2729 = vrot.slane %v2236, 2
    %v2730 = vsel %vm1021, %v2721, %v2729
    %v2731 = vrot.slane %v2237, 2
    %v2732 = vsel %vm1021, %v2722, %v2731
    %v2733 = vrot.slane %v2238, 2
    %v2734 = vsel %vm1021, %v2723, %v2733
    %v2735 = vrot.slane %v2239, 2
    %v2736 = vsel %vm1021, %v2724, %v2735
    %v2737 = vrot.slane %v2240, 2
    %v2738 = vsel %vm1021, %v2725, %v2737
    %v2739 = vrot.slane %v2241, 2
    %v2740 = vsel %vm1021, %v2726, %v2739
    %v2741 = vrot.slane %v2242, 2
    %v2742 = vsel %vm1021, %v2727, %v2741
    %v2743 = vrot.slane %v2243, 2
    %v2744 = vsel %vm1021, %v2728, %v2743
    %v2777 = vrot.slane %v2389, 6
    %v2778 = vrot.slane %v2390, 6
    %v2779 = vrot.slane %v2391, 6
    %v2780 = vrot.slane %v2392, 6
    %v2781 = vrot.slane %v2393, 6
    %v2782 = vrot.slane %v2394, 6
    %v2783 = vrot.slane %v2395, 6
    %v2784 = vrot.slane %v2396, 6
    %v2785 = vrot.slane %v2397, 6
    %v2786 = vsel %vm1057, %v2777, %v2785
    %v2787 = vrot.slane %v2398, 6
    %v2788 = vsel %vm1057, %v2778, %v2787
    %v2789 = vrot.slane %v2399, 6
    %v2790 = vsel %vm1057, %v2779, %v2789
    %v2791 = vrot.slane %v2400, 6
    %v2792 = vsel %vm1057, %v2780, %v2791
    %v2793 = vrot.slane %v2401, 6
    %v2794 = vsel %vm1057, %v2781, %v2793
    %v2795 = vrot.slane %v2402, 6
    %v2796 = vsel %vm1057, %v2782, %v2795
    %v2797 = vrot.slane %v2403, 6
    %v2798 = vsel %vm1057, %v2783, %v2797
    %v2799 = vrot.slane %v2404, 6
    %v2800 = vsel %vm1057, %v2784, %v2799
    %v2833 = vrot.slane %v2473, 4
    %v2834 = vrot.slane %v2474, 4
    %v2835 = vrot.slane %v2475, 4
    %v2836 = vrot.slane %v2476, 4
    %v2837 = vrot.slane %v2477, 4
    %v2838 = vrot.slane %v2478, 4
    %v2839 = vrot.slane %v2479, 4
    %v2840 = vrot.slane %v2480, 4
    %v2841 = vrot.slane %v2481, 4
    %v2842 = vsel %vm1039, %v2833, %v2841
    %v2843 = vrot.slane %v2482, 4
    %v2844 = vsel %vm1039, %v2834, %v2843
    %v2845 = vrot.slane %v2483, 4
    %v2846 = vsel %vm1039, %v2835, %v2845
    %v2847 = vrot.slane %v2484, 4
    %v2848 = vsel %vm1039, %v2836, %v2847
    %v2849 = vrot.slane %v2485, 4
    %v2850 = vsel %vm1039, %v2837, %v2849
    %v2851 = vrot.slane %v2486, 4
    %v2852 = vsel %vm1039, %v2838, %v2851
    %v2853 = vrot.slane %v2487, 4
    %v2854 = vsel %vm1039, %v2839, %v2853
    %v2855 = vrot.slane %v2488, 4
    %v2856 = vsel %vm1039, %v2840, %v2855
    %v2889 = vrot.slane %v2525, 2
    %v2890 = vrot.slane %v2526, 2
    %v2891 = vrot.slane %v2527, 2
    %v2892 = vrot.slane %v2528, 2
    %v2893 = vrot.slane %v2529, 2
    %v2894 = vrot.slane %v2530, 2
    %v2895 = vrot.slane %v2531, 2
    %v2896 = vrot.slane %v2532, 2
    %v2897 = vrot.slane %v2533, 2
    %v2898 = vsel %vm1021, %v2889, %v2897
    %v2899 = vrot.slane %v2534, 2
    %v2900 = vsel %vm1021, %v2890, %v2899
    %v2901 = vrot.slane %v2535, 2
    %v2902 = vsel %vm1021, %v2891, %v2901
    %v2903 = vrot.slane %v2536, 2
    %v2904 = vsel %vm1021, %v2892, %v2903
    %v2905 = vrot.slane %v2537, 2
    %v2906 = vsel %vm1021, %v2893, %v2905
    %v2907 = vrot.slane %v2538, 2
    %v2908 = vsel %vm1021, %v2894, %v2907
    %v2909 = vrot.slane %v2539, 2
    %v2910 = vsel %vm1021, %v2895, %v2909
    %v2911 = vrot.slane %v2540, 2
    %v2912 = vsel %vm1021, %v2896, %v2911
    %v2929 = vsel %vm1057, %v1833, %v2609
    %v2930 = vsel %vm1057, %v1834, %v2610
    %v2931 = vsel %vm1057, %v1835, %v2611
    %v2932 = vsel %vm1057, %v1836, %v2612
    %v2933 = vsel %vm1057, %v1837, %v2613
    %v2934 = vsel %vm1057, %v1838, %v2614
    %v2935 = vsel %vm1057, %v1839, %v2615
    %v2936 = vsel %vm1057, %v1840, %v2616
    %v2937 = vsel %vm1039, %v2618, %v2665
    %v2938 = vsel %vm1039, %v2620, %v2666
    %v2939 = vsel %vm1039, %v2622, %v2667
    %v2940 = vsel %vm1039, %v2624, %v2668
    %v2941 = vsel %vm1039, %v2626, %v2669
    %v2942 = vsel %vm1039, %v2628, %v2670
    %v2943 = vsel %vm1039, %v2630, %v2671
    %v2944 = vsel %vm1039, %v2632, %v2672
    %v2945 = vsel %vm1021, %v2674, %v2721
    %v2946 = vsel %vm1021, %v2676, %v2722
    %v2947 = vsel %vm1021, %v2678, %v2723
    %v2948 = vsel %vm1021, %v2680, %v2724
    %v2949 = vsel %vm1021, %v2682, %v2725
    %v2950 = vsel %vm1021, %v2684, %v2726
    %v2951 = vsel %vm1021, %v2686, %v2727
    %v2952 = vsel %vm1021, %v2688, %v2728
    %v2953 = vsel %vm1057, %v2284, %v2777
    %v2954 = vsel %vm1057, %v2285, %v2778
    %v2955 = vsel %vm1057, %v2286, %v2779
    %v2956 = vsel %vm1057, %v2287, %v2780
    %v2957 = vsel %vm1057, %v2288, %v2781
    %v2958 = vsel %vm1057, %v2289, %v2782
    %v2959 = vsel %vm1057, %v2290, %v2783
    %v2960 = vsel %vm1057, %v2291, %v2784
    %v2961 = vsel %vm1039, %v2786, %v2833
    %v2962 = vsel %vm1039, %v2788, %v2834
    %v2963 = vsel %vm1039, %v2790, %v2835
    %v2964 = vsel %vm1039, %v2792, %v2836
    %v2965 = vsel %vm1039, %v2794, %v2837
    %v2966 = vsel %vm1039, %v2796, %v2838
    %v2967 = vsel %vm1039, %v2798, %v2839
    %v2968 = vsel %vm1039, %v2800, %v2840
    %v2969 = vsel %vm1021, %v2842, %v2889
    %v2970 = vsel %vm1021, %v2844, %v2890
    %v2971 = vsel %vm1021, %v2846, %v2891
    %v2972 = vsel %vm1021, %v2848, %v2892
    %v2973 = vsel %vm1021, %v2850, %v2893
    %v2974 = vsel %vm1021, %v2852, %v2894
    %v2975 = vsel %vm1021, %v2854, %v2895
    %v2976 = vsel %vm1021, %v2856, %v2896
    %v2977 = vsel %vm1057, %v2585, 1.0
    %v2978 = vsel %vm1057, %v2586, 1.0
    %v2979 = vsel %vm1057, %v2587, 1.0
    %v2980 = vsel %vm1057, %v2588, 1.0
    %v2981 = vsel %vm1057, %v2589, 1.0
    %v2982 = vsel %vm1057, %v2590, 1.0
    %v2983 = vsel %vm1057, %v2591, 1.0
    %v2984 = vsel %vm1057, %v2592, 1.0
    %v2985 = vld [vmem:[%s2] sm:$0x3]
    %vm2986 = vcmask 744448
    %v2988 = vsel %vm2986, %v2985, 0
    %v2991 = vsel %vm1012, %v2977, 0
    %v2994 = vsel %vm1012, %v2978, 0
    %v2997 = vsel %vm1012, %v2979, 0
    %v3000 = vsel %vm1012, %v2980, 0
    %v3003 = vsel %vm1012, %v2981, 0
    %v3006 = vsel %vm1012, %v2982, 0
    %v3009 = vsel %vm1012, %v2983, 0
    %v3012 = vsel %vm1012, %v2984, 0
    %3014 = vmatprep.subr.mxu0 0.0
    %3015 = vmatpush1.msra.mxu0 0.0
    %3016 = vmatprep.subr.mxu0 0.0
    %3017 = vmatpush1.msra.mxu0 0.0
    %3018 = vmatprep.subr.mxu0 0.0
    %3019 = vmatpush1.msra.mxu0 0.0
    %3020 = vmatprep.subr.mxu0 0.0
    %3021 = vmatpush1.msra.mxu0 0.0
    %3022 = vmatprep.subr.mxu0 %v2994
    %3023 = vmatpush1.msra.mxu0 %v2991
    %3024 = vmatprep.subr.mxu0 %v2578
    %3025 = vmatpush1.msra.mxu0 %v2577
    %3026 = vmatprep.subr.mxu0 %v2900
    %3027 = vmatpush1.msra.mxu0 %v2898
    %3028 = vmatprep.subr.mxu0 %v2970
    %3029 = vmatpush1.msra.mxu0 %v2969
    %3030 = vmatprep.subr.mxu0 %v2962
    %3031 = vmatpush1.msra.mxu0 %v2961
    %3032 = vmatprep.subr.mxu0 %v2954
    %3033 = vmatpush1.msra.mxu0 %v2953
    %3034 = vmatprep.subr.mxu0 %v2277
    %3035 = vmatpush1.msra.mxu0 %v2276
    %3036 = vmatprep.subr.mxu0 %v2732
    %3037 = vmatpush1.msra.mxu0 %v2730
    %3038 = vmatprep.subr.mxu0 %v2946
    %3039 = vmatpush1.msra.mxu0 %v2945
    %3040 = vmatprep.subr.mxu0 %v2938
    %3041 = vmatpush1.msra.mxu0 %v2937
    %3042 = vmatprep.subr.mxu0 %v2930
    %3043 = vmatpush1.msra.mxu0 %v2929
    %3044 = vmatprep.subr.mxu0 %v1826
    %3045 = vmatpush1.msra.mxu0 %v1825
    %3046 = vmatprep.subr.mxu0 0.0
    %3047 = vmatpush2.msra.mxu0 0.0
    %3048 = vmatprep.subr.mxu0 0.0
    %3049 = vmatpush2.msra.mxu0 0.0
    %3050 = vmatprep.subr.mxu0 0.0
    %3051 = vmatpush2.msra.mxu0 0.0
    %3052 = vmatprep.subr.mxu0 0.0
    %3053 = vmatpush2.msra.mxu0 0.0
    %3054 = vmatprep.subr.mxu0 0.0
    %3055 = vmatpush2.msra.mxu0 0.0
    %3056 = vmatprep.subr.mxu0 0.0
    %3057 = vmatpush2.msra.mxu0 0.0
    %3058 = vmatprep.subr.mxu0 0.0
    %3059 = vmatpush2.msra.mxu0 0.0
    %3060 = vmatprep.subr.mxu0 0.0
    %3061 = vmatpush2.msra.mxu0 0.0
    %3062 = vmatprep.subr.mxu0 0.0
    %3063 = vmatpush2.msra.mxu0 0.0
    %3064 = vmatprep.subr.mxu0 0.0
    %3065 = vmatpush2.msra.mxu0 0.0
    %3066 = vmatprep.subr.mxu0 0.0
    %3067 = vmatpush2.msra.mxu0 0.0
    %3068 = vmatprep.subr.mxu0 0.0
    %3069 = vmatpush2.msra.mxu0 0.0
    %3070 = vmatprep.subr.mxu0 0.0
    %3071 = vmatpush2.msra.mxu0 0.0
    %3072 = vmatprep.subr.mxu0 0.0
    %3073 = vmatpush2.msra.mxu0 0.0
    %3074 = vmatprep.subr.mxu0 0.0
    %3075 = vmatpush2.msra.mxu0 0.0
    %3076 = vmatprep.subr.mxu0 0.0
    %3077 = vmatpush2.msra.mxu0 0.0
    %3078 = vmatprep.mubr.f32.mxu0 0.0
    %3079 = vmatmul.mubr.f32.gmra.mxu0 %v2988
    %v3080 = vpop.f32.mrf.mxu0
    %v3081 = vadd.f32 0.0, %v3080
    %v3082 = vpop.f32.mrf.mxu0
    %v3083 = vadd.f32 0.0, %v3082
    %3084 = vdwg.mxu0
    %3085 = vmatprep.subr.mxu0 0.0
    %3086 = vmatpush1.msra.mxu0 0.0
    %3087 = vmatprep.subr.mxu0 0.0
    %3088 = vmatpush1.msra.mxu0 0.0
    %3089 = vmatprep.subr.mxu0 0.0
    %3090 = vmatpush1.msra.mxu0 0.0
    %3091 = vmatprep.subr.mxu0 0.0
    %3092 = vmatpush1.msra.mxu0 0.0
    %3093 = vmatprep.subr.mxu0 %v3000
    %3094 = vmatpush1.msra.mxu0 %v2997
    %3095 = vmatprep.subr.mxu0 %v2580
    %3096 = vmatpush1.msra.mxu0 %v2579
    %3097 = vmatprep.subr.mxu0 %v2904
    %3098 = vmatpush1.msra.mxu0 %v2902
    %3099 = vmatprep.subr.mxu0 %v2972
    %3100 = vmatpush1.msra.mxu0 %v2971
    %3101 = vmatprep.subr.mxu0 %v2964
    %3102 = vmatpush1.msra.mxu0 %v2963
    %3103 = vmatprep.subr.mxu0 %v2956
    %3104 = vmatpush1.msra.mxu0 %v2955
    %3105 = vmatprep.subr.mxu0 %v2279
    %3106 = vmatpush1.msra.mxu0 %v2278
    %3107 = vmatprep.subr.mxu0 %v2736
    %3108 = vmatpush1.msra.mxu0 %v2734
    %3109 = vmatprep.subr.mxu0 %v2948
    %3110 = vmatpush1.msra.mxu0 %v2947
    %3111 = vmatprep.subr.mxu0 %v2940
    %3112 = vmatpush1.msra.mxu0 %v2939
    %3113 = vmatprep.subr.mxu0 %v2932
    %3114 = vmatpush1.msra.mxu0 %v2931
    %3115 = vmatprep.subr.mxu0 %v1828
    %3116 = vmatpush1.msra.mxu0 %v1827
    %3117 = vmatprep.subr.mxu0 0.0
    %3118 = vmatpush2.msra.mxu0 0.0
    %3119 = vmatprep.subr.mxu0 0.0
    %3120 = vmatpush2.msra.mxu0 0.0
    %3121 = vmatprep.subr.mxu0 0.0
    %3122 = vmatpush2.msra.mxu0 0.0
    %3123 = vmatprep.subr.mxu0 0.0
    %3124 = vmatpush2.msra.mxu0 0.0
    %3125 = vmatprep.subr.mxu0 0.0
    %3126 = vmatpush2.msra.mxu0 0.0
    %3127 = vmatprep.subr.mxu0 0.0
    %3128 = vmatpush2.msra.mxu0 0.0
    %3129 = vmatprep.subr.mxu0 0.0
    %3130 = vmatpush2.msra.mxu0 0.0
    %3131 = vmatprep.subr.mxu0 0.0
    %3132 = vmatpush2.msra.mxu0 0.0
    %3133 = vmatprep.subr.mxu0 0.0
    %3134 = vmatpush2.msra.mxu0 0.0
    %3135 = vmatprep.subr.mxu0 0.0
    %3136 = vmatpush2.msra.mxu0 0.0
    %3137 = vmatprep.subr.mxu0 0.0
    %3138 = vmatpush2.msra.mxu0 0.0
    %3139 = vmatprep.subr.mxu0 0.0
    %3140 = vmatpush2.msra.mxu0 0.0
    %3141 = vmatprep.subr.mxu0 0.0
    %3142 = vmatpush2.msra.mxu0 0.0
    %3143 = vmatprep.subr.mxu0 0.0
    %3144 = vmatpush2.msra.mxu0 0.0
    %3145 = vmatprep.subr.mxu0 0.0
    %3146 = vmatpush2.msra.mxu0 0.0
    %3147 = vmatprep.subr.mxu0 0.0
    %3148 = vmatpush2.msra.mxu0 0.0
    %3149 = vmatprep.mubr.f32.mxu0 0.0
    %3150 = vmatmul.mubr.f32.gmra.mxu0 %v2988
    %v3151 = vpop.f32.mrf.mxu0
    %v3152 = vadd.f32 0.0, %v3151
    %v3153 = vpop.f32.mrf.mxu0
    %v3154 = vadd.f32 0.0, %v3153
    %3155 = vdwg.mxu0
    %3156 = vmatprep.subr.mxu0 0.0
    %3157 = vmatpush1.msra.mxu0 0.0
    %3158 = vmatprep.subr.mxu0 0.0
    %3159 = vmatpush1.msra.mxu0 0.0
    %3160 = vmatprep.subr.mxu0 0.0
    %3161 = vmatpush1.msra.mxu0 0.0
    %3162 = vmatprep.subr.mxu0 0.0
    %3163 = vmatpush1.msra.mxu0 0.0
    %3164 = vmatprep.subr.mxu0 %v3006
    %3165 = vmatpush1.msra.mxu0 %v3003
    %3166 = vmatprep.subr.mxu0 %v2582
    %3167 = vmatpush1.msra.mxu0 %v2581
    %3168 = vmatprep.subr.mxu0 %v2908
    %3169 = vmatpush1.msra.mxu0 %v2906
    %3170 = vmatprep.subr.mxu0 %v2974
    %3171 = vmatpush1.msra.mxu0 %v2973
    %3172 = vmatprep.subr.mxu0 %v2966
    %3173 = vmatpush1.msra.mxu0 %v2965
    %3174 = vmatprep.subr.mxu0 %v2958
    %3175 = vmatpush1.msra.mxu0 %v2957
    %3176 = vmatprep.subr.mxu0 %v2281
    %3177 = vmatpush1.msra.mxu0 %v2280
    %3178 = vmatprep.subr.mxu0 %v2740
    %3179 = vmatpush1.msra.mxu0 %v2738
    %3180 = vmatprep.subr.mxu0 %v2950
    %3181 = vmatpush1.msra.mxu0 %v2949
    %3182 = vmatprep.subr.mxu0 %v2942
    %3183 = vmatpush1.msra.mxu0 %v2941
    %3184 = vmatprep.subr.mxu0 %v2934
    %3185 = vmatpush1.msra.mxu0 %v2933
    %3186 = vmatprep.subr.mxu0 %v1830
    %3187 = vmatpush1.msra.mxu0 %v1829
    %3188 = vmatprep.subr.mxu0 0.0
    %3189 = vmatpush2.msra.mxu0 0.0
    %3190 = vmatprep.subr.mxu0 0.0
    %3191 = vmatpush2.msra.mxu0 0.0
    %3192 = vmatprep.subr.mxu0 0.0
    %3193 = vmatpush2.msra.mxu0 0.0
    %3194 = vmatprep.subr.mxu0 0.0
    %3195 = vmatpush2.msra.mxu0 0.0
    %3196 = vmatprep.subr.mxu0 0.0
    %3197 = vmatpush2.msra.mxu0 0.0
    %3198 = vmatprep.subr.mxu0 0.0
    %3199 = vmatpush2.msra.mxu0 0.0
    %3200 = vmatprep.subr.mxu0 0.0
    %3201 = vmatpush2.msra.mxu0 0.0
    %3202 = vmatprep.subr.mxu0 0.0
    %3203 = vmatpush2.msra.mxu0 0.0
    %3204 = vmatprep.subr.mxu0 0.0
    %3205 = vmatpush2.msra.mxu0 0.0
    %3206 = vmatprep.subr.mxu0 0.0
    %3207 = vmatpush2.msra.mxu0 0.0
    %3208 = vmatprep.subr.mxu0 0.0
    %3209 = vmatpush2.msra.mxu0 0.0
    %3210 = vmatprep.subr.mxu0 0.0
    %3211 = vmatpush2.msra.mxu0 0.0
    %3212 = vmatprep.subr.mxu0 0.0
    %3213 = vmatpush2.msra.mxu0 0.0
    %3214 = vmatprep.subr.mxu0 0.0
    %3215 = vmatpush2.msra.mxu0 0.0
    %3216 = vmatprep.subr.mxu0 0.0
    %3217 = vmatpush2.msra.mxu0 0.0
    %3218 = vmatprep.subr.mxu0 0.0
    %3219 = vmatpush2.msra.mxu0 0.0
    %3220 = vmatprep.mubr.f32.mxu0 0.0
    %3221 = vmatmul.mubr.f32.gmra.mxu0 %v2988
    %v3222 = vpop.f32.mrf.mxu0
    %v3223 = vadd.f32 0.0, %v3222
    %v3224 = vpop.f32.mrf.mxu0
    %v3225 = vadd.f32 0.0, %v3224
    %3226 = vdwg.mxu0
    %3227 = vmatprep.subr.mxu0 0.0
    %3228 = vmatpush1.msra.mxu0 0.0
    %3229 = vmatprep.subr.mxu0 0.0
    %3230 = vmatpush1.msra.mxu0 0.0
    %3231 = vmatprep.subr.mxu0 0.0
    %3232 = vmatpush1.msra.mxu0 0.0
    %3233 = vmatprep.subr.mxu0 0.0
    %3234 = vmatpush1.msra.mxu0 0.0
    %3235 = vmatprep.subr.mxu0 %v3012
    %3236 = vmatpush1.msra.mxu0 %v3009
    %3237 = vmatprep.subr.mxu0 %v2584
    %3238 = vmatpush1.msra.mxu0 %v2583
    %3239 = vmatprep.subr.mxu0 %v2912
    %3240 = vmatpush1.msra.mxu0 %v2910
    %3241 = vmatprep.subr.mxu0 %v2976
    %3242 = vmatpush1.msra.mxu0 %v2975
    %3243 = vmatprep.subr.mxu0 %v2968
    %3244 = vmatpush1.msra.mxu0 %v2967
    %3245 = vmatprep.subr.mxu0 %v2960
    %3246 = vmatpush1.msra.mxu0 %v2959
    %3247 = vmatprep.subr.mxu0 %v2283
    %3248 = vmatpush1.msra.mxu0 %v2282
    %3249 = vmatprep.subr.mxu0 %v2744
    %3250 = vmatpush1.msra.mxu0 %v2742
    %3251 = vmatprep.subr.mxu0 %v2952
    %3252 = vmatpush1.msra.mxu0 %v2951
    %3253 = vmatprep.subr.mxu0 %v2944
    %3254 = vmatpush1.msra.mxu0 %v2943
    %3255 = vmatprep.subr.mxu0 %v2936
    %3256 = vmatpush1.msra.mxu0 %v2935
    %3257 = vmatprep.subr.mxu0 %v1832
    %3258 = vmatpush1.msra.mxu0 %v1831
    %3259 = vmatprep.subr.mxu0 0.0
    %3260 = vmatpush2.msra.mxu0 0.0
    %3261 = vmatprep.subr.mxu0 0.0
    %3262 = vmatpush2.msra.mxu0 0.0
    %3263 = vmatprep.subr.mxu0 0.0
    %3264 = vmatpush2.msra.mxu0 0.0
    %3265 = vmatprep.subr.mxu0 0.0
    %3266 = vmatpush2.msra.mxu0 0.0
    %3267 = vmatprep.subr.mxu0 0.0
    %3268 = vmatpush2.msra.mxu0 0.0
    %3269 = vmatprep.subr.mxu0 0.0
    %3270 = vmatpush2.msra.mxu0 0.0
    %3271 = vmatprep.subr.mxu0 0.0
    %3272 = vmatpush2.msra.mxu0 0.0
    %3273 = vmatprep.subr.mxu0 0.0
    %3274 = vmatpush2.msra.mxu0 0.0
    %3275 = vmatprep.subr.mxu0 0.0
    %3276 = vmatpush2.msra.mxu0 0.0
    %3277 = vmatprep.subr.mxu0 0.0
    %3278 = vmatpush2.msra.mxu0 0.0
    %3279 = vmatprep.subr.mxu0 0.0
    %3280 = vmatpush2.msra.mxu0 0.0
    %3281 = vmatprep.subr.mxu0 0.0
    %3282 = vmatpush2.msra.mxu0 0.0
    %3283 = vmatprep.subr.mxu0 0.0
    %3284 = vmatpush2.msra.mxu0 0.0
    %3285 = vmatprep.subr.mxu0 0.0
    %3286 = vmatpush2.msra.mxu0 0.0
    %3287 = vmatprep.subr.mxu0 0.0
    %3288 = vmatpush2.msra.mxu0 0.0
    %3289 = vmatprep.subr.mxu0 0.0
    %3290 = vmatpush2.msra.mxu0 0.0
    %3291 = vmatprep.mubr.f32.mxu0 0.0
    %3292 = vmatmul.mubr.f32.gmra.mxu0 %v2988
    %v3293 = vpop.f32.mrf.mxu0
    %v3294 = vadd.f32 0.0, %v3293
    %v3295 = vpop.f32.mrf.mxu0
    %v3296 = vadd.f32 0.0, %v3295
    %3297 = vdwg.mxu0
    %3306 = vrot.lane.b32.xlu0 %v3081, 126
    %v3307 = vpop.permute.xlu0 %3306
    %3308 = vrot.lane.b32.xlu0 %v3083, 126
    %v3309 = vpop.permute.xlu0 %3308
    %3310 = vrot.lane.b32.xlu0 %v3152, 126
    %v3311 = vpop.permute.xlu0 %3310
    %3312 = vrot.lane.b32.xlu0 %v3154, 126
    %v3313 = vpop.permute.xlu0 %3312
    %3314 = vrot.lane.b32.xlu0 %v3223, 126
    %v3315 = vpop.permute.xlu0 %3314
    %3316 = vrot.lane.b32.xlu0 %v3225, 126
    %v3317 = vpop.permute.xlu0 %3316
    %3318 = vrot.lane.b32.xlu0 %v3294, 126
    %v3319 = vpop.permute.xlu0 %3318
    %3320 = vrot.lane.b32.xlu0 %v3296, 126
    %v3321 = vpop.permute.xlu0 %3320
    %v3322 = vsel %vm2324, %v3307, %v3309
    %v3323 = vsel %vm2324, %v3309, %v3311
    %v3324 = vsel %vm2324, %v3311, %v3313
    %v3325 = vsel %vm2324, %v3313, %v3315
    %v3326 = vsel %vm2324, %v3315, %v3317
    %v3327 = vsel %vm2324, %v3317, %v3319
    %v3328 = vsel %vm2324, %v3319, %v3321
    %v3337 = vsel %vm2324, %v3321, 0.0
    %v3338 = vmax.f32 %v3081, %v3322
    %v3339 = vmax.f32 %v3083, %v3323
    %v3340 = vmax.f32 %v3152, %v3324
    %v3341 = vmax.f32 %v3154, %v3325
    %v3342 = vmax.f32 %v3223, %v3326
    %v3343 = vmax.f32 %v3225, %v3327
    %v3344 = vmax.f32 %v3294, %v3328
    %v3345 = vmax.f32 %v3296, %v3337
    %3354 = vrot.lane.b32.xlu0 %v3338, 64
    %v3355 = vpop.permute.xlu0 %3354
    %3356 = vrot.lane.b32.xlu0 %v3339, 64
    %v3357 = vpop.permute.xlu0 %3356
    %3358 = vrot.lane.b32.xlu0 %v3340, 64
    %v3359 = vpop.permute.xlu0 %3358
    %3360 = vrot.lane.b32.xlu0 %v3341, 64
    %v3361 = vpop.permute.xlu0 %3360
    %3362 = vrot.lane.b32.xlu0 %v3342, 64
    %v3363 = vpop.permute.xlu0 %3362
    %3364 = vrot.lane.b32.xlu0 %v3343, 64
    %v3365 = vpop.permute.xlu0 %3364
    %3366 = vrot.lane.b32.xlu0 %v3344, 64
    %v3367 = vpop.permute.xlu0 %3366
    %3368 = vrot.lane.b32.xlu0 %v3345, 64
    %v3369 = vpop.permute.xlu0 %3368
    %v3370 = vsel %vm1873, %v3355, %v3357
    %v3371 = vsel %vm1873, %v3357, %v3359
    %v3372 = vsel %vm1873, %v3359, %v3361
    %v3373 = vsel %vm1873, %v3361, %v3363
    %v3374 = vsel %vm1873, %v3363, %v3365
    %v3375 = vsel %vm1873, %v3365, %v3367
    %v3376 = vsel %vm1873, %v3367, %v3369
    %v3385 = vsel %vm1873, %v3369, 0.0
    %v3386 = vmax.f32 %v3338, %v3370
    %v3387 = vmax.f32 %v3339, %v3371
    %v3388 = vmax.f32 %v3340, %v3372
    %v3389 = vmax.f32 %v3341, %v3373
    %v3390 = vmax.f32 %v3342, %v3374
    %v3391 = vmax.f32 %v3343, %v3375
    %v3392 = vmax.f32 %v3344, %v3376
    %v3393 = vmax.f32 %v3345, %v3385
    %v3394 = vmax.f32 %v3386, 0.0
    %v3395 = vmax.f32 %v3387, 0.0
    %v3396 = vmax.f32 %v3388, 0.0
    %v3397 = vmax.f32 %v3389, 0.0
    %v3398 = vmax.f32 %v3390, 0.0
    %v3399 = vmax.f32 %v3391, 0.0
    %v3400 = vmax.f32 %v3392, 0.0
    %v3401 = vmax.f32 %v3393, 0.0
    %v3410 = vrot.slane %v3394, 1
    %v3411 = vrot.slane %v3395, 1
    %v3412 = vrot.slane %v3396, 1
    %v3413 = vrot.slane %v3397, 1
    %v3414 = vrot.slane %v3398, 1
    %v3415 = vrot.slane %v3399, 1
    %v3416 = vrot.slane %v3400, 1
    %v3417 = vrot.slane %v3401, 1
    %v3426 = vld [vmem:[%s3] sm:$0xff]
    %v3427 = vld [vmem:[%s3 + $0x8] sm:$0xff]
    %v3428 = vld [vmem:[%s3 + $0x10] sm:$0xff]
    %v3429 = vld [vmem:[%s3 + $0x18] sm:$0xff]
    %v3430 = vld [vmem:[%s3 + $0x20] sm:$0xff]
    %v3431 = vld [vmem:[%s3 + $0x28] sm:$0xff]
    %v3432 = vld [vmem:[%s3 + $0x30] sm:$0xff]
    %v3433 = vld [vmem:[%s3 + $0x38] sm:$0xff]
    %v3434 = vld [vmem:[%s3 + $0x40] sm:$0xff]
    %v3435 = vld [vmem:[%s3 + $0x48] sm:$0xff]
    %v3436 = vld [vmem:[%s3 + $0x50] sm:$0xff]
    %v3437 = vld [vmem:[%s3 + $0x58] sm:$0xff]
    %v3438 = vld [vmem:[%s3 + $0x60] sm:$0xff]
    %v3439 = vld [vmem:[%s3 + $0x68] sm:$0xff]
    %v3440 = vld [vmem:[%s3 + $0x70] sm:$0xff]
    %v3441 = vld [vmem:[%s3 + $0x78] sm:$0xff]
    %v3442 = vld [vmem:[%s3 + $0x80] sm:$0xff]
    %v3443 = vld [vmem:[%s3 + $0x88] sm:$0xff]
    %v3444 = vld [vmem:[%s3 + $0x90] sm:$0xff]
    %v3445 = vld [vmem:[%s3 + $0x98] sm:$0xff]
    %v3446 = vld [vmem:[%s3 + $0xa0] sm:$0xff]
    %v3447 = vld [vmem:[%s3 + $0xa8] sm:$0xff]
    %v3448 = vld [vmem:[%s3 + $0xb0] sm:$0xff]
    %v3449 = vld [vmem:[%s3 + $0xb8] sm:$0xff]
    %v3450 = vld [vmem:[%s3 + $0xc0] sm:$0xff]
    %v3451 = vld [vmem:[%s3 + $0xc8] sm:$0xff]
    %v3452 = vld [vmem:[%s3 + $0xd0] sm:$0xff]
    %v3453 = vld [vmem:[%s3 + $0xd8] sm:$0xff]
    %v3454 = vld [vmem:[%s3 + $0xe0] sm:$0xff]
    %v3455 = vld [vmem:[%s3 + $0xe8] sm:$0xff]
    %v3456 = vld [vmem:[%s3 + $0xf0] sm:$0xff]
    %v3457 = vld [vmem:[%s3 + $0xf8] sm:$0xff]
    %v3458 = vld [vmem:[%s3 + $0x100] sm:$0xff]
    %v3459 = vld [vmem:[%s3 + $0x108] sm:$0xff]
    %v3460 = vld [vmem:[%s3 + $0x110] sm:$0xff]
    %v3461 = vld [vmem:[%s3 + $0x118] sm:$0xff]
    %v3462 = vld [vmem:[%s3 + $0x120] sm:$0xff]
    %v3463 = vld [vmem:[%s3 + $0x128] sm:$0xff]
    %v3464 = vld [vmem:[%s3 + $0x130] sm:$0xff]
    %v3465 = vld [vmem:[%s3 + $0x138] sm:$0xff]
    %v3466 = vld [vmem:[%s3 + $0x140] sm:$0xff]
    %v3467 = vld [vmem:[%s3 + $0x148] sm:$0xff]
    %v3468 = vld [vmem:[%s3 + $0x150] sm:$0xff]
    %v3469 = vld [vmem:[%s3 + $0x158] sm:$0xff]
    %v3470 = vld [vmem:[%s3 + $0x160] sm:$0xff]
    %v3471 = vld [vmem:[%s3 + $0x168] sm:$0xff]
    %v3472 = vld [vmem:[%s3 + $0x170] sm:$0xff]
    %v3473 = vld [vmem:[%s3 + $0x178] sm:$0xff]
    %v3474 = vld [vmem:[%s3 + $0x180] sm:$0xff]
    %v3475 = vld [vmem:[%s3 + $0x188] sm:$0xff]
    %v3476 = vld [vmem:[%s3 + $0x190] sm:$0xff]
    %v3477 = vld [vmem:[%s3 + $0x198] sm:$0xff]
    %v3478 = vld [vmem:[%s3 + $0x1a0] sm:$0xff]
    %v3479 = vld [vmem:[%s3 + $0x1a8] sm:$0xff]
    %v3480 = vld [vmem:[%s3 + $0x1b0] sm:$0xff]
    %v3481 = vld [vmem:[%s3 + $0x1b8] sm:$0xff]
    %v3482 = vld [vmem:[%s3 + $0x1c0] sm:$0xff]
    %v3483 = vld [vmem:[%s3 + $0x1c8] sm:$0xff]
    %v3484 = vld [vmem:[%s3 + $0x1d0] sm:$0xff]
    %v3485 = vld [vmem:[%s3 + $0x1d8] sm:$0xff]
    %v3486 = vld [vmem:[%s3 + $0x1e0] sm:$0xff]
    %v3487 = vld [vmem:[%s3 + $0x1e8] sm:$0xff]
    %v3488 = vld [vmem:[%s3 + $0x1f0] sm:$0xff]
    %v3489 = vld [vmem:[%s3 + $0x1f8] sm:$0xff]
    %v3490 = vld [vmem:[%s3 + $0x200] sm:$0xff]
    %v3491 = vld [vmem:[%s3 + $0x208] sm:$0xff]
    %v3492 = vld [vmem:[%s3 + $0x210] sm:$0xff]
    %v3493 = vld [vmem:[%s3 + $0x218] sm:$0xff]
    %v3494 = vld [vmem:[%s3 + $0x220] sm:$0xff]
    %v3495 = vld [vmem:[%s3 + $0x228] sm:$0xff]
    %v3496 = vld [vmem:[%s3 + $0x230] sm:$0xff]
    %v3497 = vld [vmem:[%s3 + $0x238] sm:$0xff]
    %v3498 = vld [vmem:[%s3 + $0x240] sm:$0xff]
    %v3499 = vld [vmem:[%s3 + $0x248] sm:$0xff]
    %v3500 = vld [vmem:[%s3 + $0x250] sm:$0xff]
    %v3501 = vld [vmem:[%s3 + $0x258] sm:$0xff]
    %v3502 = vld [vmem:[%s3 + $0x260] sm:$0xff]
    %v3503 = vld [vmem:[%s3 + $0x268] sm:$0xff]
    %v3504 = vld [vmem:[%s3 + $0x270] sm:$0xff]
    %v3505 = vld [vmem:[%s3 + $0x278] sm:$0xff]
    %v3506 = vld [vmem:[%s3 + $0x280] sm:$0xff]
    %v3507 = vld [vmem:[%s3 + $0x288] sm:$0xff]
    %v3508 = vld [vmem:[%s3 + $0x290] sm:$0xff]
    %v3509 = vld [vmem:[%s3 + $0x298] sm:$0xff]
    %v3510 = vld [vmem:[%s3 + $0x2a0] sm:$0xff]
    %v3511 = vld [vmem:[%s3 + $0x2a8] sm:$0xff]
    %v3512 = vld [vmem:[%s3 + $0x2b0] sm:$0xff]
    %v3513 = vld [vmem:[%s3 + $0x2b8] sm:$0xff]
    %v3514 = vld [vmem:[%s3 + $0x2c0] sm:$0xff]
    %v3515 = vld [vmem:[%s3 + $0x2c8] sm:$0xff]
    %v3516 = vld [vmem:[%s3 + $0x2d0] sm:$0xff]
    %v3517 = vld [vmem:[%s3 + $0x2d8] sm:$0xff]
    %v3518 = vld [vmem:[%s3 + $0x2e0] sm:$0xff]
    %v3519 = vld [vmem:[%s3 + $0x2e8] sm:$0xff]
    %v3520 = vld [vmem:[%s3 + $0x2f0] sm:$0xff]
    %v3521 = vld [vmem:[%s3 + $0x2f8] sm:$0xff]
    %v3522 = vld [vmem:[%s3 + $0x300] sm:$0xff]
    %v3523 = vld [vmem:[%s3 + $0x308] sm:$0xff]
    %v3524 = vld [vmem:[%s3 + $0x310] sm:$0xff]
    %v3525 = vld [vmem:[%s3 + $0x318] sm:$0xff]
    %v3526 = vld [vmem:[%s3 + $0x320] sm:$0xff]
    %v3527 = vld [vmem:[%s3 + $0x328] sm:$0xff]
    %v3528 = vld [vmem:[%s3 + $0x330] sm:$0xff]
    %v3529 = vld [vmem:[%s3 + $0x338] sm:$0xff]
    %v3530 = vld [vmem:[%s3 + $0x340] sm:$0xff]
    %v3531 = vld [vmem:[%s3 + $0x348] sm:$0xff]
    %v3532 = vld [vmem:[%s3 + $0x350] sm:$0xff]
    %v3533 = vld [vmem:[%s3 + $0x358] sm:$0xff]
    %v3534 = vld [vmem:[%s3 + $0x360] sm:$0xff]
    %v3535 = vld [vmem:[%s3 + $0x368] sm:$0xff]
    %v3536 = vld [vmem:[%s3 + $0x370] sm:$0xff]
    %v3537 = vld [vmem:[%s3 + $0x378] sm:$0xff]
    %v3538 = vld [vmem:[%s3 + $0x380] sm:$0xff]
    %v3539 = vld [vmem:[%s3 + $0x388] sm:$0xff]
    %v3540 = vld [vmem:[%s3 + $0x390] sm:$0xff]
    %v3541 = vld [vmem:[%s3 + $0x398] sm:$0xff]
    %v3542 = vld [vmem:[%s3 + $0x3a0] sm:$0xff]
    %v3543 = vld [vmem:[%s3 + $0x3a8] sm:$0xff]
    %v3544 = vld [vmem:[%s3 + $0x3b0] sm:$0xff]
    %v3545 = vld [vmem:[%s3 + $0x3b8] sm:$0xff]
    %v3546 = vld [vmem:[%s3 + $0x3c0] sm:$0xff]
    %v3547 = vld [vmem:[%s3 + $0x3c8] sm:$0xff]
    %v3548 = vld [vmem:[%s3 + $0x3d0] sm:$0xff]
    %v3549 = vld [vmem:[%s3 + $0x3d8] sm:$0xff]
    %v3550 = vld [vmem:[%s3 + $0x3e0] sm:$0xff]
    %v3551 = vld [vmem:[%s3 + $0x3e8] sm:$0xff]
    %v3552 = vld [vmem:[%s3 + $0x3f0] sm:$0xff]
    %v3553 = vld [vmem:[%s3 + $0x3f8] sm:$0xff]
    %v3554 = vld [vmem:[%s3 + $0x400] sm:$0xff]
    %v3555 = vld [vmem:[%s3 + $0x408] sm:$0xff]
    %v3556 = vld [vmem:[%s3 + $0x410] sm:$0xff]
    %v3557 = vld [vmem:[%s3 + $0x418] sm:$0xff]
    %v3558 = vld [vmem:[%s3 + $0x420] sm:$0xff]
    %v3559 = vld [vmem:[%s3 + $0x428] sm:$0xff]
    %v3560 = vld [vmem:[%s3 + $0x430] sm:$0xff]
    %v3561 = vld [vmem:[%s3 + $0x438] sm:$0xff]
    %v3562 = vld [vmem:[%s3 + $0x440] sm:$0xff]
    %v3563 = vld [vmem:[%s3 + $0x448] sm:$0xff]
    %v3564 = vld [vmem:[%s3 + $0x450] sm:$0xff]
    %v3565 = vld [vmem:[%s3 + $0x458] sm:$0xff]
    %v3566 = vld [vmem:[%s3 + $0x460] sm:$0xff]
    %v3567 = vld [vmem:[%s3 + $0x468] sm:$0xff]
    %v3568 = vld [vmem:[%s3 + $0x470] sm:$0xff]
    %v3569 = vld [vmem:[%s3 + $0x478] sm:$0xff]
    %v3570 = vld [vmem:[%s3 + $0x480] sm:$0xff]
    %v3571 = vld [vmem:[%s3 + $0x488] sm:$0xff]
    %v3572 = vld [vmem:[%s3 + $0x490] sm:$0xff]
    %v3573 = vld [vmem:[%s3 + $0x498] sm:$0xff]
    %v3574 = vld [vmem:[%s3 + $0x4a0] sm:$0xff]
    %v3575 = vld [vmem:[%s3 + $0x4a8] sm:$0xff]
    %v3576 = vld [vmem:[%s3 + $0x4b0] sm:$0xff]
    %v3577 = vld [vmem:[%s3 + $0x4b8] sm:$0xff]
    %v3578 = vld [vmem:[%s3 + $0x4c0] sm:$0xff]
    %v3579 = vld [vmem:[%s3 + $0x4c8] sm:$0xff]
    %v3580 = vld [vmem:[%s3 + $0x4d0] sm:$0xff]
    %v3581 = vld [vmem:[%s3 + $0x4d8] sm:$0xff]
    %v3582 = vld [vmem:[%s3 + $0x4e0] sm:$0xff]
    %v3583 = vld [vmem:[%s3 + $0x4e8] sm:$0xff]
    %v3584 = vld [vmem:[%s3 + $0x4f0] sm:$0xff]
    %v3585 = vld [vmem:[%s3 + $0x4f8] sm:$0xff]
    %v3586 = vld [vmem:[%s3 + $0x500] sm:$0xff]
    %v3587 = vld [vmem:[%s3 + $0x508] sm:$0xff]
    %v3588 = vld [vmem:[%s3 + $0x510] sm:$0xff]
    %v3589 = vld [vmem:[%s3 + $0x518] sm:$0xff]
    %v3590 = vld [vmem:[%s3 + $0x520] sm:$0xff]
    %v3591 = vld [vmem:[%s3 + $0x528] sm:$0xff]
    %v3592 = vld [vmem:[%s3 + $0x530] sm:$0xff]
    %v3593 = vld [vmem:[%s3 + $0x538] sm:$0xff]
    %v3594 = vld [vmem:[%s3 + $0x540] sm:$0xff]
    %v3595 = vld [vmem:[%s3 + $0x548] sm:$0xff]
    %v3596 = vld [vmem:[%s3 + $0x550] sm:$0xff]
    %v3597 = vld [vmem:[%s3 + $0x558] sm:$0xff]
    %v3598 = vld [vmem:[%s3 + $0x560] sm:$0xff]
    %v3599 = vld [vmem:[%s3 + $0x568] sm:$0xff]
    %v3600 = vld [vmem:[%s3 + $0x570] sm:$0xff]
    %v3601 = vld [vmem:[%s3 + $0x578] sm:$0xff]
    %v3602 = vld [vmem:[%s3 + $0x580] sm:$0xff]
    %v3603 = vld [vmem:[%s3 + $0x588] sm:$0xff]
    %v3604 = vld [vmem:[%s3 + $0x590] sm:$0xff]
    %v3605 = vld [vmem:[%s3 + $0x598] sm:$0xff]
    %v3606 = vld [vmem:[%s3 + $0x5a0] sm:$0xff]
    %v3607 = vld [vmem:[%s3 + $0x5a8] sm:$0xff]
    %v3608 = vld [vmem:[%s3 + $0x5b0] sm:$0xff]
    %v3609 = vld [vmem:[%s3 + $0x5b8] sm:$0xff]
    %v3610 = vld [vmem:[%s3 + $0x5c0] sm:$0xff]
    %v3611 = vld [vmem:[%s3 + $0x5c8] sm:$0xff]
    %v3612 = vld [vmem:[%s3 + $0x5d0] sm:$0xff]
    %v3613 = vld [vmem:[%s3 + $0x5d8] sm:$0xff]
    %v3614 = vld [vmem:[%s3 + $0x5e0] sm:$0xff]
    %v3615 = vld [vmem:[%s3 + $0x5e8] sm:$0xff]
    %v3616 = vld [vmem:[%s3 + $0x5f0] sm:$0xff]
    %v3617 = vld [vmem:[%s3 + $0x5f8] sm:$0xff]
    %v3618 = vld [vmem:[%s3 + $0x600] sm:$0xff]
    %v3619 = vld [vmem:[%s3 + $0x608] sm:$0xff]
    %v3620 = vld [vmem:[%s3 + $0x610] sm:$0xff]
    %v3621 = vld [vmem:[%s3 + $0x618] sm:$0xff]
    %v3622 = vld [vmem:[%s3 + $0x620] sm:$0xff]
    %v3623 = vld [vmem:[%s3 + $0x628] sm:$0xff]
    %v3624 = vld [vmem:[%s3 + $0x630] sm:$0xff]
    %v3625 = vld [vmem:[%s3 + $0x638] sm:$0xff]
    %v3626 = vld [vmem:[%s3 + $0x640] sm:$0xff]
    %v3627 = vld [vmem:[%s3 + $0x648] sm:$0xff]
    %v3628 = vld [vmem:[%s3 + $0x650] sm:$0xff]
    %v3629 = vld [vmem:[%s3 + $0x658] sm:$0xff]
    %v3630 = vld [vmem:[%s3 + $0x660] sm:$0xff]
    %v3631 = vld [vmem:[%s3 + $0x668] sm:$0xff]
    %v3632 = vld [vmem:[%s3 + $0x670] sm:$0xff]
    %v3633 = vld [vmem:[%s3 + $0x678] sm:$0xff]
    %v3634 = vld [vmem:[%s3 + $0x680] sm:$0xff]
    %v3635 = vld [vmem:[%s3 + $0x688] sm:$0xff]
    %v3636 = vld [vmem:[%s3 + $0x690] sm:$0xff]
    %v3637 = vld [vmem:[%s3 + $0x698] sm:$0xff]
    %v3638 = vld [vmem:[%s3 + $0x6a0] sm:$0xff]
    %v3639 = vld [vmem:[%s3 + $0x6a8] sm:$0xff]
    %v3640 = vld [vmem:[%s3 + $0x6b0] sm:$0xff]
    %v3641 = vld [vmem:[%s3 + $0x6b8] sm:$0xff]
    %v3642 = vld [vmem:[%s3 + $0x6c0] sm:$0xff]
    %v3643 = vld [vmem:[%s3 + $0x6c8] sm:$0xff]
    %v3644 = vld [vmem:[%s3 + $0x6d0] sm:$0xff]
    %v3645 = vld [vmem:[%s3 + $0x6d8] sm:$0xff]
    %v3646 = vld [vmem:[%s3 + $0x6e0] sm:$0xff]
    %v3647 = vld [vmem:[%s3 + $0x6e8] sm:$0xff]
    %v3648 = vld [vmem:[%s3 + $0x6f0] sm:$0xff]
    %v3649 = vld [vmem:[%s3 + $0x6f8] sm:$0xff]
    %v3650 = vld [vmem:[%s3 + $0x700] sm:$0xff]
    %v3651 = vld [vmem:[%s3 + $0x708] sm:$0xff]
    %v3652 = vld [vmem:[%s3 + $0x710] sm:$0xff]
    %v3653 = vld [vmem:[%s3 + $0x718] sm:$0xff]
    %v3654 = vld [vmem:[%s3 + $0x720] sm:$0xff]
    %v3655 = vld [vmem:[%s3 + $0x728] sm:$0xff]
    %v3656 = vld [vmem:[%s3 + $0x730] sm:$0xff]
    %v3657 = vld [vmem:[%s3 + $0x738] sm:$0xff]
    %v3658 = vld [vmem:[%s3 + $0x740] sm:$0xff]
    %v3659 = vld [vmem:[%s3 + $0x748] sm:$0xff]
    %v3660 = vld [vmem:[%s3 + $0x750] sm:$0xff]
    %v3661 = vld [vmem:[%s3 + $0x758] sm:$0xff]
    %v3662 = vld [vmem:[%s3 + $0x760] sm:$0xff]
    %v3663 = vld [vmem:[%s3 + $0x768] sm:$0xff]
    %v3664 = vld [vmem:[%s3 + $0x770] sm:$0xff]
    %v3665 = vld [vmem:[%s3 + $0x778] sm:$0xff]
    %v3666 = vld [vmem:[%s3 + $0x780] sm:$0xff]
    %v3667 = vld [vmem:[%s3 + $0x788] sm:$0xff]
    %v3668 = vld [vmem:[%s3 + $0x790] sm:$0xff]
    %v3669 = vld [vmem:[%s3 + $0x798] sm:$0xff]
    %v3670 = vld [vmem:[%s3 + $0x7a0] sm:$0xff]
    %v3671 = vld [vmem:[%s3 + $0x7a8] sm:$0xff]
    %v3672 = vld [vmem:[%s3 + $0x7b0] sm:$0xff]
    %v3673 = vld [vmem:[%s3 + $0x7b8] sm:$0xff]
    %v3674 = vld [vmem:[%s3 + $0x7c0] sm:$0xff]
    %v3675 = vld [vmem:[%s3 + $0x7c8] sm:$0xff]
    %v3676 = vld [vmem:[%s3 + $0x7d0] sm:$0xff]
    %v3677 = vld [vmem:[%s3 + $0x7d8] sm:$0xff]
    %v3678 = vld [vmem:[%s3 + $0x7e0] sm:$0xff]
    %v3679 = vld [vmem:[%s3 + $0x7e8] sm:$0xff]
    %v3680 = vld [vmem:[%s3 + $0x7f0] sm:$0xff]
    %v3681 = vld [vmem:[%s3 + $0x7f8] sm:$0xff]
    %v3682 = vld [vmem:[%s4] sm:$0x1]
    %3683 = vmatprep.subr.mxu0 0.0
    %3684 = vmatpush1.msra.mxu0 %v3441
    %3685 = vmatprep.subr.mxu0 0.0
    %3686 = vmatpush1.msra.mxu0 %v3440
    %3687 = vmatprep.subr.mxu0 0.0
    %3688 = vmatpush1.msra.mxu0 %v3439
    %3689 = vmatprep.subr.mxu0 0.0
    %3690 = vmatpush1.msra.mxu0 %v3438
    %3691 = vmatprep.subr.mxu0 0.0
    %3692 = vmatpush1.msra.mxu0 %v3437
    %3693 = vmatprep.subr.mxu0 0.0
    %3694 = vmatpush1.msra.mxu0 %v3436
    %3695 = vmatprep.subr.mxu0 0.0
    %3696 = vmatpush1.msra.mxu0 %v3435
    %3697 = vmatprep.subr.mxu0 0.0
    %3698 = vmatpush1.msra.mxu0 %v3434
    %3699 = vmatprep.subr.mxu0 0.0
    %3700 = vmatpush1.msra.mxu0 %v3433
    %3701 = vmatprep.subr.mxu0 0.0
    %3702 = vmatpush1.msra.mxu0 %v3432
    %3703 = vmatprep.subr.mxu0 0.0
    %3704 = vmatpush1.msra.mxu0 %v3431
    %3705 = vmatprep.subr.mxu0 0.0
    %3706 = vmatpush1.msra.mxu0 %v3430
    %3707 = vmatprep.subr.mxu0 0.0
    %3708 = vmatpush1.msra.mxu0 %v3429
    %3709 = vmatprep.subr.mxu0 0.0
    %3710 = vmatpush1.msra.mxu0 %v3428
    %3711 = vmatprep.subr.mxu0 0.0
    %3712 = vmatpush1.msra.mxu0 %v3427
    %3713 = vmatprep.subr.mxu0 0.0
    %3714 = vmatpush1.msra.mxu0 %v3426
    %3715 = vmatprep.subr.mxu0 0.0
    %3716 = vmatpush2.msra.mxu0 %v3457
    %3717 = vmatprep.subr.mxu0 0.0
    %3718 = vmatpush2.msra.mxu0 %v3456
    %3719 = vmatprep.subr.mxu0 0.0
    %3720 = vmatpush2.msra.mxu0 %v3455
    %3721 = vmatprep.subr.mxu0 0.0
    %3722 = vmatpush2.msra.mxu0 %v3454
    %3723 = vmatprep.subr.mxu0 0.0
    %3724 = vmatpush2.msra.mxu0 %v3453
    %3725 = vmatprep.subr.mxu0 0.0
    %3726 = vmatpush2.msra.mxu0 %v3452
    %3727 = vmatprep.subr.mxu0 0.0
    %3728 = vmatpush2.msra.mxu0 %v3451
    %3729 = vmatprep.subr.mxu0 0.0
    %3730 = vmatpush2.msra.mxu0 %v3450
    %3731 = vmatprep.subr.mxu0 0.0
    %3732 = vmatpush2.msra.mxu0 %v3449
    %3733 = vmatprep.subr.mxu0 0.0
    %3734 = vmatpush2.msra.mxu0 %v3448
    %3735 = vmatprep.subr.mxu0 0.0
    %3736 = vmatpush2.msra.mxu0 %v3447
    %3737 = vmatprep.subr.mxu0 0.0
    %3738 = vmatpush2.msra.mxu0 %v3446
    %3739 = vmatprep.subr.mxu0 0.0
    %3740 = vmatpush2.msra.mxu0 %v3445
    %3741 = vmatprep.subr.mxu0 0.0
    %3742 = vmatpush2.msra.mxu0 %v3444
    %3743 = vmatprep.subr.mxu0 0.0
    %3744 = vmatpush2.msra.mxu0 %v3443
    %3745 = vmatprep.subr.mxu0 0.0
    %3746 = vmatpush2.msra.mxu0 %v3442
    %3747 = vmatprep.mubr.f32.mxu0 %v3395
    %3748 = vmatmul.mubr.f32.gmra.mxu0 %v3394
    %v3749 = vpop.f32.mrf.mxu0
    %v3750 = vadd.f32 %v3682, %v3749
    %v3751 = vpop.f32.mrf.mxu0
    %3752 = vdwg.mxu0
    %3753 = vmatprep.subr.mxu0 0.0
    %3754 = vmatpush1.msra.mxu0 %v3473
    %3755 = vmatprep.subr.mxu0 0.0
    %3756 = vmatpush1.msra.mxu0 %v3472
    %3757 = vmatprep.subr.mxu0 0.0
    %3758 = vmatpush1.msra.mxu0 %v3471
    %3759 = vmatprep.subr.mxu0 0.0
    %3760 = vmatpush1.msra.mxu0 %v3470
    %3761 = vmatprep.subr.mxu0 0.0
    %3762 = vmatpush1.msra.mxu0 %v3469
    %3763 = vmatprep.subr.mxu0 0.0
    %3764 = vmatpush1.msra.mxu0 %v3468
    %3765 = vmatprep.subr.mxu0 0.0
    %3766 = vmatpush1.msra.mxu0 %v3467
    %3767 = vmatprep.subr.mxu0 0.0
    %3768 = vmatpush1.msra.mxu0 %v3466
    %3769 = vmatprep.subr.mxu0 0.0
    %3770 = vmatpush1.msra.mxu0 %v3465
    %3771 = vmatprep.subr.mxu0 0.0
    %3772 = vmatpush1.msra.mxu0 %v3464
    %3773 = vmatprep.subr.mxu0 0.0
    %3774 = vmatpush1.msra.mxu0 %v3463
    %3775 = vmatprep.subr.mxu0 0.0
    %3776 = vmatpush1.msra.mxu0 %v3462
    %3777 = vmatprep.subr.mxu0 0.0
    %3778 = vmatpush1.msra.mxu0 %v3461
    %3779 = vmatprep.subr.mxu0 0.0
    %3780 = vmatpush1.msra.mxu0 %v3460
    %3781 = vmatprep.subr.mxu0 0.0
    %3782 = vmatpush1.msra.mxu0 %v3459
    %3783 = vmatprep.subr.mxu0 0.0
    %3784 = vmatpush1.msra.mxu0 %v3458
    %3785 = vmatprep.subr.mxu0 0.0
    %3786 = vmatpush2.msra.mxu0 %v3489
    %3787 = vmatprep.subr.mxu0 0.0
    %3788 = vmatpush2.msra.mxu0 %v3488
    %3789 = vmatprep.subr.mxu0 0.0
    %3790 = vmatpush2.msra.mxu0 %v3487
    %3791 = vmatprep.subr.mxu0 0.0
    %3792 = vmatpush2.msra.mxu0 %v3486
    %3793 = vmatprep.subr.mxu0 0.0
    %3794 = vmatpush2.msra.mxu0 %v3485
    %3795 = vmatprep.subr.mxu0 0.0
    %3796 = vmatpush2.msra.mxu0 %v3484
    %3797 = vmatprep.subr.mxu0 0.0
    %3798 = vmatpush2.msra.mxu0 %v3483
    %3799 = vmatprep.subr.mxu0 0.0
    %3800 = vmatpush2.msra.mxu0 %v3482
    %3801 = vmatprep.subr.mxu0 0.0
    %3802 = vmatpush2.msra.mxu0 %v3481
    %3803 = vmatprep.subr.mxu0 0.0
    %3804 = vmatpush2.msra.mxu0 %v3480
    %3805 = vmatprep.subr.mxu0 0.0
    %3806 = vmatpush2.msra.mxu0 %v3479
    %3807 = vmatprep.subr.mxu0 0.0
    %3808 = vmatpush2.msra.mxu0 %v3478
    %3809 = vmatprep.subr.mxu0 0.0
    %3810 = vmatpush2.msra.mxu0 %v3477
    %3811 = vmatprep.subr.mxu0 0.0
    %3812 = vmatpush2.msra.mxu0 %v3476
    %3813 = vmatprep.subr.mxu0 0.0
    %3814 = vmatpush2.msra.mxu0 %v3475
    %3815 = vmatprep.subr.mxu0 0.0
    %3816 = vmatpush2.msra.mxu0 %v3474
    %3817 = vmatprep.mubr.f32.mxu0 %v3397
    %3818 = vmatmul.mubr.f32.gmra.mxu0 %v3396
    %v3819 = vpop.f32.mrf.mxu0
    %v3820 = vadd.f32 %v3750, %v3819
    %v3821 = vpop.f32.mrf.mxu0
    %3822 = vdwg.mxu0
    %3823 = vmatprep.subr.mxu0 0.0
    %3824 = vmatpush1.msra.mxu0 %v3505
    %3825 = vmatprep.subr.mxu0 0.0
    %3826 = vmatpush1.msra.mxu0 %v3504
    %3827 = vmatprep.subr.mxu0 0.0
    %3828 = vmatpush1.msra.mxu0 %v3503
    %3829 = vmatprep.subr.mxu0 0.0
    %3830 = vmatpush1.msra.mxu0 %v3502
    %3831 = vmatprep.subr.mxu0 0.0
    %3832 = vmatpush1.msra.mxu0 %v3501
    %3833 = vmatprep.subr.mxu0 0.0
    %3834 = vmatpush1.msra.mxu0 %v3500
    %3835 = vmatprep.subr.mxu0 0.0
    %3836 = vmatpush1.msra.mxu0 %v3499
    %3837 = vmatprep.subr.mxu0 0.0
    %3838 = vmatpush1.msra.mxu0 %v3498
    %3839 = vmatprep.subr.mxu0 0.0
    %3840 = vmatpush1.msra.mxu0 %v3497
    %3841 = vmatprep.subr.mxu0 0.0
    %3842 = vmatpush1.msra.mxu0 %v3496
    %3843 = vmatprep.subr.mxu0 0.0
    %3844 = vmatpush1.msra.mxu0 %v3495
    %3845 = vmatprep.subr.mxu0 0.0
    %3846 = vmatpush1.msra.mxu0 %v3494
    %3847 = vmatprep.subr.mxu0 0.0
    %3848 = vmatpush1.msra.mxu0 %v3493
    %3849 = vmatprep.subr.mxu0 0.0
    %3850 = vmatpush1.msra.mxu0 %v3492
    %3851 = vmatprep.subr.mxu0 0.0
    %3852 = vmatpush1.msra.mxu0 %v3491
    %3853 = vmatprep.subr.mxu0 0.0
    %3854 = vmatpush1.msra.mxu0 %v3490
    %3855 = vmatprep.subr.mxu0 0.0
    %3856 = vmatpush2.msra.mxu0 %v3521
    %3857 = vmatprep.subr.mxu0 0.0
    %3858 = vmatpush2.msra.mxu0 %v3520
    %3859 = vmatprep.subr.mxu0 0.0
    %3860 = vmatpush2.msra.mxu0 %v3519
    %3861 = vmatprep.subr.mxu0 0.0
    %3862 = vmatpush2.msra.mxu0 %v3518
    %3863 = vmatprep.subr.mxu0 0.0
    %3864 = vmatpush2.msra.mxu0 %v3517
    %3865 = vmatprep.subr.mxu0 0.0
    %3866 = vmatpush2.msra.mxu0 %v3516
    %3867 = vmatprep.subr.mxu0 0.0
    %3868 = vmatpush2.msra.mxu0 %v3515
    %3869 = vmatprep.subr.mxu0 0.0
    %3870 = vmatpush2.msra.mxu0 %v3514
    %3871 = vmatprep.subr.mxu0 0.0
    %3872 = vmatpush2.msra.mxu0 %v3513
    %3873 = vmatprep.subr.mxu0 0.0
    %3874 = vmatpush2.msra.mxu0 %v3512
    %3875 = vmatprep.subr.mxu0 0.0
    %3876 = vmatpush2.msra.mxu0 %v3511
    %3877 = vmatprep.subr.mxu0 0.0
    %3878 = vmatpush2.msra.mxu0 %v3510
    %3879 = vmatprep.subr.mxu0 0.0
    %3880 = vmatpush2.msra.mxu0 %v3509
    %3881 = vmatprep.subr.mxu0 0.0
    %3882 = vmatpush2.msra.mxu0 %v3508
    %3883 = vmatprep.subr.mxu0 0.0
    %3884 = vmatpush2.msra.mxu0 %v3507
    %3885 = vmatprep.subr.mxu0 0.0
    %3886 = vmatpush2.msra.mxu0 %v3506
    %3887 = vmatprep.mubr.f32.mxu0 %v3399
    %3888 = vmatmul.mubr.f32.gmra.mxu0 %v3398
    %v3889 = vpop.f32.mrf.mxu0
    %v3890 = vadd.f32 %v3820, %v3889
    %v3891 = vpop.f32.mrf.mxu0
    %3892 = vdwg.mxu0
    %3893 = vmatprep.subr.mxu0 0.0
    %3894 = vmatpush1.msra.mxu0 %v3537
    %3895 = vmatprep.subr.mxu0 0.0
    %3896 = vmatpush1.msra.mxu0 %v3536
    %3897 = vmatprep.subr.mxu0 0.0
    %3898 = vmatpush1.msra.mxu0 %v3535
    %3899 = vmatprep.subr.mxu0 0.0
    %3900 = vmatpush1.msra.mxu0 %v3534
    %3901 = vmatprep.subr.mxu0 0.0
    %3902 = vmatpush1.msra.mxu0 %v3533
    %3903 = vmatprep.subr.mxu0 0.0
    %3904 = vmatpush1.msra.mxu0 %v3532
    %3905 = vmatprep.subr.mxu0 0.0
    %3906 = vmatpush1.msra.mxu0 %v3531
    %3907 = vmatprep.subr.mxu0 0.0
    %3908 = vmatpush1.msra.mxu0 %v3530
    %3909 = vmatprep.subr.mxu0 0.0
    %3910 = vmatpush1.msra.mxu0 %v3529
    %3911 = vmatprep.subr.mxu0 0.0
    %3912 = vmatpush1.msra.mxu0 %v3528
    %3913 = vmatprep.subr.mxu0 0.0
    %3914 = vmatpush1.msra.mxu0 %v3527
    %3915 = vmatprep.subr.mxu0 0.0
    %3916 = vmatpush1.msra.mxu0 %v3526
    %3917 = vmatprep.subr.mxu0 0.0
    %3918 = vmatpush1.msra.mxu0 %v3525
    %3919 = vmatprep.subr.mxu0 0.0
    %3920 = vmatpush1.msra.mxu0 %v3524
    %3921 = vmatprep.subr.mxu0 0.0
    %3922 = vmatpush1.msra.mxu0 %v3523
    %3923 = vmatprep.subr.mxu0 0.0
    %3924 = vmatpush1.msra.mxu0 %v3522
    %3925 = vmatprep.subr.mxu0 0.0
    %3926 = vmatpush2.msra.mxu0 %v3553
    %3927 = vmatprep.subr.mxu0 0.0
    %3928 = vmatpush2.msra.mxu0 %v3552
    %3929 = vmatprep.subr.mxu0 0.0
    %3930 = vmatpush2.msra.mxu0 %v3551
    %3931 = vmatprep.subr.mxu0 0.0
    %3932 = vmatpush2.msra.mxu0 %v3550
    %3933 = vmatprep.subr.mxu0 0.0
    %3934 = vmatpush2.msra.mxu0 %v3549
    %3935 = vmatprep.subr.mxu0 0.0
    %3936 = vmatpush2.msra.mxu0 %v3548
    %3937 = vmatprep.subr.mxu0 0.0
    %3938 = vmatpush2.msra.mxu0 %v3547
    %3939 = vmatprep.subr.mxu0 0.0
    %3940 = vmatpush2.msra.mxu0 %v3546
    %3941 = vmatprep.subr.mxu0 0.0
    %3942 = vmatpush2.msra.mxu0 %v3545
    %3943 = vmatprep.subr.mxu0 0.0
    %3944 = vmatpush2.msra.mxu0 %v3544
    %3945 = vmatprep.subr.mxu0 0.0
    %3946 = vmatpush2.msra.mxu0 %v3543
    %3947 = vmatprep.subr.mxu0 0.0
    %3948 = vmatpush2.msra.mxu0 %v3542
    %3949 = vmatprep.subr.mxu0 0.0
    %3950 = vmatpush2.msra.mxu0 %v3541
    %3951 = vmatprep.subr.mxu0 0.0
    %3952 = vmatpush2.msra.mxu0 %v3540
    %3953 = vmatprep.subr.mxu0 0.0
    %3954 = vmatpush2.msra.mxu0 %v3539
    %3955 = vmatprep.subr.mxu0 0.0
    %3956 = vmatpush2.msra.mxu0 %v3538
    %3957 = vmatprep.mubr.f32.mxu0 %v3401
    %3958 = vmatmul.mubr.f32.gmra.mxu0 %v3400
    %v3959 = vpop.f32.mrf.mxu0
    %v3960 = vadd.f32 %v3890, %v3959
    %v3961 = vpop.f32.mrf.mxu0
    %3962 = vdwg.mxu0
    %3963 = vmatprep.subr.mxu0 0.0
    %3964 = vmatpush1.msra.mxu0 %v3569
    %3965 = vmatprep.subr.mxu0 0.0
    %3966 = vmatpush1.msra.mxu0 %v3568
    %3967 = vmatprep.subr.mxu0 0.0
    %3968 = vmatpush1.msra.mxu0 %v3567
    %3969 = vmatprep.subr.mxu0 0.0
    %3970 = vmatpush1.msra.mxu0 %v3566
    %3971 = vmatprep.subr.mxu0 0.0
    %3972 = vmatpush1.msra.mxu0 %v3565
    %3973 = vmatprep.subr.mxu0 0.0
    %3974 = vmatpush1.msra.mxu0 %v3564
    %3975 = vmatprep.subr.mxu0 0.0
    %3976 = vmatpush1.msra.mxu0 %v3563
    %3977 = vmatprep.subr.mxu0 0.0
    %3978 = vmatpush1.msra.mxu0 %v3562
    %3979 = vmatprep.subr.mxu0 0.0
    %3980 = vmatpush1.msra.mxu0 %v3561
    %3981 = vmatprep.subr.mxu0 0.0
    %3982 = vmatpush1.msra.mxu0 %v3560
    %3983 = vmatprep.subr.mxu0 0.0
    %3984 = vmatpush1.msra.mxu0 %v3559
    %3985 = vmatprep.subr.mxu0 0.0
    %3986 = vmatpush1.msra.mxu0 %v3558
    %3987 = vmatprep.subr.mxu0 0.0
    %3988 = vmatpush1.msra.mxu0 %v3557
    %3989 = vmatprep.subr.mxu0 0.0
    %3990 = vmatpush1.msra.mxu0 %v3556
    %3991 = vmatprep.subr.mxu0 0.0
    %3992 = vmatpush1.msra.mxu0 %v3555
    %3993 = vmatprep.subr.mxu0 0.0
    %3994 = vmatpush1.msra.mxu0 %v3554
    %3995 = vmatprep.subr.mxu0 0.0
    %3996 = vmatpush2.msra.mxu0 %v3585
    %3997 = vmatprep.subr.mxu0 0.0
    %3998 = vmatpush2.msra.mxu0 %v3584
    %3999 = vmatprep.subr.mxu0 0.0
    %4000 = vmatpush2.msra.mxu0 %v3583
    %4001 = vmatprep.subr.mxu0 0.0
    %4002 = vmatpush2.msra.mxu0 %v3582
    %4003 = vmatprep.subr.mxu0 0.0
    %4004 = vmatpush2.msra.mxu0 %v3581
    %4005 = vmatprep.subr.mxu0 0.0
    %4006 = vmatpush2.msra.mxu0 %v3580
    %4007 = vmatprep.subr.mxu0 0.0
    %4008 = vmatpush2.msra.mxu0 %v3579
    %4009 = vmatprep.subr.mxu0 0.0
    %4010 = vmatpush2.msra.mxu0 %v3578
    %4011 = vmatprep.subr.mxu0 0.0
    %4012 = vmatpush2.msra.mxu0 %v3577
    %4013 = vmatprep.subr.mxu0 0.0
    %4014 = vmatpush2.msra.mxu0 %v3576
    %4015 = vmatprep.subr.mxu0 0.0
    %4016 = vmatpush2.msra.mxu0 %v3575
    %4017 = vmatprep.subr.mxu0 0.0
    %4018 = vmatpush2.msra.mxu0 %v3574
    %4019 = vmatprep.subr.mxu0 0.0
    %4020 = vmatpush2.msra.mxu0 %v3573
    %4021 = vmatprep.subr.mxu0 0.0
    %4022 = vmatpush2.msra.mxu0 %v3572
    %4023 = vmatprep.subr.mxu0 0.0
    %4024 = vmatpush2.msra.mxu0 %v3571
    %4025 = vmatprep.subr.mxu0 0.0
    %4026 = vmatpush2.msra.mxu0 %v3570
    %4027 = vmatprep.mubr.f32.mxu0 %v3411
    %4028 = vmatmul.mubr.f32.gmra.mxu0 %v3410
    %v4029 = vpop.f32.mrf.mxu0
    %v4030 = vadd.f32 %v3960, %v4029
    %v4031 = vpop.f32.mrf.mxu0
    %4032 = vdwg.mxu0
    %4033 = vmatprep.subr.mxu0 0.0
    %4034 = vmatpush1.msra.mxu0 %v3601
    %4035 = vmatprep.subr.mxu0 0.0
    %4036 = vmatpush1.msra.mxu0 %v3600
    %4037 = vmatprep.subr.mxu0 0.0
    %4038 = vmatpush1.msra.mxu0 %v3599
    %4039 = vmatprep.subr.mxu0 0.0
    %4040 = vmatpush1.msra.mxu0 %v3598
    %4041 = vmatprep.subr.mxu0 0.0
    %4042 = vmatpush1.msra.mxu0 %v3597
    %4043 = vmatprep.subr.mxu0 0.0
    %4044 = vmatpush1.msra.mxu0 %v3596
    %4045 = vmatprep.subr.mxu0 0.0
    %4046 = vmatpush1.msra.mxu0 %v3595
    %4047 = vmatprep.subr.mxu0 0.0
    %4048 = vmatpush1.msra.mxu0 %v3594
    %4049 = vmatprep.subr.mxu0 0.0
    %4050 = vmatpush1.msra.mxu0 %v3593
    %4051 = vmatprep.subr.mxu0 0.0
    %4052 = vmatpush1.msra.mxu0 %v3592
    %4053 = vmatprep.subr.mxu0 0.0
    %4054 = vmatpush1.msra.mxu0 %v3591
    %4055 = vmatprep.subr.mxu0 0.0
    %4056 = vmatpush1.msra.mxu0 %v3590
    %4057 = vmatprep.subr.mxu0 0.0
    %4058 = vmatpush1.msra.mxu0 %v3589
    %4059 = vmatprep.subr.mxu0 0.0
    %4060 = vmatpush1.msra.mxu0 %v3588
    %4061 = vmatprep.subr.mxu0 0.0
    %4062 = vmatpush1.msra.mxu0 %v3587
    %4063 = vmatprep.subr.mxu0 0.0
    %4064 = vmatpush1.msra.mxu0 %v3586
    %4065 = vmatprep.subr.mxu0 0.0
    %4066 = vmatpush2.msra.mxu0 %v3617
    %4067 = vmatprep.subr.mxu0 0.0
    %4068 = vmatpush2.msra.mxu0 %v3616
    %4069 = vmatprep.subr.mxu0 0.0
    %4070 = vmatpush2.msra.mxu0 %v3615
    %4071 = vmatprep.subr.mxu0 0.0
    %4072 = vmatpush2.msra.mxu0 %v3614
    %4073 = vmatprep.subr.mxu0 0.0
    %4074 = vmatpush2.msra.mxu0 %v3613
    %4075 = vmatprep.subr.mxu0 0.0
    %4076 = vmatpush2.msra.mxu0 %v3612
    %4077 = vmatprep.subr.mxu0 0.0
    %4078 = vmatpush2.msra.mxu0 %v3611
    %4079 = vmatprep.subr.mxu0 0.0
    %4080 = vmatpush2.msra.mxu0 %v3610
    %4081 = vmatprep.subr.mxu0 0.0
    %4082 = vmatpush2.msra.mxu0 %v3609
    %4083 = vmatprep.subr.mxu0 0.0
    %4084 = vmatpush2.msra.mxu0 %v3608
    %4085 = vmatprep.subr.mxu0 0.0
    %4086 = vmatpush2.msra.mxu0 %v3607
    %4087 = vmatprep.subr.mxu0 0.0
    %4088 = vmatpush2.msra.mxu0 %v3606
    %4089 = vmatprep.subr.mxu0 0.0
    %4090 = vmatpush2.msra.mxu0 %v3605
    %4091 = vmatprep.subr.mxu0 0.0
    %4092 = vmatpush2.msra.mxu0 %v3604
    %4093 = vmatprep.subr.mxu0 0.0
    %4094 = vmatpush2.msra.mxu0 %v3603
    %4095 = vmatprep.subr.mxu0 0.0
    %4096 = vmatpush2.msra.mxu0 %v3602
    %4097 = vmatprep.mubr.f32.mxu0 %v3413
    %4098 = vmatmul.mubr.f32.gmra.mxu0 %v3412
    %v4099 = vpop.f32.mrf.mxu0
    %v4100 = vadd.f32 %v4030, %v4099
    %v4101 = vpop.f32.mrf.mxu0
    %4102 = vdwg.mxu0
    %4103 = vmatprep.subr.mxu0 0.0
    %4104 = vmatpush1.msra.mxu0 %v3633
    %4105 = vmatprep.subr.mxu0 0.0
    %4106 = vmatpush1.msra.mxu0 %v3632
    %4107 = vmatprep.subr.mxu0 0.0
    %4108 = vmatpush1.msra.mxu0 %v3631
    %4109 = vmatprep.subr.mxu0 0.0
    %4110 = vmatpush1.msra.mxu0 %v3630
    %4111 = vmatprep.subr.mxu0 0.0
    %4112 = vmatpush1.msra.mxu0 %v3629
    %4113 = vmatprep.subr.mxu0 0.0
    %4114 = vmatpush1.msra.mxu0 %v3628
    %4115 = vmatprep.subr.mxu0 0.0
    %4116 = vmatpush1.msra.mxu0 %v3627
    %4117 = vmatprep.subr.mxu0 0.0
    %4118 = vmatpush1.msra.mxu0 %v3626
    %4119 = vmatprep.subr.mxu0 0.0
    %4120 = vmatpush1.msra.mxu0 %v3625
    %4121 = vmatprep.subr.mxu0 0.0
    %4122 = vmatpush1.msra.mxu0 %v3624
    %4123 = vmatprep.subr.mxu0 0.0
    %4124 = vmatpush1.msra.mxu0 %v3623
    %4125 = vmatprep.subr.mxu0 0.0
    %4126 = vmatpush1.msra.mxu0 %v3622
    %4127 = vmatprep.subr.mxu0 0.0
    %4128 = vmatpush1.msra.mxu0 %v3621
    %4129 = vmatprep.subr.mxu0 0.0
    %4130 = vmatpush1.msra.mxu0 %v3620
    %4131 = vmatprep.subr.mxu0 0.0
    %4132 = vmatpush1.msra.mxu0 %v3619
    %4133 = vmatprep.subr.mxu0 0.0
    %4134 = vmatpush1.msra.mxu0 %v3618
    %4135 = vmatprep.subr.mxu0 0.0
    %4136 = vmatpush2.msra.mxu0 %v3649
    %4137 = vmatprep.subr.mxu0 0.0
    %4138 = vmatpush2.msra.mxu0 %v3648
    %4139 = vmatprep.subr.mxu0 0.0
    %4140 = vmatpush2.msra.mxu0 %v3647
    %4141 = vmatprep.subr.mxu0 0.0
    %4142 = vmatpush2.msra.mxu0 %v3646
    %4143 = vmatprep.subr.mxu0 0.0
    %4144 = vmatpush2.msra.mxu0 %v3645
    %4145 = vmatprep.subr.mxu0 0.0
    %4146 = vmatpush2.msra.mxu0 %v3644
    %4147 = vmatprep.subr.mxu0 0.0
    %4148 = vmatpush2.msra.mxu0 %v3643
    %4149 = vmatprep.subr.mxu0 0.0
    %4150 = vmatpush2.msra.mxu0 %v3642
    %4151 = vmatprep.subr.mxu0 0.0
    %4152 = vmatpush2.msra.mxu0 %v3641
    %4153 = vmatprep.subr.mxu0 0.0
    %4154 = vmatpush2.msra.mxu0 %v3640
    %4155 = vmatprep.subr.mxu0 0.0
    %4156 = vmatpush2.msra.mxu0 %v3639
    %4157 = vmatprep.subr.mxu0 0.0
    %4158 = vmatpush2.msra.mxu0 %v3638
    %4159 = vmatprep.subr.mxu0 0.0
    %4160 = vmatpush2.msra.mxu0 %v3637
    %4161 = vmatprep.subr.mxu0 0.0
    %4162 = vmatpush2.msra.mxu0 %v3636
    %4163 = vmatprep.subr.mxu0 0.0
    %4164 = vmatpush2.msra.mxu0 %v3635
    %4165 = vmatprep.subr.mxu0 0.0
    %4166 = vmatpush2.msra.mxu0 %v3634
    %4167 = vmatprep.mubr.f32.mxu0 %v3415
    %4168 = vmatmul.mubr.f32.gmra.mxu0 %v3414
    %v4169 = vpop.f32.mrf.mxu0
    %v4170 = vadd.f32 %v4100, %v4169
    %v4171 = vpop.f32.mrf.mxu0
    %4172 = vdwg.mxu0
    %4173 = vmatprep.subr.mxu0 0.0
    %4174 = vmatpush1.msra.mxu0 %v3665
    %4175 = vmatprep.subr.mxu0 0.0
    %4176 = vmatpush1.msra.mxu0 %v3664
    %4177 = vmatprep.subr.mxu0 0.0
    %4178 = vmatpush1.msra.mxu0 %v3663
    %4179 = vmatprep.subr.mxu0 0.0
    %4180 = vmatpush1.msra.mxu0 %v3662
    %4181 = vmatprep.subr.mxu0 0.0
    %4182 = vmatpush1.msra.mxu0 %v3661
    %4183 = vmatprep.subr.mxu0 0.0
    %4184 = vmatpush1.msra.mxu0 %v3660
    %4185 = vmatprep.subr.mxu0 0.0
    %4186 = vmatpush1.msra.mxu0 %v3659
    %4187 = vmatprep.subr.mxu0 0.0
    %4188 = vmatpush1.msra.mxu0 %v3658
    %4189 = vmatprep.subr.mxu0 0.0
    %4190 = vmatpush1.msra.mxu0 %v3657
    %4191 = vmatprep.subr.mxu0 0.0
    %4192 = vmatpush1.msra.mxu0 %v3656
    %4193 = vmatprep.subr.mxu0 0.0
    %4194 = vmatpush1.msra.mxu0 %v3655
    %4195 = vmatprep.subr.mxu0 0.0
    %4196 = vmatpush1.msra.mxu0 %v3654
    %4197 = vmatprep.subr.mxu0 0.0
    %4198 = vmatpush1.msra.mxu0 %v3653
    %4199 = vmatprep.subr.mxu0 0.0
    %4200 = vmatpush1.msra.mxu0 %v3652
    %4201 = vmatprep.subr.mxu0 0.0
    %4202 = vmatpush1.msra.mxu0 %v3651
    %4203 = vmatprep.subr.mxu0 0.0
    %4204 = vmatpush1.msra.mxu0 %v3650
    %4205 = vmatprep.subr.mxu0 0.0
    %4206 = vmatpush2.msra.mxu0 %v3681
    %4207 = vmatprep.subr.mxu0 0.0
    %4208 = vmatpush2.msra.mxu0 %v3680
    %4209 = vmatprep.subr.mxu0 0.0
    %4210 = vmatpush2.msra.mxu0 %v3679
    %4211 = vmatprep.subr.mxu0 0.0
    %4212 = vmatpush2.msra.mxu0 %v3678
    %4213 = vmatprep.subr.mxu0 0.0
    %4214 = vmatpush2.msra.mxu0 %v3677
    %4215 = vmatprep.subr.mxu0 0.0
    %4216 = vmatpush2.msra.mxu0 %v3676
    %4217 = vmatprep.subr.mxu0 0.0
    %4218 = vmatpush2.msra.mxu0 %v3675
    %4219 = vmatprep.subr.mxu0 0.0
    %4220 = vmatpush2.msra.mxu0 %v3674
    %4221 = vmatprep.subr.mxu0 0.0
    %4222 = vmatpush2.msra.mxu0 %v3673
    %4223 = vmatprep.subr.mxu0 0.0
    %4224 = vmatpush2.msra.mxu0 %v3672
    %4225 = vmatprep.subr.mxu0 0.0
    %4226 = vmatpush2.msra.mxu0 %v3671
    %4227 = vmatprep.subr.mxu0 0.0
    %4228 = vmatpush2.msra.mxu0 %v3670
    %4229 = vmatprep.subr.mxu0 0.0
    %4230 = vmatpush2.msra.mxu0 %v3669
    %4231 = vmatprep.subr.mxu0 0.0
    %4232 = vmatpush2.msra.mxu0 %v3668
    %4233 = vmatprep.subr.mxu0 0.0
    %4234 = vmatpush2.msra.mxu0 %v3667
    %4235 = vmatprep.subr.mxu0 0.0
    %4236 = vmatpush2.msra.mxu0 %v3666
    %4237 = vmatprep.mubr.f32.mxu0 %v3417
    %4238 = vmatmul.mubr.f32.gmra.mxu0 %v3416
    %v4239 = vpop.f32.mrf.mxu0
    %v4240 = vadd.f32 %v4170, %v4239
    %v4241 = vpop.f32.mrf.mxu0
    %4242 = vdwg.mxu0
    %v4243 = vld [vmem:[%s5] sm:$0xff]
    %v4244 = vld [vmem:[%s5 + $0x8] sm:$0xff]
    %v4245 = vld [vmem:[%s5 + $0x10] sm:$0xff]
    %v4246 = vld [vmem:[%s5 + $0x18] sm:$0xff]
    %v4247 = vld [vmem:[%s6] sm:$0x1]
    %v4249 = vsel %vm209, %v4240, 0
    %4251 = vmatprep.subr.mxu0 0.0
    %4252 = vmatpush1.msra.mxu0 0.0
    %4253 = vmatprep.subr.mxu0 0.0
    %4254 = vmatpush1.msra.mxu0 0.0
    %4255 = vmatprep.subr.mxu0 0.0
    %4256 = vmatpush1.msra.mxu0 0.0
    %4257 = vmatprep.subr.mxu0 0.0
    %4258 = vmatpush1.msra.mxu0 0.0
    %4259 = vmatprep.subr.mxu0 0.0
    %4260 = vmatpush1.msra.mxu0 0.0
    %4261 = vmatprep.subr.mxu0 0.0
    %4262 = vmatpush1.msra.mxu0 0.0
    %4263 = vmatprep.subr.mxu0 0.0
    %4264 = vmatpush1.msra.mxu0 0.0
    %4265 = vmatprep.subr.mxu0 0.0
    %4266 = vmatpush1.msra.mxu0 0.0
    %4267 = vmatprep.subr.mxu0 0.0
    %4268 = vmatpush1.msra.mxu0 0.0
    %4269 = vmatprep.subr.mxu0 0.0
    %4270 = vmatpush1.msra.mxu0 0.0
    %4271 = vmatprep.subr.mxu0 0.0
    %4272 = vmatpush1.msra.mxu0 0.0
    %4273 = vmatprep.subr.mxu0 0.0
    %4274 = vmatpush1.msra.mxu0 0.0
    %4275 = vmatprep.subr.mxu0 0.0
    %4276 = vmatpush1.msra.mxu0 %v4246
    %4277 = vmatprep.subr.mxu0 0.0
    %4278 = vmatpush1.msra.mxu0 %v4245
    %4279 = vmatprep.subr.mxu0 0.0
    %4280 = vmatpush1.msra.mxu0 %v4244
    %4281 = vmatprep.subr.mxu0 0.0
    %4282 = vmatpush1.msra.mxu0 %v4243
    %4283 = vmatprep.subr.mxu0 0.0
    %4284 = vmatpush2.msra.mxu0 0.0
    %4285 = vmatprep.subr.mxu0 0.0
    %4286 = vmatpush2.msra.mxu0 0.0
    %4287 = vmatprep.subr.mxu0 0.0
    %4288 = vmatpush2.msra.mxu0 0.0
    %4289 = vmatprep.subr.mxu0 0.0
    %4290 = vmatpush2.msra.mxu0 0.0
    %4291 = vmatprep.subr.mxu0 0.0
    %4292 = vmatpush2.msra.mxu0 0.0
    %4293 = vmatprep.subr.mxu0 0.0
    %4294 = vmatpush2.msra.mxu0 0.0
    %4295 = vmatprep.subr.mxu0 0.0
    %4296 = vmatpush2.msra.mxu0 0.0
    %4297 = vmatprep.subr.mxu0 0.0
    %4298 = vmatpush2.msra.mxu0 0.0
    %4299 = vmatprep.subr.mxu0 0.0
    %4300 = vmatpush2.msra.mxu0 0.0
    %4301 = vmatprep.subr.mxu0 0.0
    %4302 = vmatpush2.msra.mxu0 0.0
    %4303 = vmatprep.subr.mxu0 0.0
    %4304 = vmatpush2.msra.mxu0 0.0
    %4305 = vmatprep.subr.mxu0 0.0
    %4306 = vmatpush2.msra.mxu0 0.0
    %4307 = vmatprep.subr.mxu0 0.0
    %4308 = vmatpush2.msra.mxu0 0.0
    %4309 = vmatprep.subr.mxu0 0.0
    %4310 = vmatpush2.msra.mxu0 0.0
    %4311 = vmatprep.subr.mxu0 0.0
    %4312 = vmatpush2.msra.mxu0 0.0
    %4313 = vmatprep.subr.mxu0 0.0
    %4314 = vmatpush2.msra.mxu0 0.0
    %4315 = vmatprep.mubr.f32.mxu0 0.0
    %4316 = vmatmul.mubr.f32.gmra.mxu0 %v4249
    %v4317 = vpop.f32.mrf.mxu0
    %v4318 = vadd.f32 %v4247, %v4317
    %v4319 = vpop.f32.mrf.mxu0
    %4320 = vdwg.mxu0
    %vm4321 = vcmask 73728
    %4322 = vst.msk [vmem:[#allocation2] sm:$0x1] %vm4321, %v4318
    // Predicated region
    $region30: #{test_model2_forward.1} parent=1 // pred_check
      _
    $region31: #{test_model2_forward.1} parent=1 // pred_check_branch
      %4324 = sbr.rel (0) target = $region33
    $region32: #{test_model2_forward.1} parent=1 // pred_region
      %s4326 = ssub.s32 16, 16
      %4327 = vsyncadd [#allocation3], %s4326
      %s4329 = sshll.u32 [#allocation2], 4
      %s4330 = int_to_ptr.vmem [resolvable:$true] %s4329
      %4332 = dma.vmem_to_hbm [thread:$0]  %s4330, 16, %s7, [#allocation3]
    $region33: #{test_model2_forward.1} parent=1 // pred_fallthru
      _
    // Predicated region
    $region34: #{test_model2_forward.1} parent=1 // pred_check
      _
    $region35: #{test_model2_forward.1} parent=1 // pred_check_branch
      %4334 = sbr.rel (0) target = $region37
    $region36: #{test_model2_forward.1} parent=1 // pred_region
      %4335 = dma.done [#allocation3], 16
    $region37: #{test_model2_forward.1} parent=1 // pred_fallthru
      _
    %4336 = vsyncpa [#allocation3], 1

</llo_original>
